<compile_context>
chip_gen: v7x
topology: tpu7x:2x2x1
jax: 0.10.0
libtpu: 0.0.40
codegen_flags: <defaults>
</compile_context>

<pallas_src>
import functools

import jax
import jax.numpy as jnp
import numpy as np
from jax.experimental import pallas as pl
from jax.experimental.pallas import tpu as pltpu

CP = 128   # lane-padded channel width for conv activations / outputs
K1 = 128   # lane-packed K for conv1 (9 taps * in_channels packed into one K group)


# ------------------------------ fused kernel -------------------------------

def _downsample_kernel(x1_ref, w1_ref, b1_ref, w2_ref, b2_ref, tproj_ref,
                       skip_ref, pool_ref, pad_ref, *, H, W):
    """One batch element per grid step.

    x1_ref   : (1, H*(W+2), K1)   bf16  conv1 im2col, taps packed along K
    w1_ref   : (K1, CP)           bf16  conv1 weight (rows = tap*cin + c)
    b1_ref   : (1, CP)            f32
    w2_ref   : (9*CP, CP)         bf16  conv2 weight (rows = tap*CP + c)
    b2_ref   : (1, CP)            f32
    tproj_ref: (1, 1, CP)         f32   precomputed time-MLP projection
    skip_ref : (1, H, W, CP)      bf16  pre-pool output
    pool_ref : (1, H/2, W/2, CP)  bf16  pooled output
    pad_ref  : ((H+2)*(W+2)+8, CP) bf16 flat zero-bordered conv1 output (scratch)
    """
    Wp = W + 2
    HWp = H * Wp

    # Scratch persists across grid steps; its interior is fully rewritten every
    # step and the border stays zero, so zero it only once.
    @pl.when(pl.program_id(0) == 0)
    def _():
        pad_ref[...] = jnp.zeros_like(pad_ref)

    # ---- conv1: ONE K-packed matmul (9 taps * cin fit in a single 128-lane K) ----
    acc1 = jnp.dot(x1_ref[0], w1_ref[...], preferred_element_type=jnp.float32)
    h1 = jnp.maximum(acc1 + b1_ref[...], 0.0)                       # (HWp, CP) f32

    # conv1 is computed over the padded width; zero the 2 garbage columns so the
    # contiguous store below also (re)writes the pad border columns with zeros.
    col = jax.lax.broadcasted_iota(jnp.int32, (HWp, CP), 0) % Wp
    h1 = jnp.where(col < W, h1, 0.0)

    # Single contiguous store into the flat padded layout:
    # target flat index (h+1)*Wp + (w+1) = (h*Wp + w) + (Wp + 1).
    pad_ref[pl.ds(Wp + 1, HWp), :] = h1.astype(pad_ref.dtype)

    # ---- conv2: (HWp, 9*CP) im2col via lane-concat of 9 row-contiguous tap
    #      slices of the flat scratch, then ONE deep-K matmul ----
    patches = jnp.concatenate(
        [pad_ref[pl.ds(i * Wp + j, HWp), :] for i in range(3) for j in range(3)],
        axis=-1)                                                    # (HWp, 9*CP) bf16
    acc2 = jnp.dot(patches, w2_ref[...], preferred_element_type=jnp.float32)
    h2 = jnp.maximum(acc2 + b2_ref[...], 0.0) + tproj_ref[0]        # (HWp, CP) f32

    # Drop the 2 garbage pad columns -> (H, W, CP); lane-dense skip store.
    h2v = h2.reshape(H, Wp, CP)[:, :W, :]
    skip_ref[0] = h2v.astype(skip_ref.dtype)

    # ---- fused 2x2 max-pool (stride 2) from the in-register value ----
    wpair = h2v.reshape(H, W // 2, 2, CP)
    wmax = jnp.maximum(wpair[:, :, 0, :], wpair[:, :, 1, :])        # (H, W/2, CP)
    hpair = wmax.reshape(H // 2, 2, W // 2, CP)
    pool_ref[0] = jnp.maximum(hpair[:, 0], hpair[:, 1]).astype(pool_ref.dtype)


# ------------------------------ host wrapper --------------------------------

def downsample(params, x_nchw, t_emb, *, out_channels):
    """DownSample.forward: returns (x_skip, x_pooled) in NCHW, like the PyTorch module."""
    B, cin, H, W = x_nchw.shape
    assert H % 2 == 0 and W % 2 == 0
    assert out_channels <= CP
    # TODO(synk): generalize conv1 K-packing to multiple 128-lane K groups when 9*cin > 128.
    assert 9 * cin <= K1
    Wp = W + 2
    HWp = H * Wp

    # ---- time-embedding MLP hoisted to XLA (M=1 matmuls underfill the MXU) ----
    tp = jnp.maximum(t_emb.astype(jnp.float32) @ params["fc1_w"] + params["fc1_b"], 0.0)
    tp = (tp @ params["fc2_w"] + params["fc2_b"]).reshape(B, 1, CP)   # (B, 1, CP) f32

    # ---- conv1 im2col: pack 9 taps * cin along the K (lane) dimension ----
    x = jnp.transpose(x_nchw, (0, 2, 3, 1)).astype(jnp.float32)       # NHWC
    xpad = jnp.pad(x, ((0, 0), (1, 1), (1, 3), (0, 0)))               # (B, H+2, W+4, cin)
    taps = [xpad[:, i:i + H, j:j + Wp, :] for i in range(3) for j in range(3)]
    patches = jnp.concatenate(taps, axis=-1)                          # (B, H, Wp, 9*cin)
    patches = jnp.pad(patches, ((0, 0), (0, 0), (0, 0), (0, K1 - 9 * cin)))
    x1 = patches.reshape(B, HWp, K1).astype(jnp.bfloat16)

    inputs = (x1, params["w1"], params["b1"], params["w2"], params["b2"], tp)

    flops = 2 * B * HWp * (K1 * CP + 9 * CP * CP)
    bytes_accessed = (sum(int(a.size) * a.dtype.itemsize for a in inputs)
                      + B * H * W * CP * 2 + B * (H // 2) * (W // 2) * CP * 2)

    kernel = functools.partial(_downsample_kernel, H=H, W=W)

    skip, pooled = pl.pallas_call(
        kernel,
        grid=(B,),
        in_specs=[
            pl.BlockSpec((1, HWp, K1), lambda b: (b, 0, 0)),          # conv1 im2col
            pl.BlockSpec((K1, CP), lambda b: (0, 0)),                 # conv1 w
            pl.BlockSpec((1, CP), lambda b: (0, 0)),                  # conv1 b
            pl.BlockSpec((9 * CP, CP), lambda b: (0, 0)),             # conv2 w
            pl.BlockSpec((1, CP), lambda b: (0, 0)),                  # conv2 b
            pl.BlockSpec((1, 1, CP), lambda b: (b, 0, 0)),            # t_proj
        ],
        out_specs=(
            pl.BlockSpec((1, H, W, CP), lambda b: (b, 0, 0, 0)),
            pl.BlockSpec((1, H // 2, W // 2, CP), lambda b: (b, 0, 0, 0)),
        ),
        out_shape=(
            jax.ShapeDtypeStruct((B, H, W, CP), jnp.bfloat16),
            jax.ShapeDtypeStruct((B, H // 2, W // 2, CP), jnp.bfloat16),
        ),
        scratch_shapes=[pltpu.VMEM(((H + 2) * Wp + 8, CP), jnp.bfloat16)],
        compiler_params=pltpu.CompilerParams(
            dimension_semantics=("parallel",)),
        cost_estimate=pl.CostEstimate(flops=flops, transcendentals=0,
                                      bytes_accessed=bytes_accessed),
    )(*inputs)

    x_skip = jnp.transpose(skip[..., :out_channels], (0, 3, 1, 2)).astype(jnp.float32)
    x_pool = jnp.transpose(pooled[..., :out_channels], (0, 3, 1, 2)).astype(jnp.float32)
    return x_skip, x_pool


# --------------------------- params / reference -----------------------------

def init_params(key, in_channels, out_channels):
    keys = jax.random.split(key, 8)

    def u(k, shape, fan_in):
        s = 1.0 / float(np.sqrt(fan_in))
        return jax.random.uniform(k, shape, jnp.float32, -s, s)

    # Conv weights stored HWIO; Linear weights stored (in, out).
    w1 = u(keys[0], (3, 3, in_channels, out_channels), 9 * in_channels)
    b1 = u(keys[1], (out_channels,), 9 * in_channels)
    w2 = u(keys[2], (3, 3, out_channels, out_channels), 9 * out_channels)
    b2 = u(keys[3], (out_channels,), 9 * out_channels)
    fc1_w = u(keys[4], (128, 256), 128)
    fc1_b = u(keys[5], (256,), 128)
    fc2_w = u(keys[6], (256, out_channels), 256)
    fc2_b = u(keys[7], (out_channels,), 256)

    params = {
        # conv1: (9*cin, cout) -> pad to (K1, CP), rows ordered tap*cin + c.
        "w1": jnp.pad(w1.reshape(9 * in_channels, out_channels),
                      ((0, K1 - 9 * in_channels), (0, CP - out_channels))
                      ).astype(jnp.bfloat16),
        "b1": jnp.pad(b1, (0, CP - out_channels)).reshape(1, CP),
        # conv2: (3,3,CP,CP) -> (9*CP, CP), rows ordered tap*CP + c.
        "w2": jnp.pad(w2, ((0, 0), (0, 0),
                           (0, CP - out_channels), (0, CP - out_channels))
                      ).reshape(9 * CP, CP).astype(jnp.bfloat16),
        "b2": jnp.pad(b2, (0, CP - out_channels)).reshape(1, CP),
        # time-MLP stays in XLA (f32), fc2 padded so t_proj is already CP-wide.
        "fc1_w": fc1_w,
        "fc1_b": fc1_b,
        "fc2_w": jnp.pad(fc2_w, ((0, 0), (0, CP - out_channels))),
        "fc2_b": jnp.pad(fc2_b, (0, CP - out_channels)),
    }
    ref_params = dict(w1=w1, b1=b1, w2=w2, b2=b2,
                      fc1_w=fc1_w, fc1_b=fc1_b, fc2_w=fc2_w, fc2_b=fc2_b)
    return params, ref_params


def reference(ref_p, x_nchw, t_emb):
    """Pure-JAX (f32) DownSample.forward, for correctness checking."""
    dn = ("NHWC", "HWIO", "NHWC")
    x = jnp.transpose(x_nchw, (0, 2, 3, 1)).astype(jnp.float32)
    h = jax.lax.conv_general_dilated(x, ref_p["w1"], (1, 1), "SAME",
                                     dimension_numbers=dn) + ref_p["b1"]
    h = jnp.maximum(h, 0.0)
    h = jax.lax.conv_general_dilated(h, ref_p["w2"], (1, 1), "SAME",
                                     dimension_numbers=dn) + ref_p["b2"]
    h = jnp.maximum(h, 0.0)
    tp = jnp.maximum(t_emb @ ref_p["fc1_w"] + ref_p["fc1_b"], 0.0)
    tp = tp @ ref_p["fc2_w"] + ref_p["fc2_b"]
    h = h + tp[:, None, None, :]
    pooled = jax.lax.reduce_window(h, -jnp.inf, jax.lax.max,
                                   (1, 2, 2, 1), (1, 2, 2, 1), "VALID")
    to_nchw = lambda a: jnp.transpose(a, (0, 3, 1, 2))
    return to_nchw(h), to_nchw(pooled)


# ----------------------------------- main -----------------------------------

if __name__ == "__main__":
    key = jax.random.PRNGKey(0)
    pkey, xkey, tkey = jax.random.split(key, 3)

    B, CIN, COUT, H, W = 2, 4, 32, 16, 16
    params, ref_params = init_params(pkey, CIN, COUT)

    x = jax.random.normal(xkey, (B, CIN, H, W), jnp.float32)
    t_emb = jax.random.normal(tkey, (B, 128), jnp.float32)

    fwd = jax.jit(functools.partial(downsample, out_channels=COUT))
    x_skip, x_pool = fwd(params, x, t_emb)
    x_skip, x_pool = jax.block_until_ready((x_skip, x_pool))

    assert x_skip.shape == (B, COUT, H, W), x_skip.shape
    assert x_pool.shape == (B, COUT, H // 2, W // 2), x_pool.shape
    assert bool(jnp.all(jnp.isfinite(x_skip))) and bool(jnp.all(jnp.isfinite(x_pool)))

    # Correctness vs. pure-JAX f32 reference (kernel uses bf16 MXU operands/outputs).
    ref_skip, ref_pool = reference(ref_params, x, t_emb)
    np.testing.assert_allclose(np.asarray(x_skip), np.asarray(ref_skip),
                               rtol=5e-2, atol=5e-2)
    np.testing.assert_allclose(np.asarray(x_pool), np.asarray(ref_pool),
                               rtol=5e-2, atol=5e-2)

    print("KERNEL_OK")
</pallas_src>

<mosaic_0001>
module attributes {stable_mosaic.version = 11 : i64} {
  func.func @_downsample_kernel(%arg0: i32, %arg1: memref<1x288x128xbf16, #tpu.memory_space<vmem>>, %arg2: memref<128x128xbf16, #tpu.memory_space<vmem>>, %arg3: memref<1x128xf32, #tpu.memory_space<vmem>>, %arg4: memref<1152x128xbf16, #tpu.memory_space<vmem>>, %arg5: memref<1x128xf32, #tpu.memory_space<vmem>>, %arg6: memref<1x1x128xf32, #tpu.memory_space<vmem>>, %arg7: memref<1x16x16x128xbf16, #tpu.memory_space<vmem>>, %arg8: memref<1x8x8x128xbf16, #tpu.memory_space<vmem>>, %arg9: memref<332x128xbf16, #tpu.memory_space<vmem>>) attributes {dimension_semantics = [#tpu.dimension_semantics<parallel>], iteration_bounds = array<i64: 2>, scalar_prefetch = 0 : i64, scratch_operands = 1 : i64, tpu.core_type = #tpu.core_type<tc>, window_params = [{transform_indices = @transform_0, window_bounds = array<i64: 1, 288, 128>}, {pipeline_mode = #tpu.pipeline_mode<synchronous>, transform_indices = @transform_1, window_bounds = array<i64: 128, 128>}, {pipeline_mode = #tpu.pipeline_mode<synchronous>, transform_indices = @transform_2, window_bounds = array<i64: 1, 128>}, {pipeline_mode = #tpu.pipeline_mode<synchronous>, transform_indices = @transform_3, window_bounds = array<i64: 1152, 128>}, {pipeline_mode = #tpu.pipeline_mode<synchronous>, transform_indices = @transform_4, window_bounds = array<i64: 1, 128>}, {transform_indices = @transform_5, window_bounds = array<i64: 1, 1, 128>}, {transform_indices = @transform_6, window_bounds = array<i64: 1, 16, 16, 128>}, {transform_indices = @transform_7, window_bounds = array<i64: 1, 8, 8, 128>}]} {
    %c0_i32 = arith.constant 0 : i32
    %0 = arith.cmpi eq, %arg0, %c0_i32 : i32
    %1 = arith.extui %0 : i1 to i32
    %c0_i32_0 = arith.constant 0 : i32
    %2 = arith.cmpi ne, %1, %c0_i32_0 : i32
    scf.if %2 {
      %cst_42 = arith.constant 0.000000e+00 : bf16
      %78 = vector.broadcast %cst_42 : bf16 to vector<332x128xbf16>
      %c0_43 = arith.constant 0 : index
      %c0_44 = arith.constant 0 : index
      %79 = vector.load %arg9[%c0_43, %c0_44] : memref<332x128xbf16, #tpu.memory_space<vmem>>, vector<332x128xbf16>
      tpu.vector_store %arg9[%c0_43, %c0_44], %78 {strides = array<i32>} : memref<332x128xbf16, #tpu.memory_space<vmem>>, vector<332x128xbf16>,
    } else {
    }
    %c0 = arith.constant 0 : index
    %c0_1 = arith.constant 0 : index
    %c0_2 = arith.constant 0 : index
    %3 = vector.load %arg1[%c0, %c0_1, %c0_2] : memref<1x288x128xbf16, #tpu.memory_space<vmem>>, vector<1x288x128xbf16>
    %4 = vector.shape_cast %3 : vector<1x288x128xbf16> to vector<288x128xbf16>
    %c0_3 = arith.constant 0 : index
    %c0_4 = arith.constant 0 : index
    %5 = vector.load %arg2[%c0_3, %c0_4] : memref<128x128xbf16, #tpu.memory_space<vmem>>, vector<128x128xbf16>
    %cst = arith.constant dense<0.000000e+00> : vector<288x128xf32>
    %6 = tpu.matmul %4, %5, %cst {dimension_numbers = #tpu.dot_dimension_numbers<[1], [0], [0], [1], [0, 0, 1, 1], [], []>} : vector<288x128xbf16>, vector<128x128xbf16>, vector<288x128xf32> -> vector<288x128xf32>
    %c0_5 = arith.constant 0 : index
    %c0_6 = arith.constant 0 : index
    %7 = vector.load %arg3[%c0_5, %c0_6] : memref<1x128xf32, #tpu.memory_space<vmem>>, vector<1x128xf32>
    %8 = vector.broadcast %7 : vector<1x128xf32> to vector<288x128xf32>
    %9 = arith.addf %6, %8 : vector<288x128xf32>
    %cst_7 = arith.constant 0.000000e+00 : f32
    %10 = vector.broadcast %cst_7 : f32 to vector<288x128xf32>
    %11 = arith.maximumf %9, %10 : vector<288x128xf32>
    %12 = tpu.iota {dimensions = array<i32: 0>} : vector<288x128xi32>
    %c18_i32 = arith.constant 18 : i32
    %c0_i32_8 = arith.constant 0 : i32
    %13 = arith.cmpi eq, %c18_i32, %c0_i32_8 : i32
    %c1_i32 = arith.constant 1 : i32
    %14 = arith.select %13, %c1_i32, %c18_i32 : i32
    %15 = vector.broadcast %14 : i32 to vector<288x128xi32>
    %16 = arith.remsi %12, %15 : vector<288x128xi32>
    %c0_i32_9 = arith.constant 0 : i32
    %17 = vector.broadcast %c0_i32_9 : i32 to vector<288x128xi32>
    %18 = arith.cmpi ne, %16, %17 : vector<288x128xi32>
    %c0_i32_10 = arith.constant 0 : i32
    %19 = vector.broadcast %c0_i32_10 : i32 to vector<288x128xi32>
    %20 = arith.cmpi slt, %16, %19 : vector<288x128xi32>
    %c0_i32_11 = arith.constant 0 : i32
    %21 = arith.cmpi slt, %14, %c0_i32_11 : i32
    %22 = vector.broadcast %21 : i1 to vector<288x128xi1>
    %23 = vector.broadcast %22 : vector<288x128xi1> to vector<288x128xi1>
    %24 = arith.xori %20, %23 : vector<288x128xi1>
    %25 = arith.andi %24, %18 : vector<288x128xi1>
    %26 = vector.broadcast %14 : i32 to vector<288x128xi32>
    %27 = arith.addi %16, %26 : vector<288x128xi32>
    %28 = arith.select %25, %27, %16 : vector<288x128xi1>, vector<288x128xi32>
    %c16_i32 = arith.constant 16 : i32
    %29 = vector.broadcast %c16_i32 : i32 to vector<288x128xi32>
    %30 = arith.cmpi slt, %28, %29 : vector<288x128xi32>
    %cst_12 = arith.constant 0.000000e+00 : f32
    %31 = vector.broadcast %cst_12 : f32 to vector<288x128xf32>
    %32 = arith.select %30, %11, %31 : vector<288x128xi1>, vector<288x128xf32>
    %33 = arith.truncf %32 : vector<288x128xf32> to vector<288x128xbf16>
    %c19 = arith.constant 19 : index
    %c0_13 = arith.constant 0 : index
    %34 = vector.load %arg9[%c19, %c0_13] : memref<332x128xbf16, #tpu.memory_space<vmem>>, vector<288x128xbf16>
    tpu.vector_store %arg9[%c19, %c0_13], %33 {strides = array<i32>} : memref<332x128xbf16, #tpu.memory_space<vmem>>, vector<288x128xbf16>,
    %c0_14 = arith.constant 0 : index
    %c0_15 = arith.constant 0 : index
    %35 = vector.load %arg9[%c0_14, %c0_15] : memref<332x128xbf16, #tpu.memory_space<vmem>>, vector<288x128xbf16>
    %c1 = arith.constant 1 : index
    %c0_16 = arith.constant 0 : index
    %36 = vector.load %arg9[%c1, %c0_16] : memref<332x128xbf16, #tpu.memory_space<vmem>>, vector<288x128xbf16>
    %c2 = arith.constant 2 : index
    %c0_17 = arith.constant 0 : index
    %37 = vector.load %arg9[%c2, %c0_17] : memref<332x128xbf16, #tpu.memory_space<vmem>>, vector<288x128xbf16>
    %c18 = arith.constant 18 : index
    %c0_18 = arith.constant 0 : index
    %38 = vector.load %arg9[%c18, %c0_18] : memref<332x128xbf16, #tpu.memory_space<vmem>>, vector<288x128xbf16>
    %c19_19 = arith.constant 19 : index
    %c0_20 = arith.constant 0 : index
    %39 = vector.load %arg9[%c19_19, %c0_20] : memref<332x128xbf16, #tpu.memory_space<vmem>>, vector<288x128xbf16>
    %c20 = arith.constant 20 : index
    %c0_21 = arith.constant 0 : index
    %40 = vector.load %arg9[%c20, %c0_21] : memref<332x128xbf16, #tpu.memory_space<vmem>>, vector<288x128xbf16>
    %c36 = arith.constant 36 : index
    %c0_22 = arith.constant 0 : index
    %41 = vector.load %arg9[%c36, %c0_22] : memref<332x128xbf16, #tpu.memory_space<vmem>>, vector<288x128xbf16>
    %c37 = arith.constant 37 : index
    %c0_23 = arith.constant 0 : index
    %42 = vector.load %arg9[%c37, %c0_23] : memref<332x128xbf16, #tpu.memory_space<vmem>>, vector<288x128xbf16>
    %c38 = arith.constant 38 : index
    %c0_24 = arith.constant 0 : index
    %43 = vector.load %arg9[%c38, %c0_24] : memref<332x128xbf16, #tpu.memory_space<vmem>>, vector<288x128xbf16>
    %44 = tpu.concatenate %35, %36, %37, %38, %39, %40, %41, %42, %43 in 1 : vector<288x128xbf16>, vector<288x128xbf16>, vector<288x128xbf16>, vector<288x128xbf16>, vector<288x128xbf16>, vector<288x128xbf16>, vector<288x128xbf16>, vector<288x128xbf16>, vector<288x128xbf16> -> vector<288x1152xbf16>
    %c0_25 = arith.constant 0 : index
    %c0_26 = arith.constant 0 : index
    %45 = vector.load %arg4[%c0_25, %c0_26] : memref<1152x128xbf16, #tpu.memory_space<vmem>>, vector<1152x128xbf16>
    %cst_27 = arith.constant dense<0.000000e+00> : vector<288x128xf32>
    %46 = tpu.matmul %44, %45, %cst_27 {dimension_numbers = #tpu.dot_dimension_numbers<[1], [0], [0], [1], [0, 0, 1, 1], [], []>} : vector<288x1152xbf16>, vector<1152x128xbf16>, vector<288x128xf32> -> vector<288x128xf32>
    %c0_28 = arith.constant 0 : index
    %c0_29 = arith.constant 0 : index
    %47 = vector.load %arg5[%c0_28, %c0_29] : memref<1x128xf32, #tpu.memory_space<vmem>>, vector<1x128xf32>
    %48 = vector.broadcast %47 : vector<1x128xf32> to vector<288x128xf32>
    %49 = arith.addf %46, %48 : vector<288x128xf32>
    %cst_30 = arith.constant 0.000000e+00 : f32
    %50 = vector.broadcast %cst_30 : f32 to vector<288x128xf32>
    %51 = arith.maximumf %49, %50 : vector<288x128xf32>
    %c0_31 = arith.constant 0 : index
    %c0_32 = arith.constant 0 : index
    %c0_33 = arith.constant 0 : index
    %52 = vector.load %arg6[%c0_31, %c0_32, %c0_33] : memref<1x1x128xf32, #tpu.memory_space<vmem>>, vector<1x1x128xf32>
    %53 = vector.shape_cast %52 : vector<1x1x128xf32> to vector<1x128xf32>
    %54 = vector.broadcast %53 : vector<1x128xf32> to vector<288x128xf32>
    %55 = arith.addf %51, %54 : vector<288x128xf32>
    %56 = vector.shape_cast %55 : vector<288x128xf32> to vector<16x18x128xf32>
    %57 = vector.extract_strided_slice %56 {offsets = [0, 0, 0], sizes = [16, 16, 128], strides = [1, 1, 1]} : vector<16x18x128xf32> to vector<16x16x128xf32>
    %58 = arith.truncf %57 : vector<16x16x128xf32> to vector<16x16x128xbf16>
    %c0_34 = arith.constant 0 : index
    %c0_35 = arith.constant 0 : index
    %c0_36 = arith.constant 0 : index
    %c0_37 = arith.constant 0 : index
    %59 = vector.load %arg7[%c0_34, %c0_35, %c0_36, %c0_37] : memref<1x16x16x128xbf16, #tpu.memory_space<vmem>>, vector<1x16x16x128xbf16>
    %60 = vector.shape_cast %59 : vector<1x16x16x128xbf16> to vector<16x16x128xbf16>
    %61 = vector.shape_cast %58 : vector<16x16x128xbf16> to vector<1x16x16x128xbf16>
    tpu.vector_store %arg7[%c0_34, %c0_35, %c0_36, %c0_37], %61 {strides = array<i32>} : memref<1x16x16x128xbf16, #tpu.memory_space<vmem>>, vector<1x16x16x128xbf16>,
    %62 = vector.shape_cast %57 : vector<16x16x128xf32> to vector<16x8x2x128xf32>
    %63 = vector.extract_strided_slice %62 {offsets = [0, 0, 0, 0], sizes = [16, 8, 1, 128], strides = [1, 1, 1, 1]} : vector<16x8x2x128xf32> to vector<16x8x1x128xf32>
    %64 = vector.shape_cast %63 : vector<16x8x1x128xf32> to vector<16x8x128xf32>
    %65 = vector.extract_strided_slice %62 {offsets = [0, 0, 1, 0], sizes = [16, 8, 1, 128], strides = [1, 1, 1, 1]} : vector<16x8x2x128xf32> to vector<16x8x1x128xf32>
    %66 = vector.shape_cast %65 : vector<16x8x1x128xf32> to vector<16x8x128xf32>
    %67 = arith.maximumf %64, %66 : vector<16x8x128xf32>
    %68 = vector.shape_cast %67 : vector<16x8x128xf32> to vector<8x2x8x128xf32>
    %69 = vector.extract_strided_slice %68 {offsets = [0, 0, 0, 0], sizes = [8, 1, 8, 128], strides = [1, 1, 1, 1]} : vector<8x2x8x128xf32> to vector<8x1x8x128xf32>
    %70 = vector.shape_cast %69 : vector<8x1x8x128xf32> to vector<8x8x128xf32>
    %71 = vector.extract_strided_slice %68 {offsets = [0, 1, 0, 0], sizes = [8, 1, 8, 128], strides = [1, 1, 1, 1]} : vector<8x2x8x128xf32> to vector<8x1x8x128xf32>
    %72 = vector.shape_cast %71 : vector<8x1x8x128xf32> to vector<8x8x128xf32>
    %73 = arith.maximumf %70, %72 : vector<8x8x128xf32>
    %74 = arith.truncf %73 : vector<8x8x128xf32> to vector<8x8x128xbf16>
    %c0_38 = arith.constant 0 : index
    %c0_39 = arith.constant 0 : index
    %c0_40 = arith.constant 0 : index
    %c0_41 = arith.constant 0 : index
    %75 = vector.load %arg8[%c0_38, %c0_39, %c0_40, %c0_41] : memref<1x8x8x128xbf16, #tpu.memory_space<vmem>>, vector<1x8x8x128xbf16>
    %76 = vector.shape_cast %75 : vector<1x8x8x128xbf16> to vector<8x8x128xbf16>
    %77 = vector.shape_cast %74 : vector<8x8x128xbf16> to vector<1x8x8x128xbf16>
    tpu.vector_store %arg8[%c0_38, %c0_39, %c0_40, %c0_41], %77 {strides = array<i32>} : memref<1x8x8x128xbf16, #tpu.memory_space<vmem>>, vector<1x8x8x128xbf16>,
    return
  }
  func.func @transform_0(%arg0: i32) -> (i32, i32, i32) {
    %c0_i32 = arith.constant 0 : i32
    %c0_i32_0 = arith.constant 0 : i32
    %c0_i32_1 = arith.constant 0 : i32
    return %arg0, %c0_i32, %c0_i32_0 : i32, i32, i32
  }
  func.func @transform_1(%arg0: i32) -> (i32, i32) {
    %c0_i32 = arith.constant 0 : i32
    %c0_i32_0 = arith.constant 0 : i32
    %c0_i32_1 = arith.constant 0 : i32
    return %c0_i32, %c0_i32_0 : i32, i32
  }
  func.func @transform_2(%arg0: i32) -> (i32, i32) {
    %c0_i32 = arith.constant 0 : i32
    %c0_i32_0 = arith.constant 0 : i32
    %c0_i32_1 = arith.constant 0 : i32
    return %c0_i32, %c0_i32_0 : i32, i32
  }
  func.func @transform_3(%arg0: i32) -> (i32, i32) {
    %c0_i32 = arith.constant 0 : i32
    %c0_i32_0 = arith.constant 0 : i32
    %c0_i32_1 = arith.constant 0 : i32
    return %c0_i32, %c0_i32_0 : i32, i32
  }
  func.func @transform_4(%arg0: i32) -> (i32, i32) {
    %c0_i32 = arith.constant 0 : i32
    %c0_i32_0 = arith.constant 0 : i32
    %c0_i32_1 = arith.constant 0 : i32
    return %c0_i32, %c0_i32_0 : i32, i32
  }
  func.func @transform_5(%arg0: i32) -> (i32, i32, i32) {
    %c0_i32 = arith.constant 0 : i32
    %c0_i32_0 = arith.constant 0 : i32
    %c0_i32_1 = arith.constant 0 : i32
    return %arg0, %c0_i32, %c0_i32_0 : i32, i32, i32
  }
  func.func @transform_6(%arg0: i32) -> (i32, i32, i32, i32) {
    %c0_i32 = arith.constant 0 : i32
    %c0_i32_0 = arith.constant 0 : i32
    %c0_i32_1 = arith.constant 0 : i32
    %c0_i32_2 = arith.constant 0 : i32
    return %arg0, %c0_i32, %c0_i32_0, %c0_i32_1 : i32, i32, i32, i32
  }
  func.func @transform_7(%arg0: i32) -> (i32, i32, i32, i32) {
    %c0_i32 = arith.constant 0 : i32
    %c0_i32_0 = arith.constant 0 : i32
    %c0_i32_1 = arith.constant 0 : i32
    %c0_i32_2 = arith.constant 0 : i32
    return %arg0, %c0_i32, %c0_i32_0, %c0_i32_1 : i32, i32, i32, i32
  }
}

</mosaic_0001>

<llo_original>
// kernel: downsample.1
$region0: #{downsample.1}
  #allocation0 [shape = 'u32[]', space=smem, size = 0x4, offset = 0x4, fixed_abs, tag = 'smem constant byte address 0x4 - core index']
  #allocation1 [shape = 'u32[144,128]{1,0:T(1,128)}', space=vmem, size = 0x12000, scoped, tag = 'internal scratch']
  #allocation2 [shape = 'bf16[332,128]{1,0:T(8,128)(2,1)}', space=vmem, size = 0x15000, scoped, tag = 'scratch operand']
  %s0 = inlined_call_operand.vmem [shape: bf16[2,288,128], index: 0, kind: input, shape index: {}]
  %s1 = inlined_call_operand.vmem [shape: bf16[128,128], index: 1, kind: input, shape index: {}]
  %s2 = inlined_call_operand.vmem [shape: f32[1,128], index: 2, kind: input, shape index: {}]
  %s3 = inlined_call_operand.vmem [shape: bf16[1152,128], index: 3, kind: input, shape index: {}]
  %s4 = inlined_call_operand.vmem [shape: f32[1,128], index: 4, kind: input, shape index: {}]
  %s5 = inlined_call_operand.vmem [shape: f32[2,1,128], index: 5, kind: input, shape index: {}]
  %s6 = inlined_call_operand.vmem [shape: bf16[2,16,16,128], index: 6, kind: output, shape index: {0}]
  %s7 = inlined_call_operand.vmem [shape: bf16[2,8,8,128], index: 7, kind: output, shape index: {1}]
  %8 = xla_tuple %s6, %s7
  %s9 = sld [smem:[#allocation0]]
  $region69: #{downsample.1} parent=0
    _
  %s11 = ssub.s32 1, %s9
  %s12 = scalar_select 0, %s11, %s9
  loop: start=0, step=1, limit=4
  $region2: #{downsample.1} parent=0 // loop_pre_header
    _
  $region3: #{downsample.1} parent=0 // loop_header
    %s14 = sphi 0, %s18
    %p15 = scmp.ge.s32.totalorder %s14, 4
    %s24 = sphi 0, %s26
    %s27 = sphi 0, %s24
    %s28 = sphi 0, %s27
    %s44 = sphi 0, %s28
    %s48 = sphi 0, %s48
    %s50 = sphi 0, %s48
    %s51 = sphi 0, %s50
    %s65 = sphi 0, %s51
    %s69 = sphi 0, %s69
    %s71 = sphi 0, %s69
    %s72 = sphi 0, %s71
    %s86 = sphi 0, %s72
    %s90 = sphi 0, %s90
    %s92 = sphi 0, %s90
    %s93 = sphi 0, %s92
    %s107 = sphi 0, %s93
    %s111 = sphi 0, %s111
    %s113 = sphi 0, %s111
    %s114 = sphi 0, %s113
    %s128 = sphi 0, %s114
    %s134 = sphi 0, %s136
    %s137 = sphi 0, %s134
    %s138 = sphi 0, %s137
    %s154 = sphi 0, %s138
    %s160 = sphi 0, %s162
    %s163 = sphi 0, %s160
    %s164 = sphi 0, %s163
    %s180 = sphi 0, %s164
    %s186 = sphi 0, %s188
    %s189 = sphi 0, %s186
    %s190 = sphi 0, %s189
    %s206 = sphi 0, %s190
  $region4: #{downsample.1} parent=0 // loop_header_branch
    %17 = sbr.rel (%p15) target = $region8
  $region5: #{downsample.1} parent=0 // loop_body
    %s19 = ssub.s32 %s14, 1
    %s20 = ssub.s32 %s14, 2
    %s21 = sadd.s32 %s14, 1
    %s22 = ssub.s32 %s14, %s21
    %p23 = scmp.eq.s32.totalorder %s22, 0
    %s25 = sadd.s32 %s24, 1
    %s26 = scalar_select %p23, %s24, %s25
    %p29 = pneg %p23
    %p30 = scmp.eq.s32.totalorder %s14, 1
    %p31 = por %p29, %p30
    %p32 = scmp.ne.s32.totalorder %s24, %s27
    %p33 = scmp.eq.s32.totalorder %s14, 0
    %p34 = por %p32, %p33
    %p35 = scmp.ne.s32.totalorder %s24, %s27
    %p36 = scmp.eq.s32.totalorder %s19, 1
    %p37 = por %p35, %p36
    %p38 = scmp.ne.s32.totalorder %s27, %s28
    %p39 = scmp.eq.s32.totalorder %s19, 0
    %p40 = por %p38, %p39
    %p41 = scmp.ne.s32.totalorder %s27, %s28
    %p42 = scmp.eq.s32.totalorder %s20, 1
    %p43 = por %p41, %p42
    %p45 = scmp.ne.s32.totalorder %s28, %s44
    %p46 = scmp.eq.s32.totalorder %s20, 0
    %p47 = por %p45, %p46
    %s49 = sadd.s32 %s48, 1
    %p52 = scmp.eq.s32.totalorder %s14, 1
    %p53 = scmp.ne.s32.totalorder %s48, %s50
    %p54 = scmp.eq.s32.totalorder %s14, 0
    %p55 = por %p53, %p54
    %p56 = scmp.ne.s32.totalorder %s48, %s50
    %p57 = scmp.eq.s32.totalorder %s19, 1
    %p58 = por %p56, %p57
    %p59 = scmp.ne.s32.totalorder %s50, %s51
    %p60 = scmp.eq.s32.totalorder %s19, 0
    %p61 = por %p59, %p60
    %p62 = scmp.ne.s32.totalorder %s50, %s51
    %p63 = scmp.eq.s32.totalorder %s20, 1
    %p64 = por %p62, %p63
    %p66 = scmp.ne.s32.totalorder %s51, %s65
    %p67 = scmp.eq.s32.totalorder %s20, 0
    %p68 = por %p66, %p67
    %s70 = sadd.s32 %s69, 1
    %p73 = scmp.eq.s32.totalorder %s14, 1
    %p74 = scmp.ne.s32.totalorder %s69, %s71
    %p75 = scmp.eq.s32.totalorder %s14, 0
    %p76 = por %p74, %p75
    %p77 = scmp.ne.s32.totalorder %s69, %s71
    %p78 = scmp.eq.s32.totalorder %s19, 1
    %p79 = por %p77, %p78
    %p80 = scmp.ne.s32.totalorder %s71, %s72
    %p81 = scmp.eq.s32.totalorder %s19, 0
    %p82 = por %p80, %p81
    %p83 = scmp.ne.s32.totalorder %s71, %s72
    %p84 = scmp.eq.s32.totalorder %s20, 1
    %p85 = por %p83, %p84
    %p87 = scmp.ne.s32.totalorder %s72, %s86
    %p88 = scmp.eq.s32.totalorder %s20, 0
    %p89 = por %p87, %p88
    %s91 = sadd.s32 %s90, 1
    %p94 = scmp.eq.s32.totalorder %s14, 1
    %p95 = scmp.ne.s32.totalorder %s90, %s92
    %p96 = scmp.eq.s32.totalorder %s14, 0
    %p97 = por %p95, %p96
    %p98 = scmp.ne.s32.totalorder %s90, %s92
    %p99 = scmp.eq.s32.totalorder %s19, 1
    %p100 = por %p98, %p99
    %p101 = scmp.ne.s32.totalorder %s92, %s93
    %p102 = scmp.eq.s32.totalorder %s19, 0
    %p103 = por %p101, %p102
    %p104 = scmp.ne.s32.totalorder %s92, %s93
    %p105 = scmp.eq.s32.totalorder %s20, 1
    %p106 = por %p104, %p105
    %p108 = scmp.ne.s32.totalorder %s93, %s107
    %p109 = scmp.eq.s32.totalorder %s20, 0
    %p110 = por %p108, %p109
    %s112 = sadd.s32 %s111, 1
    %p115 = scmp.eq.s32.totalorder %s14, 1
    %p116 = scmp.ne.s32.totalorder %s111, %s113
    %p117 = scmp.eq.s32.totalorder %s14, 0
    %p118 = por %p116, %p117
    %p119 = scmp.ne.s32.totalorder %s111, %s113
    %p120 = scmp.eq.s32.totalorder %s19, 1
    %p121 = por %p119, %p120
    %p122 = scmp.ne.s32.totalorder %s113, %s114
    %p123 = scmp.eq.s32.totalorder %s19, 0
    %p124 = por %p122, %p123
    %p125 = scmp.ne.s32.totalorder %s113, %s114
    %p126 = scmp.eq.s32.totalorder %s20, 1
    %p127 = por %p125, %p126
    %p129 = scmp.ne.s32.totalorder %s114, %s128
    %p130 = scmp.eq.s32.totalorder %s20, 0
    %p131 = por %p129, %p130
    %s132 = ssub.s32 %s14, %s21
    %p133 = scmp.eq.s32.totalorder %s132, 0
    %s135 = sadd.s32 %s134, 1
    %s136 = scalar_select %p133, %s134, %s135
    %p139 = pneg %p133
    %p140 = scmp.eq.s32.totalorder %s14, 1
    %p141 = por %p139, %p140
    %p142 = scmp.ne.s32.totalorder %s134, %s137
    %p143 = scmp.eq.s32.totalorder %s14, 0
    %p144 = por %p142, %p143
    %p145 = scmp.ne.s32.totalorder %s134, %s137
    %p146 = scmp.eq.s32.totalorder %s19, 1
    %p147 = por %p145, %p146
    %p148 = scmp.ne.s32.totalorder %s137, %s138
    %p149 = scmp.eq.s32.totalorder %s19, 0
    %p150 = por %p148, %p149
    %p151 = scmp.ne.s32.totalorder %s137, %s138
    %p152 = scmp.eq.s32.totalorder %s20, 1
    %p153 = por %p151, %p152
    %p155 = scmp.ne.s32.totalorder %s138, %s154
    %p156 = scmp.eq.s32.totalorder %s20, 0
    %p157 = por %p155, %p156
    %s158 = ssub.s32 %s14, %s21
    %p159 = scmp.eq.s32.totalorder %s158, 0
    %s161 = sadd.s32 %s160, 1
    %s162 = scalar_select %p159, %s160, %s161
    %p165 = pneg %p159
    %p166 = scmp.eq.s32.totalorder %s14, 1
    %p167 = por %p165, %p166
    %p168 = scmp.ne.s32.totalorder %s160, %s163
    %p169 = scmp.eq.s32.totalorder %s14, 0
    %p170 = por %p168, %p169
    %p171 = scmp.ne.s32.totalorder %s160, %s163
    %p172 = scmp.eq.s32.totalorder %s19, 1
    %p173 = por %p171, %p172
    %p174 = scmp.ne.s32.totalorder %s163, %s164
    %p175 = scmp.eq.s32.totalorder %s19, 0
    %p176 = por %p174, %p175
    %p177 = scmp.ne.s32.totalorder %s163, %s164
    %p178 = scmp.eq.s32.totalorder %s20, 1
    %p179 = por %p177, %p178
    %p181 = scmp.ne.s32.totalorder %s164, %s180
    %p182 = scmp.eq.s32.totalorder %s20, 0
    %p183 = por %p181, %p182
    %s184 = ssub.s32 %s14, %s21
    %p185 = scmp.eq.s32.totalorder %s184, 0
    %s187 = sadd.s32 %s186, 1
    %s188 = scalar_select %p185, %s186, %s187
    %p191 = pneg %p185
    %p192 = scmp.eq.s32.totalorder %s14, 1
    %p193 = por %p191, %p192
    %p194 = scmp.ne.s32.totalorder %s186, %s189
    %p195 = scmp.eq.s32.totalorder %s14, 0
    %p196 = por %p194, %p195
    %p197 = scmp.ne.s32.totalorder %s186, %s189
    %p198 = scmp.eq.s32.totalorder %s19, 1
    %p199 = por %p197, %p198
    %p200 = scmp.ne.s32.totalorder %s189, %s190
    %p201 = scmp.eq.s32.totalorder %s19, 0
    %p202 = por %p200, %p201
    %p203 = scmp.ne.s32.totalorder %s189, %s190
    %p204 = scmp.eq.s32.totalorder %s20, 1
    %p205 = por %p203, %p204
    %p207 = scmp.ne.s32.totalorder %s190, %s206
    %p208 = scmp.eq.s32.totalorder %s20, 0
    %p209 = por %p207, %p208
    %p210 = scmp.le.s32.totalorder 1, %s14
    %p211 = scmp.lt.s32.totalorder %s14, 3
    %p212 = pnand %p210, %p211
    %p213 = pneg %p212
    // Predicated region
    $region9: #{downsample.1} parent=5 // pred_check
      _
    $region10: #{downsample.1} parent=5 // pred_check_branch
      %215 = sbr.rel (%p212) target = $region12
    $region11: #{downsample.1} parent=5 // pred_region
      %s216 = ssub.s32 %s14, 1
      // Predicated region
      $region13: #{downsample.1} parent=11 // pred_check
        %p217 = pneg %p61
      $region14: #{downsample.1} parent=11 // pred_check_branch
        %219 = sbr.rel (%p217) target = $region16
      $region15: #{downsample.1} parent=11 // pred_region
        _
      $region16: #{downsample.1} parent=11 // pred_fallthru
        _
      // Predicated region
      $region17: #{downsample.1} parent=11 // pred_check
        %p220 = pneg %p82
      $region18: #{downsample.1} parent=11 // pred_check_branch
        %222 = sbr.rel (%p220) target = $region20
      $region19: #{downsample.1} parent=11 // pred_region
        _
      $region20: #{downsample.1} parent=11 // pred_fallthru
        _
      // Predicated region
      $region21: #{downsample.1} parent=11 // pred_check
        %p223 = pneg %p103
      $region22: #{downsample.1} parent=11 // pred_check_branch
        %225 = sbr.rel (%p223) target = $region24
      $region23: #{downsample.1} parent=11 // pred_region
        _
      $region24: #{downsample.1} parent=11 // pred_fallthru
        _
      // Predicated region
      $region25: #{downsample.1} parent=11 // pred_check
        %p226 = pneg %p124
      $region26: #{downsample.1} parent=11 // pred_check_branch
        %228 = sbr.rel (%p226) target = $region28
      $region27: #{downsample.1} parent=11 // pred_region
        _
      $region28: #{downsample.1} parent=11 // pred_fallthru
        _
    $region12: #{downsample.1} parent=5 // pred_fallthru
      _
    %p229 = scmp.lt.s32.totalorder %s14, 2
    // Predicated region
    $region29: #{downsample.1} parent=5 // pred_check
      %p230 = pneg %p229
    $region30: #{downsample.1} parent=5 // pred_check_branch
      %232 = sbr.rel (%p230) target = $region32
    $region31: #{downsample.1} parent=5 // pred_region
      // Predicated region
      $region33: #{downsample.1} parent=31 // pred_check
        %p233 = pneg %p34
      $region34: #{downsample.1} parent=31 // pred_check_branch
        %235 = sbr.rel (%p233) target = $region36
      $region35: #{downsample.1} parent=31 // pred_region
        %p236 = scmp.lt.s32.totalorder %s14, 1
        %s237 = scalar_select %p236, %s14, 1
        %s238 = smul.addr %s237, 36
        %s239 = smul.addr %s238, 4
        %s240 = scalar_lea.vmem %s0, %s239
      $region36: #{downsample.1} parent=31 // pred_fallthru
        _
      // Predicated region
      $region37: #{downsample.1} parent=31 // pred_check
        %p241 = pneg %p144
      $region38: #{downsample.1} parent=31 // pred_check_branch
        %243 = sbr.rel (%p241) target = $region40
      $region39: #{downsample.1} parent=31 // pred_region
        %p244 = scmp.lt.s32.totalorder %s14, 1
        %s245 = scalar_select %p244, %s14, 1
        %s246 = scalar_lea.vmem %s5, %s245
      $region40: #{downsample.1} parent=31 // pred_fallthru
        _
    $region32: #{downsample.1} parent=5 // pred_fallthru
      _
    %p247 = scmp.le.s32.totalorder 1, %s14
    %p248 = scmp.lt.s32.totalorder %s14, 3
    %p249 = pnand %p247, %p248
    %p250 = pneg %p249
    // Predicated region
    $region41: #{downsample.1} parent=5 // pred_check
      _
    $region42: #{downsample.1} parent=5 // pred_check_branch
      %252 = sbr.rel (%p249) target = $region44
    $region43: #{downsample.1} parent=5 // pred_region
      %s253 = ssub.s32 %s14, 1
      %p254 = scmp.lt.s32.totalorder %s19, 1
      %s255 = scalar_select %p254, %s19, 1
      %s256 = smul.addr %s255, 36
      %s257 = smul.addr %s256, 4
      %s258 = scalar_lea.vmem %s0, %s257
      %p259 = pneg %p40
      %p260 = pneg %p37
      %p261 = pneg %p61
      %p262 = pneg %p58
      %p263 = pneg %p82
      %p264 = pneg %p79
      %p265 = pneg %p103
      %p266 = pneg %p100
      %p267 = pneg %p124
      %p268 = pneg %p121
      %p269 = scmp.lt.s32.totalorder %s19, 1
      %s270 = scalar_select %p269, %s19, 1
      %s271 = scalar_lea.vmem %s5, %s270
      %p272 = pneg %p150
      %p273 = pneg %p147
      %p274 = pneg %p176
      %p275 = pneg %p173
      %p276 = scmp.lt.s32.totalorder %s19, 1
      %s277 = scalar_select %p276, %s19, 1
      %s278 = smul.addr %s277, 32
      %s279 = smul.addr %s278, 4
      %s280 = scalar_lea.vmem %s6, %s279
      %p281 = pneg %p202
      %p282 = pneg %p199
      %p283 = scmp.lt.s32.totalorder %s19, 1
      %s284 = scalar_select %p283, %s19, 1
      %s285 = smul.addr %s284, 8
      %s286 = smul.addr %s285, 4
      %s287 = scalar_lea.vmem %s7, %s286
      %p288 = scmp.lt.s32.totalorder %s19, 1
      %s289 = scalar_select %p288, %s19, 1
      %s290 = smul.addr %s289, 36
      %s291 = smul.addr %s290, 4
      %s292 = scalar_lea.vmem %s0, %s291
      %p293 = scmp.lt.s32.totalorder %s19, 1
      %s294 = scalar_select %p293, %s19, 1
      %s295 = scalar_lea.vmem %s5, %s294
      %p296 = scmp.lt.s32.totalorder %s19, 1
      %s297 = scalar_select %p296, %s19, 1
      %s298 = smul.addr %s297, 32
      %s299 = smul.addr %s298, 4
      %s300 = scalar_lea.vmem %s6, %s299
      %p301 = scmp.lt.s32.totalorder %s19, 1
      %s302 = scalar_select %p301, %s19, 1
      %s303 = smul.addr %s302, 8
      %s304 = smul.addr %s303, 4
      %s305 = scalar_lea.vmem %s7, %s304
      %p307 = scmp.eq.s32.totalorder %s19, 0
      // Predicated region
      $region45: #{downsample.1} parent=43 // pred_check
        %p308 = pneg %p307
      $region46: #{downsample.1} parent=43 // pred_check_branch
        %310 = sbr.rel (%p308) target = $region48
      $region47: #{downsample.1} parent=43 // pred_region
        %311 = vst [vmem:[#allocation2] sm:$0xf] 0
        %312 = vst [vmem:[#allocation2 + $0x4] sm:$0xf] 0
        %313 = vst [vmem:[#allocation2 + $0x8] sm:$0xf] 0
        %314 = vst [vmem:[#allocation2 + $0xc] sm:$0xf] 0
        %315 = vst [vmem:[#allocation2 + $0x10] sm:$0xf] 0
        %316 = vst [vmem:[#allocation2 + $0x14] sm:$0xf] 0
        %317 = vst [vmem:[#allocation2 + $0x18] sm:$0xf] 0
        %318 = vst [vmem:[#allocation2 + $0x1c] sm:$0xf] 0
        %319 = vst [vmem:[#allocation2 + $0x20] sm:$0xf] 0
        %320 = vst [vmem:[#allocation2 + $0x24] sm:$0xf] 0
        %321 = vst [vmem:[#allocation2 + $0x28] sm:$0xf] 0
        %322 = vst [vmem:[#allocation2 + $0x2c] sm:$0xf] 0
        %323 = vst [vmem:[#allocation2 + $0x30] sm:$0xf] 0
        %324 = vst [vmem:[#allocation2 + $0x34] sm:$0xf] 0
        %325 = vst [vmem:[#allocation2 + $0x38] sm:$0xf] 0
        %326 = vst [vmem:[#allocation2 + $0x3c] sm:$0xf] 0
        %327 = vst [vmem:[#allocation2 + $0x40] sm:$0xf] 0
        %328 = vst [vmem:[#allocation2 + $0x44] sm:$0xf] 0
        %329 = vst [vmem:[#allocation2 + $0x48] sm:$0xf] 0
        %330 = vst [vmem:[#allocation2 + $0x4c] sm:$0xf] 0
        %331 = vst [vmem:[#allocation2 + $0x50] sm:$0xf] 0
        %332 = vst [vmem:[#allocation2 + $0x54] sm:$0xf] 0
        %333 = vst [vmem:[#allocation2 + $0x58] sm:$0xf] 0
        %334 = vst [vmem:[#allocation2 + $0x5c] sm:$0xf] 0
        %335 = vst [vmem:[#allocation2 + $0x60] sm:$0xf] 0
        %336 = vst [vmem:[#allocation2 + $0x64] sm:$0xf] 0
        %337 = vst [vmem:[#allocation2 + $0x68] sm:$0xf] 0
        %338 = vst [vmem:[#allocation2 + $0x6c] sm:$0xf] 0
        %339 = vst [vmem:[#allocation2 + $0x70] sm:$0xf] 0
        %340 = vst [vmem:[#allocation2 + $0x74] sm:$0xf] 0
        %341 = vst [vmem:[#allocation2 + $0x78] sm:$0xf] 0
        %342 = vst [vmem:[#allocation2 + $0x7c] sm:$0xf] 0
        %343 = vst [vmem:[#allocation2 + $0x80] sm:$0xf] 0
        %344 = vst [vmem:[#allocation2 + $0x84] sm:$0xf] 0
        %345 = vst [vmem:[#allocation2 + $0x88] sm:$0xf] 0
        %346 = vst [vmem:[#allocation2 + $0x8c] sm:$0xf] 0
        %347 = vst [vmem:[#allocation2 + $0x90] sm:$0xf] 0
        %348 = vst [vmem:[#allocation2 + $0x94] sm:$0xf] 0
        %349 = vst [vmem:[#allocation2 + $0x98] sm:$0xf] 0
        %350 = vst [vmem:[#allocation2 + $0x9c] sm:$0xf] 0
        %351 = vst [vmem:[#allocation2 + $0xa0] sm:$0xf] 0
        %352 = vst [vmem:[#allocation2 + $0xa4] sm:$0x3] 0
      $region48: #{downsample.1} parent=43 // pred_fallthru
        _
      %v353 = vld [vmem:[%s292] sm:$0xf]
      %v354 = vld [vmem:[%s292 + $0x4] sm:$0xf]
      %v355 = vld [vmem:[%s292 + $0x8] sm:$0xf]
      %v356 = vld [vmem:[%s292 + $0xc] sm:$0xf]
      %v357 = vld [vmem:[%s292 + $0x10] sm:$0xf]
      %v358 = vld [vmem:[%s292 + $0x14] sm:$0xf]
      %v359 = vld [vmem:[%s292 + $0x18] sm:$0xf]
      %v360 = vld [vmem:[%s292 + $0x1c] sm:$0xf]
      %v361 = vld [vmem:[%s292 + $0x20] sm:$0xf]
      %v362 = vld [vmem:[%s292 + $0x24] sm:$0xf]
      %v363 = vld [vmem:[%s292 + $0x28] sm:$0xf]
      %v364 = vld [vmem:[%s292 + $0x2c] sm:$0xf]
      %v365 = vld [vmem:[%s292 + $0x30] sm:$0xf]
      %v366 = vld [vmem:[%s292 + $0x34] sm:$0xf]
      %v367 = vld [vmem:[%s292 + $0x38] sm:$0xf]
      %v368 = vld [vmem:[%s292 + $0x3c] sm:$0xf]
      %v369 = vld [vmem:[%s292 + $0x40] sm:$0xf]
      %v370 = vld [vmem:[%s292 + $0x44] sm:$0xf]
      %v371 = vld [vmem:[%s292 + $0x48] sm:$0xf]
      %v372 = vld [vmem:[%s292 + $0x4c] sm:$0xf]
      %v373 = vld [vmem:[%s292 + $0x50] sm:$0xf]
      %v374 = vld [vmem:[%s292 + $0x54] sm:$0xf]
      %v375 = vld [vmem:[%s292 + $0x58] sm:$0xf]
      %v376 = vld [vmem:[%s292 + $0x5c] sm:$0xf]
      %v377 = vld [vmem:[%s292 + $0x60] sm:$0xf]
      %v378 = vld [vmem:[%s292 + $0x64] sm:$0xf]
      %v379 = vld [vmem:[%s292 + $0x68] sm:$0xf]
      %v380 = vld [vmem:[%s292 + $0x6c] sm:$0xf]
      %v381 = vld [vmem:[%s292 + $0x70] sm:$0xf]
      %v382 = vld [vmem:[%s292 + $0x74] sm:$0xf]
      %v383 = vld [vmem:[%s292 + $0x78] sm:$0xf]
      %v384 = vld [vmem:[%s292 + $0x7c] sm:$0xf]
      %v385 = vld [vmem:[%s292 + $0x80] sm:$0xf]
      %v386 = vld [vmem:[%s292 + $0x84] sm:$0xf]
      %v387 = vld [vmem:[%s292 + $0x88] sm:$0xf]
      %v388 = vld [vmem:[%s292 + $0x8c] sm:$0xf]
      %v389 = vld [vmem:[%s1] sm:$0xf]
      %v390 = vld [vmem:[%s1 + $0x4] sm:$0xf]
      %v391 = vld [vmem:[%s1 + $0x8] sm:$0xf]
      %v392 = vld [vmem:[%s1 + $0xc] sm:$0xf]
      %v393 = vld [vmem:[%s1 + $0x10] sm:$0xf]
      %v394 = vld [vmem:[%s1 + $0x14] sm:$0xf]
      %v395 = vld [vmem:[%s1 + $0x18] sm:$0xf]
      %v396 = vld [vmem:[%s1 + $0x1c] sm:$0xf]
      %v397 = vld [vmem:[%s1 + $0x20] sm:$0xf]
      %v398 = vld [vmem:[%s1 + $0x24] sm:$0xf]
      %v399 = vld [vmem:[%s1 + $0x28] sm:$0xf]
      %v400 = vld [vmem:[%s1 + $0x2c] sm:$0xf]
      %v401 = vld [vmem:[%s1 + $0x30] sm:$0xf]
      %v402 = vld [vmem:[%s1 + $0x34] sm:$0xf]
      %v403 = vld [vmem:[%s1 + $0x38] sm:$0xf]
      %v404 = vld [vmem:[%s1 + $0x3c] sm:$0xf]
      %v405 = vld [vmem:[%s2] sm:$0x1]
      %v407 = vlaneseq
      %v408 = vshrl.u32 %v407, 7
      %v409 = vsub.s32 0, %v408
      %v410 = vrot.slane %v405, %v409
      %v448 = vunpack.c.l.b16 %v353
      %v449 = vunpack.c.l.b16 %v354
      %v450 = vunpack.c.l.b16 %v355
      %v451 = vunpack.c.l.b16 %v356
      %v452 = vunpack.c.l.b16 %v357
      %v453 = vunpack.c.l.b16 %v358
      %v454 = vunpack.c.l.b16 %v359
      %v455 = vunpack.c.l.b16 %v360
      %v456 = vunpack.c.l.b16 %v361
      %v457 = vunpack.c.l.b16 %v362
      %v458 = vunpack.c.l.b16 %v363
      %v459 = vunpack.c.l.b16 %v364
      %v460 = vunpack.c.l.b16 %v365
      %v461 = vunpack.c.l.b16 %v366
      %v462 = vunpack.c.l.b16 %v367
      %v463 = vunpack.c.l.b16 %v368
      %v464 = vunpack.c.l.b16 %v369
      %v465 = vunpack.c.l.b16 %v370
      %v466 = vunpack.c.l.b16 %v371
      %v467 = vunpack.c.l.b16 %v372
      %v468 = vunpack.c.l.b16 %v373
      %v469 = vunpack.c.l.b16 %v374
      %v470 = vunpack.c.l.b16 %v375
      %v471 = vunpack.c.l.b16 %v376
      %v472 = vunpack.c.l.b16 %v377
      %v473 = vunpack.c.l.b16 %v378
      %v474 = vunpack.c.l.b16 %v379
      %v475 = vunpack.c.l.b16 %v380
      %v476 = vunpack.c.l.b16 %v381
      %v477 = vunpack.c.l.b16 %v382
      %v478 = vunpack.c.l.b16 %v383
      %v479 = vunpack.c.l.b16 %v384
      %v480 = vunpack.c.l.b16 %v385
      %v481 = vunpack.c.l.b16 %v386
      %v482 = vunpack.c.l.b16 %v387
      %v483 = vunpack.c.l.b16 %v388
      %v484 = vpack.c.b16 %v449, %v448
      %v485 = vpack.c.b16 %v451, %v450
      %v486 = vpack.c.b16 %v453, %v452
      %v487 = vpack.c.b16 %v455, %v454
      %v488 = vpack.c.b16 %v457, %v456
      %v489 = vpack.c.b16 %v459, %v458
      %v490 = vpack.c.b16 %v461, %v460
      %v491 = vpack.c.b16 %v463, %v462
      %v492 = vpack.c.b16 %v465, %v464
      %v493 = vpack.c.b16 %v467, %v466
      %v494 = vpack.c.b16 %v469, %v468
      %v495 = vpack.c.b16 %v471, %v470
      %v496 = vpack.c.b16 %v473, %v472
      %v497 = vpack.c.b16 %v475, %v474
      %v498 = vpack.c.b16 %v477, %v476
      %v499 = vpack.c.b16 %v479, %v478
      %v500 = vpack.c.b16 %v481, %v480
      %v501 = vpack.c.b16 %v483, %v482
      %v536 = vunpack.c.l.b16 %v389
      %v537 = vunpack.c.l.b16 %v390
      %v538 = vunpack.c.l.b16 %v391
      %v539 = vunpack.c.l.b16 %v392
      %v540 = vunpack.c.l.b16 %v393
      %v541 = vunpack.c.l.b16 %v394
      %v542 = vunpack.c.l.b16 %v395
      %v543 = vunpack.c.l.b16 %v396
      %v544 = vunpack.c.l.b16 %v397
      %v545 = vunpack.c.l.b16 %v398
      %v546 = vunpack.c.l.b16 %v399
      %v547 = vunpack.c.l.b16 %v400
      %v548 = vunpack.c.l.b16 %v401
      %v549 = vunpack.c.l.b16 %v402
      %v550 = vunpack.c.l.b16 %v403
      %v551 = vunpack.c.l.b16 %v404
      %v552 = vpack.c.b16 %v537, %v536
      %v553 = vpack.c.b16 %v539, %v538
      %v554 = vpack.c.b16 %v541, %v540
      %v555 = vpack.c.b16 %v543, %v542
      %v556 = vpack.c.b16 %v545, %v544
      %v557 = vpack.c.b16 %v547, %v546
      %v558 = vpack.c.b16 %v549, %v548
      %v559 = vpack.c.b16 %v551, %v550
      %568 = vmatprep.subr.bf16.mxu0 0
      %569 = vmatpush1.bf16.msra.mxu0 %v552
      %570 = vmatprep.subr.bf16.mxu0 0
      %571 = vmatpush1.bf16.msra.mxu0 %v553
      %572 = vmatprep.subr.bf16.mxu0 0
      %573 = vmatpush1.bf16.msra.mxu0 %v554
      %574 = vmatprep.subr.bf16.mxu0 0
      %575 = vmatpush1.bf16.msra.mxu0 %v555
      %576 = vmatprep.subr.bf16.mxu0 0
      %577 = vmatpush1.bf16.msra.mxu0 %v556
      %578 = vmatprep.subr.bf16.mxu0 0
      %579 = vmatpush1.bf16.msra.mxu0 %v557
      %580 = vmatprep.subr.bf16.mxu0 0
      %581 = vmatpush1.bf16.msra.mxu0 %v558
      %582 = vmatprep.subr.bf16.mxu0 0
      %583 = vmatpush1.bf16.msra.mxu0 %v559
      %584 = vmatprep.subr.bf16.mxu0 0
      %585 = vmatpush1.bf16.msra.mxu0 0
      %586 = vmatprep.subr.bf16.mxu0 0
      %587 = vmatpush1.bf16.msra.mxu0 0
      %588 = vmatprep.subr.bf16.mxu0 0
      %589 = vmatpush1.bf16.msra.mxu0 0
      %590 = vmatprep.subr.bf16.mxu0 0
      %591 = vmatpush1.bf16.msra.mxu0 0
      %592 = vmatprep.subr.bf16.mxu0 0
      %593 = vmatpush1.bf16.msra.mxu0 0
      %594 = vmatprep.subr.bf16.mxu0 0
      %595 = vmatpush1.bf16.msra.mxu0 0
      %596 = vmatprep.subr.bf16.mxu0 0
      %597 = vmatpush1.bf16.msra.mxu0 0
      %598 = vmatprep.subr.bf16.mxu0 0
      %599 = vmatpush1.bf16.msra.mxu0 0
      %600 = vmatprep.mubr.bf16.mxu0 0
      %601 = vmatmul.mubr.bf16.gmra.mrb[0].mxu0 %v484
      %v602 = vpop.f32.mrb[0].mxu0
      %v603 = vadd.f32 %v410, %v602
      %v604 = vpop.f32.mrb[0].mxu0
      %v605 = vpop.f32.mrb[0].mxu0
      %v606 = vadd.f32 %v410, %v605
      %v607 = vpop.f32.mrb[0].mxu0
      %608 = vmatprep.mubr.bf16.mxu0 0
      %609 = vmatmul.mubr.bf16.gmra.mrb[0].mxu0 %v485
      %v610 = vpop.f32.mrb[0].mxu0
      %v611 = vadd.f32 %v410, %v610
      %v612 = vpop.f32.mrb[0].mxu0
      %v613 = vpop.f32.mrb[0].mxu0
      %v614 = vadd.f32 %v410, %v613
      %v615 = vpop.f32.mrb[0].mxu0
      %616 = vmatprep.mubr.bf16.mxu0 0
      %617 = vmatmul.mubr.bf16.gmra.mrb[0].mxu0 %v486
      %v618 = vpop.f32.mrb[0].mxu0
      %v619 = vadd.f32 %v410, %v618
      %v620 = vpop.f32.mrb[0].mxu0
      %v621 = vpop.f32.mrb[0].mxu0
      %v622 = vadd.f32 %v410, %v621
      %v623 = vpop.f32.mrb[0].mxu0
      %624 = vmatprep.mubr.bf16.mxu0 0
      %625 = vmatmul.mubr.bf16.gmra.mrb[0].mxu0 %v487
      %v626 = vpop.f32.mrb[0].mxu0
      %v627 = vadd.f32 %v410, %v626
      %v628 = vpop.f32.mrb[0].mxu0
      %v629 = vpop.f32.mrb[0].mxu0
      %v630 = vadd.f32 %v410, %v629
      %v631 = vpop.f32.mrb[0].mxu0
      %632 = vmatprep.mubr.bf16.mxu0 0
      %633 = vmatmul.mubr.bf16.gmra.mrb[0].mxu0 %v488
      %v634 = vpop.f32.mrb[0].mxu0
      %v635 = vadd.f32 %v410, %v634
      %v636 = vpop.f32.mrb[0].mxu0
      %v637 = vpop.f32.mrb[0].mxu0
      %v638 = vadd.f32 %v410, %v637
      %v639 = vpop.f32.mrb[0].mxu0
      %640 = vmatprep.mubr.bf16.mxu0 0
      %641 = vmatmul.mubr.bf16.gmra.mrb[0].mxu0 %v489
      %v642 = vpop.f32.mrb[0].mxu0
      %v643 = vadd.f32 %v410, %v642
      %v644 = vpop.f32.mrb[0].mxu0
      %v645 = vpop.f32.mrb[0].mxu0
      %v646 = vadd.f32 %v410, %v645
      %v647 = vpop.f32.mrb[0].mxu0
      %648 = vmatprep.mubr.bf16.mxu0 0
      %649 = vmatmul.mubr.bf16.gmra.mrb[0].mxu0 %v490
      %v650 = vpop.f32.mrb[0].mxu0
      %v651 = vadd.f32 %v410, %v650
      %v652 = vpop.f32.mrb[0].mxu0
      %v653 = vpop.f32.mrb[0].mxu0
      %v654 = vadd.f32 %v410, %v653
      %v655 = vpop.f32.mrb[0].mxu0
      %656 = vmatprep.mubr.bf16.mxu0 0
      %657 = vmatmul.mubr.bf16.gmra.mrb[0].mxu0 %v491
      %v658 = vpop.f32.mrb[0].mxu0
      %v659 = vadd.f32 %v410, %v658
      %v660 = vpop.f32.mrb[0].mxu0
      %v661 = vpop.f32.mrb[0].mxu0
      %v662 = vadd.f32 %v410, %v661
      %v663 = vpop.f32.mrb[0].mxu0
      %664 = vmatprep.mubr.bf16.mxu0 0
      %665 = vmatmul.mubr.bf16.gmra.mrb[0].mxu0 %v492
      %v666 = vpop.f32.mrb[0].mxu0
      %v667 = vadd.f32 %v410, %v666
      %v668 = vpop.f32.mrb[0].mxu0
      %v669 = vpop.f32.mrb[0].mxu0
      %v670 = vadd.f32 %v410, %v669
      %v671 = vpop.f32.mrb[0].mxu0
      %672 = vmatprep.mubr.bf16.mxu0 0
      %673 = vmatmul.mubr.bf16.gmra.mrb[0].mxu0 %v493
      %v674 = vpop.f32.mrb[0].mxu0
      %v675 = vadd.f32 %v410, %v674
      %v676 = vpop.f32.mrb[0].mxu0
      %v677 = vpop.f32.mrb[0].mxu0
      %v678 = vadd.f32 %v410, %v677
      %v679 = vpop.f32.mrb[0].mxu0
      %680 = vmatprep.mubr.bf16.mxu0 0
      %681 = vmatmul.mubr.bf16.gmra.mrb[0].mxu0 %v494
      %v682 = vpop.f32.mrb[0].mxu0
      %v683 = vadd.f32 %v410, %v682
      %v684 = vpop.f32.mrb[0].mxu0
      %v685 = vpop.f32.mrb[0].mxu0
      %v686 = vadd.f32 %v410, %v685
      %v687 = vpop.f32.mrb[0].mxu0
      %688 = vmatprep.mubr.bf16.mxu0 0
      %689 = vmatmul.mubr.bf16.gmra.mrb[0].mxu0 %v495
      %v690 = vpop.f32.mrb[0].mxu0
      %v691 = vadd.f32 %v410, %v690
      %v692 = vpop.f32.mrb[0].mxu0
      %v693 = vpop.f32.mrb[0].mxu0
      %v694 = vadd.f32 %v410, %v693
      %v695 = vpop.f32.mrb[0].mxu0
      %696 = vmatprep.mubr.bf16.mxu0 0
      %697 = vmatmul.mubr.bf16.gmra.mrb[0].mxu0 %v496
      %v698 = vpop.f32.mrb[0].mxu0
      %v699 = vadd.f32 %v410, %v698
      %v700 = vpop.f32.mrb[0].mxu0
      %v701 = vpop.f32.mrb[0].mxu0
      %v702 = vadd.f32 %v410, %v701
      %v703 = vpop.f32.mrb[0].mxu0
      %704 = vmatprep.mubr.bf16.mxu0 0
      %705 = vmatmul.mubr.bf16.gmra.mrb[0].mxu0 %v497
      %v706 = vpop.f32.mrb[0].mxu0
      %v707 = vadd.f32 %v410, %v706
      %v708 = vpop.f32.mrb[0].mxu0
      %v709 = vpop.f32.mrb[0].mxu0
      %v710 = vadd.f32 %v410, %v709
      %v711 = vpop.f32.mrb[0].mxu0
      %712 = vmatprep.mubr.bf16.mxu0 0
      %713 = vmatmul.mubr.bf16.gmra.mrb[0].mxu0 %v498
      %v714 = vpop.f32.mrb[0].mxu0
      %v715 = vadd.f32 %v410, %v714
      %v716 = vpop.f32.mrb[0].mxu0
      %v717 = vpop.f32.mrb[0].mxu0
      %v718 = vadd.f32 %v410, %v717
      %v719 = vpop.f32.mrb[0].mxu0
      %720 = vmatprep.mubr.bf16.mxu0 0
      %721 = vmatmul.mubr.bf16.gmra.mrb[0].mxu0 %v499
      %v722 = vpop.f32.mrb[0].mxu0
      %v723 = vadd.f32 %v410, %v722
      %v724 = vpop.f32.mrb[0].mxu0
      %v725 = vpop.f32.mrb[0].mxu0
      %v726 = vadd.f32 %v410, %v725
      %v727 = vpop.f32.mrb[0].mxu0
      %728 = vmatprep.mubr.bf16.mxu0 0
      %729 = vmatmul.mubr.bf16.gmra.mrb[0].mxu0 %v500
      %v730 = vpop.f32.mrb[0].mxu0
      %v731 = vadd.f32 %v410, %v730
      %v732 = vpop.f32.mrb[0].mxu0
      %v733 = vpop.f32.mrb[0].mxu0
      %v734 = vadd.f32 %v410, %v733
      %v735 = vpop.f32.mrb[0].mxu0
      %736 = vmatprep.mubr.bf16.mxu0 0
      %737 = vmatmul.mubr.bf16.gmra.mrb[0].mxu0 %v501
      %v738 = vpop.f32.mrb[0].mxu0
      %v739 = vadd.f32 %v410, %v738
      %v740 = vpop.f32.mrb[0].mxu0
      %v741 = vpop.f32.mrb[0].mxu0
      %v742 = vadd.f32 %v410, %v741
      %v743 = vpop.f32.mrb[0].mxu0
      %744 = vdwg.mxu0
      %v745 = vmax.f32 %v603, 0.0
      %v746 = vmax.f32 %v606, 0.0
      %v747 = vmax.f32 %v611, 0.0
      %v748 = vmax.f32 %v614, 0.0
      %v749 = vmax.f32 %v619, 0.0
      %v750 = vmax.f32 %v622, 0.0
      %v751 = vmax.f32 %v627, 0.0
      %v752 = vmax.f32 %v630, 0.0
      %v753 = vmax.f32 %v635, 0.0
      %v754 = vmax.f32 %v638, 0.0
      %v755 = vmax.f32 %v643, 0.0
      %v756 = vmax.f32 %v646, 0.0
      %v757 = vmax.f32 %v651, 0.0
      %v758 = vmax.f32 %v654, 0.0
      %v759 = vmax.f32 %v659, 0.0
      %v760 = vmax.f32 %v662, 0.0
      %v761 = vmax.f32 %v667, 0.0
      %v762 = vmax.f32 %v670, 0.0
      %v763 = vmax.f32 %v675, 0.0
      %v764 = vmax.f32 %v678, 0.0
      %v765 = vmax.f32 %v683, 0.0
      %v766 = vmax.f32 %v686, 0.0
      %v767 = vmax.f32 %v691, 0.0
      %v768 = vmax.f32 %v694, 0.0
      %v769 = vmax.f32 %v699, 0.0
      %v770 = vmax.f32 %v702, 0.0
      %v771 = vmax.f32 %v707, 0.0
      %v772 = vmax.f32 %v710, 0.0
      %v773 = vmax.f32 %v715, 0.0
      %v774 = vmax.f32 %v718, 0.0
      %v775 = vmax.f32 %v723, 0.0
      %v776 = vmax.f32 %v726, 0.0
      %v777 = vmax.f32 %v731, 0.0
      %v778 = vmax.f32 %v734, 0.0
      %v779 = vmax.f32 %v739, 0.0
      %v780 = vmax.f32 %v742, 0.0
      %v781 = vlaneseq
      %v782 = vshrl.u32 %v781, 7
      %v783 = vadd.s32 %v782, 8
      %v784 = vadd.s32 %v782, 16
      %v785 = vadd.s32 %v782, 24
      %v786 = vadd.s32 %v782, 32
      %v787 = vadd.s32 %v782, 40
      %v788 = vadd.s32 %v782, 48
      %v789 = vadd.s32 %v782, 56
      %v790 = vadd.s32 %v782, 64
      %v791 = vadd.s32 %v782, 72
      %v792 = vadd.s32 %v782, 80
      %v793 = vadd.s32 %v782, 88
      %v794 = vadd.s32 %v782, 96
      %v795 = vadd.s32 %v782, 104
      %v796 = vadd.s32 %v782, 112
      %v797 = vadd.s32 %v782, 120
      %v798 = vadd.s32 %v782, 128
      %v799 = vadd.s32 %v782, 136
      %v800 = vadd.s32 %v782, 144
      %v801 = vadd.s32 %v782, 152
      %v802 = vadd.s32 %v782, 160
      %v803 = vadd.s32 %v782, 168
      %v804 = vadd.s32 %v782, 176
      %v805 = vadd.s32 %v782, 184
      %v806 = vadd.s32 %v782, 192
      %v807 = vadd.s32 %v782, 200
      %v808 = vadd.s32 %v782, 208
      %v809 = vadd.s32 %v782, 216
      %v810 = vadd.s32 %v782, 224
      %v811 = vadd.s32 %v782, 232
      %v812 = vadd.s32 %v782, 240
      %v813 = vadd.s32 %v782, 248
      %v814 = vadd.s32 %v782, 256
      %v815 = vadd.s32 %v782, 264
      %v816 = vadd.s32 %v782, 272
      %v817 = vadd.s32 %v782, 280
      %vm818 = vcmp.lt.s32.totalorder %v782, 0
      %v819 = vsub.s32 0, %v782
      %v820 = vsel %vm818, %v819, %v782
      %v821 = vmul.u32.u64.compose %v820, 3817748708
      %v822 = vextract.low.u32 %v821
      %v823 = vextract.high.u32 %v821
      %v824 = vshrl.u32 %v823, 4
      %v825 = vmul.u32 %v824, 18
      %v826 = vsub.s32 %v820, %v825
      %v827 = vsub.s32 0, %v826
      %v828 = vsel %vm818, %v827, %v826
      %vm829 = vcmp.lt.s32.totalorder %v783, 0
      %v830 = vsub.s32 0, %v783
      %v831 = vsel %vm829, %v830, %v783
      %v832 = vmul.u32.u64.compose %v831, 3817748708
      %v833 = vextract.low.u32 %v832
      %v834 = vextract.high.u32 %v832
      %v835 = vshrl.u32 %v834, 4
      %v836 = vmul.u32 %v835, 18
      %v837 = vsub.s32 %v831, %v836
      %v838 = vsub.s32 0, %v837
      %v839 = vsel %vm829, %v838, %v837
      %vm840 = vcmp.lt.s32.totalorder %v784, 0
      %v841 = vsub.s32 0, %v784
      %v842 = vsel %vm840, %v841, %v784
      %v843 = vmul.u32.u64.compose %v842, 3817748708
      %v844 = vextract.low.u32 %v843
      %v845 = vextract.high.u32 %v843
      %v846 = vshrl.u32 %v845, 4
      %v847 = vmul.u32 %v846, 18
      %v848 = vsub.s32 %v842, %v847
      %v849 = vsub.s32 0, %v848
      %v850 = vsel %vm840, %v849, %v848
      %vm851 = vcmp.lt.s32.totalorder %v785, 0
      %v852 = vsub.s32 0, %v785
      %v853 = vsel %vm851, %v852, %v785
      %v854 = vmul.u32.u64.compose %v853, 3817748708
      %v855 = vextract.low.u32 %v854
      %v856 = vextract.high.u32 %v854
      %v857 = vshrl.u32 %v856, 4
      %v858 = vmul.u32 %v857, 18
      %v859 = vsub.s32 %v853, %v858
      %v860 = vsub.s32 0, %v859
      %v861 = vsel %vm851, %v860, %v859
      %vm862 = vcmp.lt.s32.totalorder %v786, 0
      %v863 = vsub.s32 0, %v786
      %v864 = vsel %vm862, %v863, %v786
      %v865 = vmul.u32.u64.compose %v864, 3817748708
      %v866 = vextract.low.u32 %v865
      %v867 = vextract.high.u32 %v865
      %v868 = vshrl.u32 %v867, 4
      %v869 = vmul.u32 %v868, 18
      %v870 = vsub.s32 %v864, %v869
      %v871 = vsub.s32 0, %v870
      %v872 = vsel %vm862, %v871, %v870
      %vm873 = vcmp.lt.s32.totalorder %v787, 0
      %v874 = vsub.s32 0, %v787
      %v875 = vsel %vm873, %v874, %v787
      %v876 = vmul.u32.u64.compose %v875, 3817748708
      %v877 = vextract.low.u32 %v876
      %v878 = vextract.high.u32 %v876
      %v879 = vshrl.u32 %v878, 4
      %v880 = vmul.u32 %v879, 18
      %v881 = vsub.s32 %v875, %v880
      %v882 = vsub.s32 0, %v881
      %v883 = vsel %vm873, %v882, %v881
      %vm884 = vcmp.lt.s32.totalorder %v788, 0
      %v885 = vsub.s32 0, %v788
      %v886 = vsel %vm884, %v885, %v788
      %v887 = vmul.u32.u64.compose %v886, 3817748708
      %v888 = vextract.low.u32 %v887
      %v889 = vextract.high.u32 %v887
      %v890 = vshrl.u32 %v889, 4
      %v891 = vmul.u32 %v890, 18
      %v892 = vsub.s32 %v886, %v891
      %v893 = vsub.s32 0, %v892
      %v894 = vsel %vm884, %v893, %v892
      %vm895 = vcmp.lt.s32.totalorder %v789, 0
      %v896 = vsub.s32 0, %v789
      %v897 = vsel %vm895, %v896, %v789
      %v898 = vmul.u32.u64.compose %v897, 3817748708
      %v899 = vextract.low.u32 %v898
      %v900 = vextract.high.u32 %v898
      %v901 = vshrl.u32 %v900, 4
      %v902 = vmul.u32 %v901, 18
      %v903 = vsub.s32 %v897, %v902
      %v904 = vsub.s32 0, %v903
      %v905 = vsel %vm895, %v904, %v903
      %vm906 = vcmp.lt.s32.totalorder %v790, 0
      %v907 = vsub.s32 0, %v790
      %v908 = vsel %vm906, %v907, %v790
      %v909 = vmul.u32.u64.compose %v908, 3817748708
      %v910 = vextract.low.u32 %v909
      %v911 = vextract.high.u32 %v909
      %v912 = vshrl.u32 %v911, 4
      %v913 = vmul.u32 %v912, 18
      %v914 = vsub.s32 %v908, %v913
      %v915 = vsub.s32 0, %v914
      %v916 = vsel %vm906, %v915, %v914
      %vm917 = vcmp.lt.s32.totalorder %v791, 0
      %v918 = vsub.s32 0, %v791
      %v919 = vsel %vm917, %v918, %v791
      %v920 = vmul.u32.u64.compose %v919, 3817748708
      %v921 = vextract.low.u32 %v920
      %v922 = vextract.high.u32 %v920
      %v923 = vshrl.u32 %v922, 4
      %v924 = vmul.u32 %v923, 18
      %v925 = vsub.s32 %v919, %v924
      %v926 = vsub.s32 0, %v925
      %v927 = vsel %vm917, %v926, %v925
      %vm928 = vcmp.lt.s32.totalorder %v792, 0
      %v929 = vsub.s32 0, %v792
      %v930 = vsel %vm928, %v929, %v792
      %v931 = vmul.u32.u64.compose %v930, 3817748708
      %v932 = vextract.low.u32 %v931
      %v933 = vextract.high.u32 %v931
      %v934 = vshrl.u32 %v933, 4
      %v935 = vmul.u32 %v934, 18
      %v936 = vsub.s32 %v930, %v935
      %v937 = vsub.s32 0, %v936
      %v938 = vsel %vm928, %v937, %v936
      %vm939 = vcmp.lt.s32.totalorder %v793, 0
      %v940 = vsub.s32 0, %v793
      %v941 = vsel %vm939, %v940, %v793
      %v942 = vmul.u32.u64.compose %v941, 3817748708
      %v943 = vextract.low.u32 %v942
      %v944 = vextract.high.u32 %v942
      %v945 = vshrl.u32 %v944, 4
      %v946 = vmul.u32 %v945, 18
      %v947 = vsub.s32 %v941, %v946
      %v948 = vsub.s32 0, %v947
      %v949 = vsel %vm939, %v948, %v947
      %vm950 = vcmp.lt.s32.totalorder %v794, 0
      %v951 = vsub.s32 0, %v794
      %v952 = vsel %vm950, %v951, %v794
      %v953 = vmul.u32.u64.compose %v952, 3817748708
      %v954 = vextract.low.u32 %v953
      %v955 = vextract.high.u32 %v953
      %v956 = vshrl.u32 %v955, 4
      %v957 = vmul.u32 %v956, 18
      %v958 = vsub.s32 %v952, %v957
      %v959 = vsub.s32 0, %v958
      %v960 = vsel %vm950, %v959, %v958
      %vm961 = vcmp.lt.s32.totalorder %v795, 0
      %v962 = vsub.s32 0, %v795
      %v963 = vsel %vm961, %v962, %v795
      %v964 = vmul.u32.u64.compose %v963, 3817748708
      %v965 = vextract.low.u32 %v964
      %v966 = vextract.high.u32 %v964
      %v967 = vshrl.u32 %v966, 4
      %v968 = vmul.u32 %v967, 18
      %v969 = vsub.s32 %v963, %v968
      %v970 = vsub.s32 0, %v969
      %v971 = vsel %vm961, %v970, %v969
      %vm972 = vcmp.lt.s32.totalorder %v796, 0
      %v973 = vsub.s32 0, %v796
      %v974 = vsel %vm972, %v973, %v796
      %v975 = vmul.u32.u64.compose %v974, 3817748708
      %v976 = vextract.low.u32 %v975
      %v977 = vextract.high.u32 %v975
      %v978 = vshrl.u32 %v977, 4
      %v979 = vmul.u32 %v978, 18
      %v980 = vsub.s32 %v974, %v979
      %v981 = vsub.s32 0, %v980
      %v982 = vsel %vm972, %v981, %v980
      %vm983 = vcmp.lt.s32.totalorder %v797, 0
      %v984 = vsub.s32 0, %v797
      %v985 = vsel %vm983, %v984, %v797
      %v986 = vmul.u32.u64.compose %v985, 3817748708
      %v987 = vextract.low.u32 %v986
      %v988 = vextract.high.u32 %v986
      %v989 = vshrl.u32 %v988, 4
      %v990 = vmul.u32 %v989, 18
      %v991 = vsub.s32 %v985, %v990
      %v992 = vsub.s32 0, %v991
      %v993 = vsel %vm983, %v992, %v991
      %vm994 = vcmp.lt.s32.totalorder %v798, 0
      %v995 = vsub.s32 0, %v798
      %v996 = vsel %vm994, %v995, %v798
      %v997 = vmul.u32.u64.compose %v996, 3817748708
      %v998 = vextract.low.u32 %v997
      %v999 = vextract.high.u32 %v997
      %v1000 = vshrl.u32 %v999, 4
      %v1001 = vmul.u32 %v1000, 18
      %v1002 = vsub.s32 %v996, %v1001
      %v1003 = vsub.s32 0, %v1002
      %v1004 = vsel %vm994, %v1003, %v1002
      %vm1005 = vcmp.lt.s32.totalorder %v799, 0
      %v1006 = vsub.s32 0, %v799
      %v1007 = vsel %vm1005, %v1006, %v799
      %v1008 = vmul.u32.u64.compose %v1007, 3817748708
      %v1009 = vextract.low.u32 %v1008
      %v1010 = vextract.high.u32 %v1008
      %v1011 = vshrl.u32 %v1010, 4
      %v1012 = vmul.u32 %v1011, 18
      %v1013 = vsub.s32 %v1007, %v1012
      %v1014 = vsub.s32 0, %v1013
      %v1015 = vsel %vm1005, %v1014, %v1013
      %vm1016 = vcmp.lt.s32.totalorder %v800, 0
      %v1017 = vsub.s32 0, %v800
      %v1018 = vsel %vm1016, %v1017, %v800
      %v1019 = vmul.u32.u64.compose %v1018, 3817748708
      %v1020 = vextract.low.u32 %v1019
      %v1021 = vextract.high.u32 %v1019
      %v1022 = vshrl.u32 %v1021, 4
      %v1023 = vmul.u32 %v1022, 18
      %v1024 = vsub.s32 %v1018, %v1023
      %v1025 = vsub.s32 0, %v1024
      %v1026 = vsel %vm1016, %v1025, %v1024
      %vm1027 = vcmp.lt.s32.totalorder %v801, 0
      %v1028 = vsub.s32 0, %v801
      %v1029 = vsel %vm1027, %v1028, %v801
      %v1030 = vmul.u32.u64.compose %v1029, 3817748708
      %v1031 = vextract.low.u32 %v1030
      %v1032 = vextract.high.u32 %v1030
      %v1033 = vshrl.u32 %v1032, 4
      %v1034 = vmul.u32 %v1033, 18
      %v1035 = vsub.s32 %v1029, %v1034
      %v1036 = vsub.s32 0, %v1035
      %v1037 = vsel %vm1027, %v1036, %v1035
      %vm1038 = vcmp.lt.s32.totalorder %v802, 0
      %v1039 = vsub.s32 0, %v802
      %v1040 = vsel %vm1038, %v1039, %v802
      %v1041 = vmul.u32.u64.compose %v1040, 3817748708
      %v1042 = vextract.low.u32 %v1041
      %v1043 = vextract.high.u32 %v1041
      %v1044 = vshrl.u32 %v1043, 4
      %v1045 = vmul.u32 %v1044, 18
      %v1046 = vsub.s32 %v1040, %v1045
      %v1047 = vsub.s32 0, %v1046
      %v1048 = vsel %vm1038, %v1047, %v1046
      %vm1049 = vcmp.lt.s32.totalorder %v803, 0
      %v1050 = vsub.s32 0, %v803
      %v1051 = vsel %vm1049, %v1050, %v803
      %v1052 = vmul.u32.u64.compose %v1051, 3817748708
      %v1053 = vextract.low.u32 %v1052
      %v1054 = vextract.high.u32 %v1052
      %v1055 = vshrl.u32 %v1054, 4
      %v1056 = vmul.u32 %v1055, 18
      %v1057 = vsub.s32 %v1051, %v1056
      %v1058 = vsub.s32 0, %v1057
      %v1059 = vsel %vm1049, %v1058, %v1057
      %vm1060 = vcmp.lt.s32.totalorder %v804, 0
      %v1061 = vsub.s32 0, %v804
      %v1062 = vsel %vm1060, %v1061, %v804
      %v1063 = vmul.u32.u64.compose %v1062, 3817748708
      %v1064 = vextract.low.u32 %v1063
      %v1065 = vextract.high.u32 %v1063
      %v1066 = vshrl.u32 %v1065, 4
      %v1067 = vmul.u32 %v1066, 18
      %v1068 = vsub.s32 %v1062, %v1067
      %v1069 = vsub.s32 0, %v1068
      %v1070 = vsel %vm1060, %v1069, %v1068
      %vm1071 = vcmp.lt.s32.totalorder %v805, 0
      %v1072 = vsub.s32 0, %v805
      %v1073 = vsel %vm1071, %v1072, %v805
      %v1074 = vmul.u32.u64.compose %v1073, 3817748708
      %v1075 = vextract.low.u32 %v1074
      %v1076 = vextract.high.u32 %v1074
      %v1077 = vshrl.u32 %v1076, 4
      %v1078 = vmul.u32 %v1077, 18
      %v1079 = vsub.s32 %v1073, %v1078
      %v1080 = vsub.s32 0, %v1079
      %v1081 = vsel %vm1071, %v1080, %v1079
      %vm1082 = vcmp.lt.s32.totalorder %v806, 0
      %v1083 = vsub.s32 0, %v806
      %v1084 = vsel %vm1082, %v1083, %v806
      %v1085 = vmul.u32.u64.compose %v1084, 3817748708
      %v1086 = vextract.low.u32 %v1085
      %v1087 = vextract.high.u32 %v1085
      %v1088 = vshrl.u32 %v1087, 4
      %v1089 = vmul.u32 %v1088, 18
      %v1090 = vsub.s32 %v1084, %v1089
      %v1091 = vsub.s32 0, %v1090
      %v1092 = vsel %vm1082, %v1091, %v1090
      %vm1093 = vcmp.lt.s32.totalorder %v807, 0
      %v1094 = vsub.s32 0, %v807
      %v1095 = vsel %vm1093, %v1094, %v807
      %v1096 = vmul.u32.u64.compose %v1095, 3817748708
      %v1097 = vextract.low.u32 %v1096
      %v1098 = vextract.high.u32 %v1096
      %v1099 = vshrl.u32 %v1098, 4
      %v1100 = vmul.u32 %v1099, 18
      %v1101 = vsub.s32 %v1095, %v1100
      %v1102 = vsub.s32 0, %v1101
      %v1103 = vsel %vm1093, %v1102, %v1101
      %vm1104 = vcmp.lt.s32.totalorder %v808, 0
      %v1105 = vsub.s32 0, %v808
      %v1106 = vsel %vm1104, %v1105, %v808
      %v1107 = vmul.u32.u64.compose %v1106, 3817748708
      %v1108 = vextract.low.u32 %v1107
      %v1109 = vextract.high.u32 %v1107
      %v1110 = vshrl.u32 %v1109, 4
      %v1111 = vmul.u32 %v1110, 18
      %v1112 = vsub.s32 %v1106, %v1111
      %v1113 = vsub.s32 0, %v1112
      %v1114 = vsel %vm1104, %v1113, %v1112
      %vm1115 = vcmp.lt.s32.totalorder %v809, 0
      %v1116 = vsub.s32 0, %v809
      %v1117 = vsel %vm1115, %v1116, %v809
      %v1118 = vmul.u32.u64.compose %v1117, 3817748708
      %v1119 = vextract.low.u32 %v1118
      %v1120 = vextract.high.u32 %v1118
      %v1121 = vshrl.u32 %v1120, 4
      %v1122 = vmul.u32 %v1121, 18
      %v1123 = vsub.s32 %v1117, %v1122
      %v1124 = vsub.s32 0, %v1123
      %v1125 = vsel %vm1115, %v1124, %v1123
      %vm1126 = vcmp.lt.s32.totalorder %v810, 0
      %v1127 = vsub.s32 0, %v810
      %v1128 = vsel %vm1126, %v1127, %v810
      %v1129 = vmul.u32.u64.compose %v1128, 3817748708
      %v1130 = vextract.low.u32 %v1129
      %v1131 = vextract.high.u32 %v1129
      %v1132 = vshrl.u32 %v1131, 4
      %v1133 = vmul.u32 %v1132, 18
      %v1134 = vsub.s32 %v1128, %v1133
      %v1135 = vsub.s32 0, %v1134
      %v1136 = vsel %vm1126, %v1135, %v1134
      %vm1137 = vcmp.lt.s32.totalorder %v811, 0
      %v1138 = vsub.s32 0, %v811
      %v1139 = vsel %vm1137, %v1138, %v811
      %v1140 = vmul.u32.u64.compose %v1139, 3817748708
      %v1141 = vextract.low.u32 %v1140
      %v1142 = vextract.high.u32 %v1140
      %v1143 = vshrl.u32 %v1142, 4
      %v1144 = vmul.u32 %v1143, 18
      %v1145 = vsub.s32 %v1139, %v1144
      %v1146 = vsub.s32 0, %v1145
      %v1147 = vsel %vm1137, %v1146, %v1145
      %vm1148 = vcmp.lt.s32.totalorder %v812, 0
      %v1149 = vsub.s32 0, %v812
      %v1150 = vsel %vm1148, %v1149, %v812
      %v1151 = vmul.u32.u64.compose %v1150, 3817748708
      %v1152 = vextract.low.u32 %v1151
      %v1153 = vextract.high.u32 %v1151
      %v1154 = vshrl.u32 %v1153, 4
      %v1155 = vmul.u32 %v1154, 18
      %v1156 = vsub.s32 %v1150, %v1155
      %v1157 = vsub.s32 0, %v1156
      %v1158 = vsel %vm1148, %v1157, %v1156
      %vm1159 = vcmp.lt.s32.totalorder %v813, 0
      %v1160 = vsub.s32 0, %v813
      %v1161 = vsel %vm1159, %v1160, %v813
      %v1162 = vmul.u32.u64.compose %v1161, 3817748708
      %v1163 = vextract.low.u32 %v1162
      %v1164 = vextract.high.u32 %v1162
      %v1165 = vshrl.u32 %v1164, 4
      %v1166 = vmul.u32 %v1165, 18
      %v1167 = vsub.s32 %v1161, %v1166
      %v1168 = vsub.s32 0, %v1167
      %v1169 = vsel %vm1159, %v1168, %v1167
      %vm1170 = vcmp.lt.s32.totalorder %v814, 0
      %v1171 = vsub.s32 0, %v814
      %v1172 = vsel %vm1170, %v1171, %v814
      %v1173 = vmul.u32.u64.compose %v1172, 3817748708
      %v1174 = vextract.low.u32 %v1173
      %v1175 = vextract.high.u32 %v1173
      %v1176 = vshrl.u32 %v1175, 4
      %v1177 = vmul.u32 %v1176, 18
      %v1178 = vsub.s32 %v1172, %v1177
      %v1179 = vsub.s32 0, %v1178
      %v1180 = vsel %vm1170, %v1179, %v1178
      %vm1181 = vcmp.lt.s32.totalorder %v815, 0
      %v1182 = vsub.s32 0, %v815
      %v1183 = vsel %vm1181, %v1182, %v815
      %v1184 = vmul.u32.u64.compose %v1183, 3817748708
      %v1185 = vextract.low.u32 %v1184
      %v1186 = vextract.high.u32 %v1184
      %v1187 = vshrl.u32 %v1186, 4
      %v1188 = vmul.u32 %v1187, 18
      %v1189 = vsub.s32 %v1183, %v1188
      %v1190 = vsub.s32 0, %v1189
      %v1191 = vsel %vm1181, %v1190, %v1189
      %vm1192 = vcmp.lt.s32.totalorder %v816, 0
      %v1193 = vsub.s32 0, %v816
      %v1194 = vsel %vm1192, %v1193, %v816
      %v1195 = vmul.u32.u64.compose %v1194, 3817748708
      %v1196 = vextract.low.u32 %v1195
      %v1197 = vextract.high.u32 %v1195
      %v1198 = vshrl.u32 %v1197, 4
      %v1199 = vmul.u32 %v1198, 18
      %v1200 = vsub.s32 %v1194, %v1199
      %v1201 = vsub.s32 0, %v1200
      %v1202 = vsel %vm1192, %v1201, %v1200
      %vm1203 = vcmp.lt.s32.totalorder %v817, 0
      %v1204 = vsub.s32 0, %v817
      %v1205 = vsel %vm1203, %v1204, %v817
      %v1206 = vmul.u32.u64.compose %v1205, 3817748708
      %v1207 = vextract.low.u32 %v1206
      %v1208 = vextract.high.u32 %v1206
      %v1209 = vshrl.u32 %v1208, 4
      %v1210 = vmul.u32 %v1209, 18
      %v1211 = vsub.s32 %v1205, %v1210
      %v1212 = vsub.s32 0, %v1211
      %v1213 = vsel %vm1203, %v1212, %v1211
      %vm1214 = vcmp.ne.s32.totalorder %v828, 0
      %vm1215 = vcmp.ne.s32.totalorder %v839, 0
      %vm1216 = vcmp.ne.s32.totalorder %v850, 0
      %vm1217 = vcmp.ne.s32.totalorder %v861, 0
      %vm1218 = vcmp.ne.s32.totalorder %v872, 0
      %vm1219 = vcmp.ne.s32.totalorder %v883, 0
      %vm1220 = vcmp.ne.s32.totalorder %v894, 0
      %vm1221 = vcmp.ne.s32.totalorder %v905, 0
      %vm1222 = vcmp.ne.s32.totalorder %v916, 0
      %vm1223 = vcmp.ne.s32.totalorder %v927, 0
      %vm1224 = vcmp.ne.s32.totalorder %v938, 0
      %vm1225 = vcmp.ne.s32.totalorder %v949, 0
      %vm1226 = vcmp.ne.s32.totalorder %v960, 0
      %vm1227 = vcmp.ne.s32.totalorder %v971, 0
      %vm1228 = vcmp.ne.s32.totalorder %v982, 0
      %vm1229 = vcmp.ne.s32.totalorder %v993, 0
      %vm1230 = vcmp.ne.s32.totalorder %v1004, 0
      %vm1231 = vcmp.ne.s32.totalorder %v1015, 0
      %vm1232 = vcmp.ne.s32.totalorder %v1026, 0
      %vm1233 = vcmp.ne.s32.totalorder %v1037, 0
      %vm1234 = vcmp.ne.s32.totalorder %v1048, 0
      %vm1235 = vcmp.ne.s32.totalorder %v1059, 0
      %vm1236 = vcmp.ne.s32.totalorder %v1070, 0
      %vm1237 = vcmp.ne.s32.totalorder %v1081, 0
      %vm1238 = vcmp.ne.s32.totalorder %v1092, 0
      %vm1239 = vcmp.ne.s32.totalorder %v1103, 0
      %vm1240 = vcmp.ne.s32.totalorder %v1114, 0
      %vm1241 = vcmp.ne.s32.totalorder %v1125, 0
      %vm1242 = vcmp.ne.s32.totalorder %v1136, 0
      %vm1243 = vcmp.ne.s32.totalorder %v1147, 0
      %vm1244 = vcmp.ne.s32.totalorder %v1158, 0
      %vm1245 = vcmp.ne.s32.totalorder %v1169, 0
      %vm1246 = vcmp.ne.s32.totalorder %v1180, 0
      %vm1247 = vcmp.ne.s32.totalorder %v1191, 0
      %vm1248 = vcmp.ne.s32.totalorder %v1202, 0
      %vm1249 = vcmp.ne.s32.totalorder %v1213, 0
      %vm1250 = vcmp.lt.s32.totalorder %v828, 0
      %vm1251 = vcmp.lt.s32.totalorder %v839, 0
      %vm1252 = vcmp.lt.s32.totalorder %v850, 0
      %vm1253 = vcmp.lt.s32.totalorder %v861, 0
      %vm1254 = vcmp.lt.s32.totalorder %v872, 0
      %vm1255 = vcmp.lt.s32.totalorder %v883, 0
      %vm1256 = vcmp.lt.s32.totalorder %v894, 0
      %vm1257 = vcmp.lt.s32.totalorder %v905, 0
      %vm1258 = vcmp.lt.s32.totalorder %v916, 0
      %vm1259 = vcmp.lt.s32.totalorder %v927, 0
      %vm1260 = vcmp.lt.s32.totalorder %v938, 0
      %vm1261 = vcmp.lt.s32.totalorder %v949, 0
      %vm1262 = vcmp.lt.s32.totalorder %v960, 0
      %vm1263 = vcmp.lt.s32.totalorder %v971, 0
      %vm1264 = vcmp.lt.s32.totalorder %v982, 0
      %vm1265 = vcmp.lt.s32.totalorder %v993, 0
      %vm1266 = vcmp.lt.s32.totalorder %v1004, 0
      %vm1267 = vcmp.lt.s32.totalorder %v1015, 0
      %vm1268 = vcmp.lt.s32.totalorder %v1026, 0
      %vm1269 = vcmp.lt.s32.totalorder %v1037, 0
      %vm1270 = vcmp.lt.s32.totalorder %v1048, 0
      %vm1271 = vcmp.lt.s32.totalorder %v1059, 0
      %vm1272 = vcmp.lt.s32.totalorder %v1070, 0
      %vm1273 = vcmp.lt.s32.totalorder %v1081, 0
      %vm1274 = vcmp.lt.s32.totalorder %v1092, 0
      %vm1275 = vcmp.lt.s32.totalorder %v1103, 0
      %vm1276 = vcmp.lt.s32.totalorder %v1114, 0
      %vm1277 = vcmp.lt.s32.totalorder %v1125, 0
      %vm1278 = vcmp.lt.s32.totalorder %v1136, 0
      %vm1279 = vcmp.lt.s32.totalorder %v1147, 0
      %vm1280 = vcmp.lt.s32.totalorder %v1158, 0
      %vm1281 = vcmp.lt.s32.totalorder %v1169, 0
      %vm1282 = vcmp.lt.s32.totalorder %v1180, 0
      %vm1283 = vcmp.lt.s32.totalorder %v1191, 0
      %vm1284 = vcmp.lt.s32.totalorder %v1202, 0
      %vm1285 = vcmp.lt.s32.totalorder %v1213, 0
      %vm1286 = vmand %vm1250, %vm1214
      %vm1287 = vmand %vm1251, %vm1215
      %vm1288 = vmand %vm1252, %vm1216
      %vm1289 = vmand %vm1253, %vm1217
      %vm1290 = vmand %vm1254, %vm1218
      %vm1291 = vmand %vm1255, %vm1219
      %vm1292 = vmand %vm1256, %vm1220
      %vm1293 = vmand %vm1257, %vm1221
      %vm1294 = vmand %vm1258, %vm1222
      %vm1295 = vmand %vm1259, %vm1223
      %vm1296 = vmand %vm1260, %vm1224
      %vm1297 = vmand %vm1261, %vm1225
      %vm1298 = vmand %vm1262, %vm1226
      %vm1299 = vmand %vm1263, %vm1227
      %vm1300 = vmand %vm1264, %vm1228
      %vm1301 = vmand %vm1265, %vm1229
      %vm1302 = vmand %vm1266, %vm1230
      %vm1303 = vmand %vm1267, %vm1231
      %vm1304 = vmand %vm1268, %vm1232
      %vm1305 = vmand %vm1269, %vm1233
      %vm1306 = vmand %vm1270, %vm1234
      %vm1307 = vmand %vm1271, %vm1235
      %vm1308 = vmand %vm1272, %vm1236
      %vm1309 = vmand %vm1273, %vm1237
      %vm1310 = vmand %vm1274, %vm1238
      %vm1311 = vmand %vm1275, %vm1239
      %vm1312 = vmand %vm1276, %vm1240
      %vm1313 = vmand %vm1277, %vm1241
      %vm1314 = vmand %vm1278, %vm1242
      %vm1315 = vmand %vm1279, %vm1243
      %vm1316 = vmand %vm1280, %vm1244
      %vm1317 = vmand %vm1281, %vm1245
      %vm1318 = vmand %vm1282, %vm1246
      %vm1319 = vmand %vm1283, %vm1247
      %vm1320 = vmand %vm1284, %vm1248
      %vm1321 = vmand %vm1285, %vm1249
      %v1322 = vadd.s32 %v828, 18
      %v1323 = vadd.s32 %v839, 18
      %v1324 = vadd.s32 %v850, 18
      %v1325 = vadd.s32 %v861, 18
      %v1326 = vadd.s32 %v872, 18
      %v1327 = vadd.s32 %v883, 18
      %v1328 = vadd.s32 %v894, 18
      %v1329 = vadd.s32 %v905, 18
      %v1330 = vadd.s32 %v916, 18
      %v1331 = vadd.s32 %v927, 18
      %v1332 = vadd.s32 %v938, 18
      %v1333 = vadd.s32 %v949, 18
      %v1334 = vadd.s32 %v960, 18
      %v1335 = vadd.s32 %v971, 18
      %v1336 = vadd.s32 %v982, 18
      %v1337 = vadd.s32 %v993, 18
      %v1338 = vadd.s32 %v1004, 18
      %v1339 = vadd.s32 %v1015, 18
      %v1340 = vadd.s32 %v1026, 18
      %v1341 = vadd.s32 %v1037, 18
      %v1342 = vadd.s32 %v1048, 18
      %v1343 = vadd.s32 %v1059, 18
      %v1344 = vadd.s32 %v1070, 18
      %v1345 = vadd.s32 %v1081, 18
      %v1346 = vadd.s32 %v1092, 18
      %v1347 = vadd.s32 %v1103, 18
      %v1348 = vadd.s32 %v1114, 18
      %v1349 = vadd.s32 %v1125, 18
      %v1350 = vadd.s32 %v1136, 18
      %v1351 = vadd.s32 %v1147, 18
      %v1352 = vadd.s32 %v1158, 18
      %v1353 = vadd.s32 %v1169, 18
      %v1354 = vadd.s32 %v1180, 18
      %v1355 = vadd.s32 %v1191, 18
      %v1356 = vadd.s32 %v1202, 18
      %v1357 = vadd.s32 %v1213, 18
      %v1358 = vsel %vm1286, %v1322, %v828
      %v1359 = vsel %vm1287, %v1323, %v839
      %v1360 = vsel %vm1288, %v1324, %v850
      %v1361 = vsel %vm1289, %v1325, %v861
      %v1362 = vsel %vm1290, %v1326, %v872
      %v1363 = vsel %vm1291, %v1327, %v883
      %v1364 = vsel %vm1292, %v1328, %v894
      %v1365 = vsel %vm1293, %v1329, %v905
      %v1366 = vsel %vm1294, %v1330, %v916
      %v1367 = vsel %vm1295, %v1331, %v927
      %v1368 = vsel %vm1296, %v1332, %v938
      %v1369 = vsel %vm1297, %v1333, %v949
      %v1370 = vsel %vm1298, %v1334, %v960
      %v1371 = vsel %vm1299, %v1335, %v971
      %v1372 = vsel %vm1300, %v1336, %v982
      %v1373 = vsel %vm1301, %v1337, %v993
      %v1374 = vsel %vm1302, %v1338, %v1004
      %v1375 = vsel %vm1303, %v1339, %v1015
      %v1376 = vsel %vm1304, %v1340, %v1026
      %v1377 = vsel %vm1305, %v1341, %v1037
      %v1378 = vsel %vm1306, %v1342, %v1048
      %v1379 = vsel %vm1307, %v1343, %v1059
      %v1380 = vsel %vm1308, %v1344, %v1070
      %v1381 = vsel %vm1309, %v1345, %v1081
      %v1382 = vsel %vm1310, %v1346, %v1092
      %v1383 = vsel %vm1311, %v1347, %v1103
      %v1384 = vsel %vm1312, %v1348, %v1114
      %v1385 = vsel %vm1313, %v1349, %v1125
      %v1386 = vsel %vm1314, %v1350, %v1136
      %v1387 = vsel %vm1315, %v1351, %v1147
      %v1388 = vsel %vm1316, %v1352, %v1158
      %v1389 = vsel %vm1317, %v1353, %v1169
      %v1390 = vsel %vm1318, %v1354, %v1180
      %v1391 = vsel %vm1319, %v1355, %v1191
      %v1392 = vsel %vm1320, %v1356, %v1202
      %v1393 = vsel %vm1321, %v1357, %v1213
      %vm1394 = vcmp.lt.s32.totalorder %v1358, 16
      %vm1395 = vcmp.lt.s32.totalorder %v1359, 16
      %vm1396 = vcmp.lt.s32.totalorder %v1360, 16
      %vm1397 = vcmp.lt.s32.totalorder %v1361, 16
      %vm1398 = vcmp.lt.s32.totalorder %v1362, 16
      %vm1399 = vcmp.lt.s32.totalorder %v1363, 16
      %vm1400 = vcmp.lt.s32.totalorder %v1364, 16
      %vm1401 = vcmp.lt.s32.totalorder %v1365, 16
      %vm1402 = vcmp.lt.s32.totalorder %v1366, 16
      %vm1403 = vcmp.lt.s32.totalorder %v1367, 16
      %vm1404 = vcmp.lt.s32.totalorder %v1368, 16
      %vm1405 = vcmp.lt.s32.totalorder %v1369, 16
      %vm1406 = vcmp.lt.s32.totalorder %v1370, 16
      %vm1407 = vcmp.lt.s32.totalorder %v1371, 16
      %vm1408 = vcmp.lt.s32.totalorder %v1372, 16
      %vm1409 = vcmp.lt.s32.totalorder %v1373, 16
      %vm1410 = vcmp.lt.s32.totalorder %v1374, 16
      %vm1411 = vcmp.lt.s32.totalorder %v1375, 16
      %vm1412 = vcmp.lt.s32.totalorder %v1376, 16
      %vm1413 = vcmp.lt.s32.totalorder %v1377, 16
      %vm1414 = vcmp.lt.s32.totalorder %v1378, 16
      %vm1415 = vcmp.lt.s32.totalorder %v1379, 16
      %vm1416 = vcmp.lt.s32.totalorder %v1380, 16
      %vm1417 = vcmp.lt.s32.totalorder %v1381, 16
      %vm1418 = vcmp.lt.s32.totalorder %v1382, 16
      %vm1419 = vcmp.lt.s32.totalorder %v1383, 16
      %vm1420 = vcmp.lt.s32.totalorder %v1384, 16
      %vm1421 = vcmp.lt.s32.totalorder %v1385, 16
      %vm1422 = vcmp.lt.s32.totalorder %v1386, 16
      %vm1423 = vcmp.lt.s32.totalorder %v1387, 16
      %vm1424 = vcmp.lt.s32.totalorder %v1388, 16
      %vm1425 = vcmp.lt.s32.totalorder %v1389, 16
      %vm1426 = vcmp.lt.s32.totalorder %v1390, 16
      %vm1427 = vcmp.lt.s32.totalorder %v1391, 16
      %vm1428 = vcmp.lt.s32.totalorder %v1392, 16
      %vm1429 = vcmp.lt.s32.totalorder %v1393, 16
      %v1430 = vsel %vm1394, %v745, 0.0
      %v1431 = vsel %vm1395, %v746, 0.0
      %v1432 = vsel %vm1396, %v747, 0.0
      %v1433 = vsel %vm1397, %v748, 0.0
      %v1434 = vsel %vm1398, %v749, 0.0
      %v1435 = vsel %vm1399, %v750, 0.0
      %v1436 = vsel %vm1400, %v751, 0.0
      %v1437 = vsel %vm1401, %v752, 0.0
      %v1438 = vsel %vm1402, %v753, 0.0
      %v1439 = vsel %vm1403, %v754, 0.0
      %v1440 = vsel %vm1404, %v755, 0.0
      %v1441 = vsel %vm1405, %v756, 0.0
      %v1442 = vsel %vm1406, %v757, 0.0
      %v1443 = vsel %vm1407, %v758, 0.0
      %v1444 = vsel %vm1408, %v759, 0.0
      %v1445 = vsel %vm1409, %v760, 0.0
      %v1446 = vsel %vm1410, %v761, 0.0
      %v1447 = vsel %vm1411, %v762, 0.0
      %v1448 = vsel %vm1412, %v763, 0.0
      %v1449 = vsel %vm1413, %v764, 0.0
      %v1450 = vsel %vm1414, %v765, 0.0
      %v1451 = vsel %vm1415, %v766, 0.0
      %v1452 = vsel %vm1416, %v767, 0.0
      %v1453 = vsel %vm1417, %v768, 0.0
      %v1454 = vsel %vm1418, %v769, 0.0
      %v1455 = vsel %vm1419, %v770, 0.0
      %v1456 = vsel %vm1420, %v771, 0.0
      %v1457 = vsel %vm1421, %v772, 0.0
      %v1458 = vsel %vm1422, %v773, 0.0
      %v1459 = vsel %vm1423, %v774, 0.0
      %v1460 = vsel %vm1424, %v775, 0.0
      %v1461 = vsel %vm1425, %v776, 0.0
      %v1462 = vsel %vm1426, %v777, 0.0
      %v1463 = vsel %vm1427, %v778, 0.0
      %v1464 = vsel %vm1428, %v779, 0.0
      %v1465 = vsel %vm1429, %v780, 0.0
      %v1466 = vpack.c.bf16 %v1431, %v1430
      %v1467 = vpack.c.bf16 %v1433, %v1432
      %v1468 = vpack.c.bf16 %v1435, %v1434
      %v1469 = vpack.c.bf16 %v1437, %v1436
      %v1470 = vpack.c.bf16 %v1439, %v1438
      %v1471 = vpack.c.bf16 %v1441, %v1440
      %v1472 = vpack.c.bf16 %v1443, %v1442
      %v1473 = vpack.c.bf16 %v1445, %v1444
      %v1474 = vpack.c.bf16 %v1447, %v1446
      %v1475 = vpack.c.bf16 %v1449, %v1448
      %v1476 = vpack.c.bf16 %v1451, %v1450
      %v1477 = vpack.c.bf16 %v1453, %v1452
      %v1478 = vpack.c.bf16 %v1455, %v1454
      %v1479 = vpack.c.bf16 %v1457, %v1456
      %v1480 = vpack.c.bf16 %v1459, %v1458
      %v1481 = vpack.c.bf16 %v1461, %v1460
      %v1482 = vpack.c.bf16 %v1463, %v1462
      %v1483 = vpack.c.bf16 %v1465, %v1464
      %v1502 = vunpack.c.l.b16 %v1466
      %v1503 = vunpack.c.h.b16 %v1466
      %v1504 = vunpack.c.l.b16 %v1467
      %v1505 = vunpack.c.h.b16 %v1467
      %v1506 = vunpack.c.l.b16 %v1468
      %v1507 = vunpack.c.h.b16 %v1468
      %v1508 = vunpack.c.l.b16 %v1469
      %v1509 = vunpack.c.h.b16 %v1469
      %v1510 = vunpack.c.l.b16 %v1470
      %v1511 = vunpack.c.h.b16 %v1470
      %v1512 = vunpack.c.l.b16 %v1471
      %v1513 = vunpack.c.h.b16 %v1471
      %v1514 = vunpack.c.l.b16 %v1472
      %v1515 = vunpack.c.h.b16 %v1472
      %v1516 = vunpack.c.l.b16 %v1473
      %v1517 = vunpack.c.h.b16 %v1473
      %v1518 = vunpack.c.l.b16 %v1474
      %v1519 = vunpack.c.h.b16 %v1474
      %v1520 = vunpack.c.l.b16 %v1475
      %v1521 = vunpack.c.h.b16 %v1475
      %v1522 = vunpack.c.l.b16 %v1476
      %v1523 = vunpack.c.h.b16 %v1476
      %v1524 = vunpack.c.l.b16 %v1477
      %v1525 = vunpack.c.h.b16 %v1477
      %v1526 = vunpack.c.l.b16 %v1478
      %v1527 = vunpack.c.h.b16 %v1478
      %v1528 = vunpack.c.l.b16 %v1479
      %v1529 = vunpack.c.h.b16 %v1479
      %v1530 = vunpack.c.l.b16 %v1480
      %v1531 = vunpack.c.h.b16 %v1480
      %v1532 = vunpack.c.l.b16 %v1481
      %v1533 = vunpack.c.h.b16 %v1481
      %v1534 = vunpack.c.l.b16 %v1482
      %v1535 = vunpack.c.h.b16 %v1482
      %v1536 = vunpack.c.l.b16 %v1483
      %v1537 = vunpack.c.h.b16 %v1483
      %v1538 = vpack.c.b16 %v1502, %v1502
      %v1539 = vpack.c.b16 %v1503, %v1503
      %v1540 = vpack.c.b16 %v1504, %v1504
      %v1541 = vpack.c.b16 %v1505, %v1505
      %v1542 = vpack.c.b16 %v1506, %v1506
      %v1543 = vpack.c.b16 %v1507, %v1507
      %v1544 = vpack.c.b16 %v1508, %v1508
      %v1545 = vpack.c.b16 %v1509, %v1509
      %v1546 = vpack.c.b16 %v1510, %v1510
      %v1547 = vpack.c.b16 %v1511, %v1511
      %v1548 = vpack.c.b16 %v1512, %v1512
      %v1549 = vpack.c.b16 %v1513, %v1513
      %v1550 = vpack.c.b16 %v1514, %v1514
      %v1551 = vpack.c.b16 %v1515, %v1515
      %v1552 = vpack.c.b16 %v1516, %v1516
      %v1553 = vpack.c.b16 %v1517, %v1517
      %v1554 = vpack.c.b16 %v1518, %v1518
      %v1555 = vpack.c.b16 %v1519, %v1519
      %v1556 = vpack.c.b16 %v1520, %v1520
      %v1557 = vpack.c.b16 %v1521, %v1521
      %v1558 = vpack.c.b16 %v1522, %v1522
      %v1559 = vpack.c.b16 %v1523, %v1523
      %v1560 = vpack.c.b16 %v1524, %v1524
      %v1561 = vpack.c.b16 %v1525, %v1525
      %v1562 = vpack.c.b16 %v1526, %v1526
      %v1563 = vpack.c.b16 %v1527, %v1527
      %v1564 = vpack.c.b16 %v1528, %v1528
      %v1565 = vpack.c.b16 %v1529, %v1529
      %v1566 = vpack.c.b16 %v1530, %v1530
      %v1567 = vpack.c.b16 %v1531, %v1531
      %v1568 = vpack.c.b16 %v1532, %v1532
      %v1569 = vpack.c.b16 %v1533, %v1533
      %v1570 = vpack.c.b16 %v1534, %v1534
      %v1571 = vpack.c.b16 %v1535, %v1535
      %v1572 = vpack.c.b16 %v1536, %v1536
      %v1573 = vpack.c.b16 %v1537, %v1537
      %vm1574 = vsmask.f32 1280
      %vm1575 = vsmask.f32 5392
      %vm1576 = vmor %vm1574, %vm1575
      %v1578 = vshrl.u32 %v1538, 16
      %v1580 = vrot.slane %v1578, 6
      %v1581 = vshll.u32 %v1538, 16
      %v1583 = vrot.slane %v1581, 7
      %v1584 = vor.u32 %v1580, %v1583
      %v1585 = vrot.slane %v1584, 4
      %v1587 = vshrl.u32 %v1539, 16
      %v1589 = vrot.slane %v1587, 6
      %v1590 = vshll.u32 %v1539, 16
      %v1592 = vrot.slane %v1590, 7
      %v1593 = vor.u32 %v1589, %v1592
      %v1594 = vsel %vm1576, %v1585, %v1593
      %v1595 = vrot.slane %v1593, 4
      %v1597 = vshrl.u32 %v1540, 16
      %v1599 = vrot.slane %v1597, 6
      %v1600 = vshll.u32 %v1540, 16
      %v1602 = vrot.slane %v1600, 7
      %v1603 = vor.u32 %v1599, %v1602
      %v1604 = vsel %vm1576, %v1595, %v1603
      %v1605 = vrot.slane %v1603, 4
      %v1607 = vshrl.u32 %v1541, 16
      %v1609 = vrot.slane %v1607, 6
      %v1610 = vshll.u32 %v1541, 16
      %v1612 = vrot.slane %v1610, 7
      %v1613 = vor.u32 %v1609, %v1612
      %v1614 = vsel %vm1576, %v1605, %v1613
      %v1615 = vrot.slane %v1613, 4
      %v1617 = vshrl.u32 %v1542, 16
      %v1619 = vrot.slane %v1617, 6
      %v1620 = vshll.u32 %v1542, 16
      %v1622 = vrot.slane %v1620, 7
      %v1623 = vor.u32 %v1619, %v1622
      %v1624 = vsel %vm1576, %v1615, %v1623
      %v1625 = vrot.slane %v1623, 4
      %v1627 = vshrl.u32 %v1543, 16
      %v1629 = vrot.slane %v1627, 6
      %v1630 = vshll.u32 %v1543, 16
      %v1632 = vrot.slane %v1630, 7
      %v1633 = vor.u32 %v1629, %v1632
      %v1634 = vsel %vm1576, %v1625, %v1633
      %v1635 = vrot.slane %v1633, 4
      %v1637 = vshrl.u32 %v1544, 16
      %v1639 = vrot.slane %v1637, 6
      %v1640 = vshll.u32 %v1544, 16
      %v1642 = vrot.slane %v1640, 7
      %v1643 = vor.u32 %v1639, %v1642
      %v1644 = vsel %vm1576, %v1635, %v1643
      %v1645 = vrot.slane %v1643, 4
      %v1647 = vshrl.u32 %v1545, 16
      %v1649 = vrot.slane %v1647, 6
      %v1650 = vshll.u32 %v1545, 16
      %v1652 = vrot.slane %v1650, 7
      %v1653 = vor.u32 %v1649, %v1652
      %v1654 = vsel %vm1576, %v1645, %v1653
      %v1655 = vrot.slane %v1653, 4
      %v1657 = vshrl.u32 %v1546, 16
      %v1659 = vrot.slane %v1657, 6
      %v1660 = vshll.u32 %v1546, 16
      %v1662 = vrot.slane %v1660, 7
      %v1663 = vor.u32 %v1659, %v1662
      %v1664 = vsel %vm1576, %v1655, %v1663
      %v1665 = vrot.slane %v1663, 4
      %v1667 = vshrl.u32 %v1547, 16
      %v1669 = vrot.slane %v1667, 6
      %v1670 = vshll.u32 %v1547, 16
      %v1672 = vrot.slane %v1670, 7
      %v1673 = vor.u32 %v1669, %v1672
      %v1674 = vsel %vm1576, %v1665, %v1673
      %v1675 = vrot.slane %v1673, 4
      %v1677 = vshrl.u32 %v1548, 16
      %v1679 = vrot.slane %v1677, 6
      %v1680 = vshll.u32 %v1548, 16
      %v1682 = vrot.slane %v1680, 7
      %v1683 = vor.u32 %v1679, %v1682
      %v1684 = vsel %vm1576, %v1675, %v1683
      %v1685 = vrot.slane %v1683, 4
      %v1687 = vshrl.u32 %v1549, 16
      %v1689 = vrot.slane %v1687, 6
      %v1690 = vshll.u32 %v1549, 16
      %v1692 = vrot.slane %v1690, 7
      %v1693 = vor.u32 %v1689, %v1692
      %v1694 = vsel %vm1576, %v1685, %v1693
      %v1695 = vrot.slane %v1693, 4
      %v1697 = vshrl.u32 %v1550, 16
      %v1699 = vrot.slane %v1697, 6
      %v1700 = vshll.u32 %v1550, 16
      %v1702 = vrot.slane %v1700, 7
      %v1703 = vor.u32 %v1699, %v1702
      %v1704 = vsel %vm1576, %v1695, %v1703
      %v1705 = vrot.slane %v1703, 4
      %v1707 = vshrl.u32 %v1551, 16
      %v1709 = vrot.slane %v1707, 6
      %v1710 = vshll.u32 %v1551, 16
      %v1712 = vrot.slane %v1710, 7
      %v1713 = vor.u32 %v1709, %v1712
      %v1714 = vsel %vm1576, %v1705, %v1713
      %v1715 = vrot.slane %v1713, 4
      %v1717 = vshrl.u32 %v1552, 16
      %v1719 = vrot.slane %v1717, 6
      %v1720 = vshll.u32 %v1552, 16
      %v1722 = vrot.slane %v1720, 7
      %v1723 = vor.u32 %v1719, %v1722
      %v1724 = vsel %vm1576, %v1715, %v1723
      %v1725 = vrot.slane %v1723, 4
      %v1727 = vshrl.u32 %v1553, 16
      %v1729 = vrot.slane %v1727, 6
      %v1730 = vshll.u32 %v1553, 16
      %v1732 = vrot.slane %v1730, 7
      %v1733 = vor.u32 %v1729, %v1732
      %v1734 = vsel %vm1576, %v1725, %v1733
      %v1735 = vrot.slane %v1733, 4
      %v1737 = vshrl.u32 %v1554, 16
      %v1739 = vrot.slane %v1737, 6
      %v1740 = vshll.u32 %v1554, 16
      %v1742 = vrot.slane %v1740, 7
      %v1743 = vor.u32 %v1739, %v1742
      %v1744 = vsel %vm1576, %v1735, %v1743
      %v1745 = vrot.slane %v1743, 4
      %v1747 = vshrl.u32 %v1555, 16
      %v1749 = vrot.slane %v1747, 6
      %v1750 = vshll.u32 %v1555, 16
      %v1752 = vrot.slane %v1750, 7
      %v1753 = vor.u32 %v1749, %v1752
      %v1754 = vsel %vm1576, %v1745, %v1753
      %v1755 = vrot.slane %v1753, 4
      %v1757 = vshrl.u32 %v1556, 16
      %v1759 = vrot.slane %v1757, 6
      %v1760 = vshll.u32 %v1556, 16
      %v1762 = vrot.slane %v1760, 7
      %v1763 = vor.u32 %v1759, %v1762
      %v1764 = vsel %vm1576, %v1755, %v1763
      %v1765 = vrot.slane %v1763, 4
      %v1767 = vshrl.u32 %v1557, 16
      %v1769 = vrot.slane %v1767, 6
      %v1770 = vshll.u32 %v1557, 16
      %v1772 = vrot.slane %v1770, 7
      %v1773 = vor.u32 %v1769, %v1772
      %v1774 = vsel %vm1576, %v1765, %v1773
      %v1775 = vrot.slane %v1773, 4
      %v1777 = vshrl.u32 %v1558, 16
      %v1779 = vrot.slane %v1777, 6
      %v1780 = vshll.u32 %v1558, 16
      %v1782 = vrot.slane %v1780, 7
      %v1783 = vor.u32 %v1779, %v1782
      %v1784 = vsel %vm1576, %v1775, %v1783
      %v1785 = vrot.slane %v1783, 4
      %v1787 = vshrl.u32 %v1559, 16
      %v1789 = vrot.slane %v1787, 6
      %v1790 = vshll.u32 %v1559, 16
      %v1792 = vrot.slane %v1790, 7
      %v1793 = vor.u32 %v1789, %v1792
      %v1794 = vsel %vm1576, %v1785, %v1793
      %v1795 = vrot.slane %v1793, 4
      %v1797 = vshrl.u32 %v1560, 16
      %v1799 = vrot.slane %v1797, 6
      %v1800 = vshll.u32 %v1560, 16
      %v1802 = vrot.slane %v1800, 7
      %v1803 = vor.u32 %v1799, %v1802
      %v1804 = vsel %vm1576, %v1795, %v1803
      %v1805 = vrot.slane %v1803, 4
      %v1807 = vshrl.u32 %v1561, 16
      %v1809 = vrot.slane %v1807, 6
      %v1810 = vshll.u32 %v1561, 16
      %v1812 = vrot.slane %v1810, 7
      %v1813 = vor.u32 %v1809, %v1812
      %v1814 = vsel %vm1576, %v1805, %v1813
      %v1815 = vrot.slane %v1813, 4
      %v1817 = vshrl.u32 %v1562, 16
      %v1819 = vrot.slane %v1817, 6
      %v1820 = vshll.u32 %v1562, 16
      %v1822 = vrot.slane %v1820, 7
      %v1823 = vor.u32 %v1819, %v1822
      %v1824 = vsel %vm1576, %v1815, %v1823
      %v1825 = vrot.slane %v1823, 4
      %v1827 = vshrl.u32 %v1563, 16
      %v1829 = vrot.slane %v1827, 6
      %v1830 = vshll.u32 %v1563, 16
      %v1832 = vrot.slane %v1830, 7
      %v1833 = vor.u32 %v1829, %v1832
      %v1834 = vsel %vm1576, %v1825, %v1833
      %v1835 = vrot.slane %v1833, 4
      %v1837 = vshrl.u32 %v1564, 16
      %v1839 = vrot.slane %v1837, 6
      %v1840 = vshll.u32 %v1564, 16
      %v1842 = vrot.slane %v1840, 7
      %v1843 = vor.u32 %v1839, %v1842
      %v1844 = vsel %vm1576, %v1835, %v1843
      %v1845 = vrot.slane %v1843, 4
      %v1847 = vshrl.u32 %v1565, 16
      %v1849 = vrot.slane %v1847, 6
      %v1850 = vshll.u32 %v1565, 16
      %v1852 = vrot.slane %v1850, 7
      %v1853 = vor.u32 %v1849, %v1852
      %v1854 = vsel %vm1576, %v1845, %v1853
      %v1855 = vrot.slane %v1853, 4
      %v1857 = vshrl.u32 %v1566, 16
      %v1859 = vrot.slane %v1857, 6
      %v1860 = vshll.u32 %v1566, 16
      %v1862 = vrot.slane %v1860, 7
      %v1863 = vor.u32 %v1859, %v1862
      %v1864 = vsel %vm1576, %v1855, %v1863
      %v1865 = vrot.slane %v1863, 4
      %v1867 = vshrl.u32 %v1567, 16
      %v1869 = vrot.slane %v1867, 6
      %v1870 = vshll.u32 %v1567, 16
      %v1872 = vrot.slane %v1870, 7
      %v1873 = vor.u32 %v1869, %v1872
      %v1874 = vsel %vm1576, %v1865, %v1873
      %v1875 = vrot.slane %v1873, 4
      %v1877 = vshrl.u32 %v1568, 16
      %v1879 = vrot.slane %v1877, 6
      %v1880 = vshll.u32 %v1568, 16
      %v1882 = vrot.slane %v1880, 7
      %v1883 = vor.u32 %v1879, %v1882
      %v1884 = vsel %vm1576, %v1875, %v1883
      %v1885 = vrot.slane %v1883, 4
      %v1887 = vshrl.u32 %v1569, 16
      %v1889 = vrot.slane %v1887, 6
      %v1890 = vshll.u32 %v1569, 16
      %v1892 = vrot.slane %v1890, 7
      %v1893 = vor.u32 %v1889, %v1892
      %v1894 = vsel %vm1576, %v1885, %v1893
      %v1895 = vrot.slane %v1893, 4
      %v1897 = vshrl.u32 %v1570, 16
      %v1899 = vrot.slane %v1897, 6
      %v1900 = vshll.u32 %v1570, 16
      %v1902 = vrot.slane %v1900, 7
      %v1903 = vor.u32 %v1899, %v1902
      %v1904 = vsel %vm1576, %v1895, %v1903
      %v1905 = vrot.slane %v1903, 4
      %v1907 = vshrl.u32 %v1571, 16
      %v1909 = vrot.slane %v1907, 6
      %v1910 = vshll.u32 %v1571, 16
      %v1912 = vrot.slane %v1910, 7
      %v1913 = vor.u32 %v1909, %v1912
      %v1914 = vsel %vm1576, %v1905, %v1913
      %v1915 = vrot.slane %v1913, 4
      %v1917 = vshrl.u32 %v1572, 16
      %v1919 = vrot.slane %v1917, 6
      %v1920 = vshll.u32 %v1572, 16
      %v1922 = vrot.slane %v1920, 7
      %v1923 = vor.u32 %v1919, %v1922
      %v1924 = vsel %vm1576, %v1915, %v1923
      %v1925 = vrot.slane %v1923, 4
      %v1927 = vshrl.u32 %v1573, 16
      %v1929 = vrot.slane %v1927, 6
      %v1930 = vshll.u32 %v1573, 16
      %v1932 = vrot.slane %v1930, 7
      %v1933 = vor.u32 %v1929, %v1932
      %v1934 = vsel %vm1576, %v1925, %v1933
      %v1935 = vrot.slane %v1933, 4
      %vm1973 = vcmask 1043457
      %vm1974 = vsmask.f32 7942
      %vm1975 = vmand %vm1973, %vm1974
      %v1976 = vld [vmem:[#allocation2 + $0x8] sm:$0xe]
      %v1977 = vsel %vm1975, %v1584, %v1976
      %1978 = vst [vmem:[#allocation2 + $0x8] sm:$0xe] %v1977
      %1979 = vst [vmem:[#allocation2 + $0xc] sm:$0xf] %v1594
      %1980 = vst [vmem:[#allocation2 + $0x10] sm:$0xf] %v1604
      %1981 = vst [vmem:[#allocation2 + $0x14] sm:$0xf] %v1614
      %1982 = vst [vmem:[#allocation2 + $0x18] sm:$0xf] %v1624
      %1983 = vst [vmem:[#allocation2 + $0x1c] sm:$0xf] %v1634
      %1984 = vst [vmem:[#allocation2 + $0x20] sm:$0xf] %v1644
      %1985 = vst [vmem:[#allocation2 + $0x24] sm:$0xf] %v1654
      %1986 = vst [vmem:[#allocation2 + $0x28] sm:$0xf] %v1664
      %1987 = vst [vmem:[#allocation2 + $0x2c] sm:$0xf] %v1674
      %1988 = vst [vmem:[#allocation2 + $0x30] sm:$0xf] %v1684
      %1989 = vst [vmem:[#allocation2 + $0x34] sm:$0xf] %v1694
      %1990 = vst [vmem:[#allocation2 + $0x38] sm:$0xf] %v1704
      %1991 = vst [vmem:[#allocation2 + $0x3c] sm:$0xf] %v1714
      %1992 = vst [vmem:[#allocation2 + $0x40] sm:$0xf] %v1724
      %1993 = vst [vmem:[#allocation2 + $0x44] sm:$0xf] %v1734
      %1994 = vst [vmem:[#allocation2 + $0x48] sm:$0xf] %v1744
      %1995 = vst [vmem:[#allocation2 + $0x4c] sm:$0xf] %v1754
      %1996 = vst [vmem:[#allocation2 + $0x50] sm:$0xf] %v1764
      %1997 = vst [vmem:[#allocation2 + $0x54] sm:$0xf] %v1774
      %1998 = vst [vmem:[#allocation2 + $0x58] sm:$0xf] %v1784
      %1999 = vst [vmem:[#allocation2 + $0x5c] sm:$0xf] %v1794
      %2000 = vst [vmem:[#allocation2 + $0x60] sm:$0xf] %v1804
      %2001 = vst [vmem:[#allocation2 + $0x64] sm:$0xf] %v1814
      %2002 = vst [vmem:[#allocation2 + $0x68] sm:$0xf] %v1824
      %2003 = vst [vmem:[#allocation2 + $0x6c] sm:$0xf] %v1834
      %2004 = vst [vmem:[#allocation2 + $0x70] sm:$0xf] %v1844
      %2005 = vst [vmem:[#allocation2 + $0x74] sm:$0xf] %v1854
      %2006 = vst [vmem:[#allocation2 + $0x78] sm:$0xf] %v1864
      %2007 = vst [vmem:[#allocation2 + $0x7c] sm:$0xf] %v1874
      %2008 = vst [vmem:[#allocation2 + $0x80] sm:$0xf] %v1884
      %2009 = vst [vmem:[#allocation2 + $0x84] sm:$0xf] %v1894
      %2010 = vst [vmem:[#allocation2 + $0x88] sm:$0xf] %v1904
      %2011 = vst [vmem:[#allocation2 + $0x8c] sm:$0xf] %v1914
      %2012 = vst [vmem:[#allocation2 + $0x90] sm:$0xf] %v1924
      %2013 = vst [vmem:[#allocation2 + $0x94] sm:$0xf] %v1934
      %vm2014 = vcmask 1041408
      %vm2015 = vmand %vm2014, %vm1574
      %v2016 = vld [vmem:[#allocation2 + $0x98] sm:$0x3]
      %v2017 = vsel %vm2015, %v1935, %v2016
      %2018 = vst [vmem:[#allocation2 + $0x98] sm:$0x3] %v2017
      %v2019 = vld [vmem:[#allocation2] sm:$0xf]
      %v2020 = vld [vmem:[#allocation2 + $0x4] sm:$0xf]
      %v2021 = vld [vmem:[#allocation2 + $0x8] sm:$0xf]
      %v2022 = vld [vmem:[#allocation2 + $0xc] sm:$0xf]
      %v2023 = vld [vmem:[#allocation2 + $0x10] sm:$0xf]
      %v2024 = vld [vmem:[#allocation2 + $0x14] sm:$0xf]
      %v2025 = vld [vmem:[#allocation2 + $0x18] sm:$0xf]
      %v2026 = vld [vmem:[#allocation2 + $0x1c] sm:$0xf]
      %v2027 = vld [vmem:[#allocation2 + $0x20] sm:$0xf]
      %v2028 = vld [vmem:[#allocation2 + $0x24] sm:$0xf]
      %v2029 = vld [vmem:[#allocation2 + $0x28] sm:$0xf]
      %v2030 = vld [vmem:[#allocation2 + $0x2c] sm:$0xf]
      %v2031 = vld [vmem:[#allocation2 + $0x30] sm:$0xf]
      %v2032 = vld [vmem:[#allocation2 + $0x34] sm:$0xf]
      %v2033 = vld [vmem:[#allocation2 + $0x38] sm:$0xf]
      %v2034 = vld [vmem:[#allocation2 + $0x3c] sm:$0xf]
      %v2035 = vld [vmem:[#allocation2 + $0x40] sm:$0xf]
      %v2036 = vld [vmem:[#allocation2 + $0x44] sm:$0xf]
      %v2037 = vld [vmem:[#allocation2 + $0x48] sm:$0xf]
      %v2038 = vld [vmem:[#allocation2 + $0x4c] sm:$0xf]
      %v2039 = vld [vmem:[#allocation2 + $0x50] sm:$0xf]
      %v2040 = vld [vmem:[#allocation2 + $0x54] sm:$0xf]
      %v2041 = vld [vmem:[#allocation2 + $0x58] sm:$0xf]
      %v2042 = vld [vmem:[#allocation2 + $0x5c] sm:$0xf]
      %v2043 = vld [vmem:[#allocation2 + $0x60] sm:$0xf]
      %v2044 = vld [vmem:[#allocation2 + $0x64] sm:$0xf]
      %v2045 = vld [vmem:[#allocation2 + $0x68] sm:$0xf]
      %v2046 = vld [vmem:[#allocation2 + $0x6c] sm:$0xf]
      %v2047 = vld [vmem:[#allocation2 + $0x70] sm:$0xf]
      %v2048 = vld [vmem:[#allocation2 + $0x74] sm:$0xf]
      %v2049 = vld [vmem:[#allocation2 + $0x78] sm:$0xf]
      %v2050 = vld [vmem:[#allocation2 + $0x7c] sm:$0xf]
      %v2051 = vld [vmem:[#allocation2 + $0x80] sm:$0xf]
      %v2052 = vld [vmem:[#allocation2 + $0x84] sm:$0xf]
      %v2053 = vld [vmem:[#allocation2 + $0x88] sm:$0xf]
      %v2054 = vld [vmem:[#allocation2 + $0x8c] sm:$0xf]
      %v2055 = vld [vmem:[#allocation2 + $0x90] sm:$0x1]
      %v2056 = vld [vmem:[#allocation2] sm:$0xe]
      %v2057 = vld [vmem:[#allocation2 + $0x8] sm:$0xe]
      %v2058 = vld [vmem:[#allocation2 + $0x90] sm:$0xf]
      %v2059 = vld [vmem:[#allocation2 + $0x94] sm:$0xf]
      %v2060 = vld [vmem:[#allocation2 + $0x98] sm:$0x1]
      %v2061 = vld [vmem:[#allocation2 + $0x98] sm:$0x3]
      %v2062 = vld [vmem:[#allocation2 + $0x8] sm:$0xc]
      %v2063 = vld [vmem:[#allocation2 + $0x10] sm:$0xc]
      %v2064 = vld [vmem:[#allocation2 + $0x98] sm:$0xf]
      %v2065 = vld [vmem:[#allocation2 + $0x9c] sm:$0xf]
      %v2066 = vld [vmem:[#allocation2 + $0xa0] sm:$0x3]
      %v2067 = vld [vmem:[#allocation2 + $0xa0] sm:$0x7]
      %v2068 = vld [vmem:[#allocation2 + $0x10] sm:$0x8]
      %v2105 = vunpack.c.l.b16 %v2019
      %v2106 = vunpack.c.l.b16 %v2020
      %v2107 = vunpack.c.l.b16 %v2021
      %v2108 = vunpack.c.l.b16 %v2022
      %v2109 = vunpack.c.l.b16 %v2023
      %v2110 = vunpack.c.l.b16 %v2024
      %v2111 = vunpack.c.l.b16 %v2025
      %v2112 = vunpack.c.l.b16 %v2026
      %v2113 = vunpack.c.l.b16 %v2027
      %v2114 = vunpack.c.l.b16 %v2028
      %v2115 = vunpack.c.l.b16 %v2029
      %v2116 = vunpack.c.l.b16 %v2030
      %v2117 = vunpack.c.l.b16 %v2031
      %v2118 = vunpack.c.l.b16 %v2032
      %v2119 = vunpack.c.l.b16 %v2033
      %v2120 = vunpack.c.l.b16 %v2034
      %v2121 = vunpack.c.l.b16 %v2035
      %v2122 = vunpack.c.l.b16 %v2036
      %v2123 = vunpack.c.l.b16 %v2037
      %v2124 = vunpack.c.l.b16 %v2038
      %v2125 = vunpack.c.l.b16 %v2039
      %v2126 = vunpack.c.l.b16 %v2040
      %v2127 = vunpack.c.l.b16 %v2041
      %v2128 = vunpack.c.l.b16 %v2042
      %v2129 = vunpack.c.l.b16 %v2043
      %v2130 = vunpack.c.l.b16 %v2044
      %v2131 = vunpack.c.l.b16 %v2045
      %v2132 = vunpack.c.l.b16 %v2046
      %v2133 = vunpack.c.l.b16 %v2047
      %v2134 = vunpack.c.l.b16 %v2048
      %v2135 = vunpack.c.l.b16 %v2049
      %v2136 = vunpack.c.l.b16 %v2050
      %v2137 = vunpack.c.l.b16 %v2051
      %v2138 = vunpack.c.l.b16 %v2052
      %v2139 = vunpack.c.l.b16 %v2053
      %v2140 = vunpack.c.l.b16 %v2054
      %v2141 = vpack.c.b16 %v2106, %v2105
      %v2142 = vpack.c.b16 %v2108, %v2107
      %v2143 = vpack.c.b16 %v2110, %v2109
      %v2144 = vpack.c.b16 %v2112, %v2111
      %v2145 = vpack.c.b16 %v2114, %v2113
      %v2146 = vpack.c.b16 %v2116, %v2115
      %v2147 = vpack.c.b16 %v2118, %v2117
      %v2148 = vpack.c.b16 %v2120, %v2119
      %v2149 = vpack.c.b16 %v2122, %v2121
      %v2150 = vpack.c.b16 %v2124, %v2123
      %v2151 = vpack.c.b16 %v2126, %v2125
      %v2152 = vpack.c.b16 %v2128, %v2127
      %v2153 = vpack.c.b16 %v2130, %v2129
      %v2154 = vpack.c.b16 %v2132, %v2131
      %v2155 = vpack.c.b16 %v2134, %v2133
      %v2156 = vpack.c.b16 %v2136, %v2135
      %v2157 = vpack.c.b16 %v2138, %v2137
      %v2158 = vpack.c.b16 %v2140, %v2139
      %v2178 = vunpack.c.l.b16 %v2055
      %v2179 = vpack.c.b16 %v2178, %v2178
      %vm2180 = vsmask.f32 7424
      %v2182 = vshrl.u32 %v2141, 16
      %v2184 = vshll.u32 %v2141, 16
      %v2186 = vrot.slane %v2184, 1
      %v2187 = vor.u32 %v2182, %v2186
      %v2189 = vshll.u32 %v2142, 16
      %v2191 = vrot.slane %v2189, 1
      %v2192 = vsel %vm2180, %v2187, %v2191
      %v2193 = vshrl.u32 %v2142, 16
      %v2195 = vor.u32 %v2193, %v2191
      %v2197 = vshll.u32 %v2143, 16
      %v2199 = vrot.slane %v2197, 1
      %v2200 = vsel %vm2180, %v2195, %v2199
      %v2201 = vshrl.u32 %v2143, 16
      %v2203 = vor.u32 %v2201, %v2199
      %v2205 = vshll.u32 %v2144, 16
      %v2207 = vrot.slane %v2205, 1
      %v2208 = vsel %vm2180, %v2203, %v2207
      %v2209 = vshrl.u32 %v2144, 16
      %v2211 = vor.u32 %v2209, %v2207
      %v2213 = vshll.u32 %v2145, 16
      %v2215 = vrot.slane %v2213, 1
      %v2216 = vsel %vm2180, %v2211, %v2215
      %v2217 = vshrl.u32 %v2145, 16
      %v2219 = vor.u32 %v2217, %v2215
      %v2221 = vshll.u32 %v2146, 16
      %v2223 = vrot.slane %v2221, 1
      %v2224 = vsel %vm2180, %v2219, %v2223
      %v2225 = vshrl.u32 %v2146, 16
      %v2227 = vor.u32 %v2225, %v2223
      %v2229 = vshll.u32 %v2147, 16
      %v2231 = vrot.slane %v2229, 1
      %v2232 = vsel %vm2180, %v2227, %v2231
      %v2233 = vshrl.u32 %v2147, 16
      %v2235 = vor.u32 %v2233, %v2231
      %v2237 = vshll.u32 %v2148, 16
      %v2239 = vrot.slane %v2237, 1
      %v2240 = vsel %vm2180, %v2235, %v2239
      %v2241 = vshrl.u32 %v2148, 16
      %v2243 = vor.u32 %v2241, %v2239
      %v2245 = vshll.u32 %v2149, 16
      %v2247 = vrot.slane %v2245, 1
      %v2248 = vsel %vm2180, %v2243, %v2247
      %v2249 = vshrl.u32 %v2149, 16
      %v2251 = vor.u32 %v2249, %v2247
      %v2253 = vshll.u32 %v2150, 16
      %v2255 = vrot.slane %v2253, 1
      %v2256 = vsel %vm2180, %v2251, %v2255
      %v2257 = vshrl.u32 %v2150, 16
      %v2259 = vor.u32 %v2257, %v2255
      %v2261 = vshll.u32 %v2151, 16
      %v2263 = vrot.slane %v2261, 1
      %v2264 = vsel %vm2180, %v2259, %v2263
      %v2265 = vshrl.u32 %v2151, 16
      %v2267 = vor.u32 %v2265, %v2263
      %v2269 = vshll.u32 %v2152, 16
      %v2271 = vrot.slane %v2269, 1
      %v2272 = vsel %vm2180, %v2267, %v2271
      %v2273 = vshrl.u32 %v2152, 16
      %v2275 = vor.u32 %v2273, %v2271
      %v2277 = vshll.u32 %v2153, 16
      %v2279 = vrot.slane %v2277, 1
      %v2280 = vsel %vm2180, %v2275, %v2279
      %v2281 = vshrl.u32 %v2153, 16
      %v2283 = vor.u32 %v2281, %v2279
      %v2285 = vshll.u32 %v2154, 16
      %v2287 = vrot.slane %v2285, 1
      %v2288 = vsel %vm2180, %v2283, %v2287
      %v2289 = vshrl.u32 %v2154, 16
      %v2291 = vor.u32 %v2289, %v2287
      %v2293 = vshll.u32 %v2155, 16
      %v2295 = vrot.slane %v2293, 1
      %v2296 = vsel %vm2180, %v2291, %v2295
      %v2297 = vshrl.u32 %v2155, 16
      %v2299 = vor.u32 %v2297, %v2295
      %v2301 = vshll.u32 %v2156, 16
      %v2303 = vrot.slane %v2301, 1
      %v2304 = vsel %vm2180, %v2299, %v2303
      %v2305 = vshrl.u32 %v2156, 16
      %v2307 = vor.u32 %v2305, %v2303
      %v2309 = vshll.u32 %v2157, 16
      %v2311 = vrot.slane %v2309, 1
      %v2312 = vsel %vm2180, %v2307, %v2311
      %v2313 = vshrl.u32 %v2157, 16
      %v2315 = vor.u32 %v2313, %v2311
      %v2317 = vshll.u32 %v2158, 16
      %v2319 = vrot.slane %v2317, 1
      %v2320 = vsel %vm2180, %v2315, %v2319
      %v2321 = vshrl.u32 %v2158, 16
      %v2323 = vor.u32 %v2321, %v2319
      %v2325 = vshll.u32 %v2179, 16
      %v2327 = vrot.slane %v2325, 1
      %v2328 = vsel %vm2180, %v2323, %v2327
      %v2348 = vunpack.c.l.b16 %v2056
      %v2349 = vpack.c.b16 %v2106, %v2348
      %vm2350 = vcmask 1046528
      %v2351 = vrot.slane %v2349, 1
      %v2352 = vrot.slane %v2142, 1
      %v2353 = vsel %vm2350, %v2351, %v2352
      %v2354 = vrot.slane %v2143, 1
      %v2355 = vsel %vm2350, %v2352, %v2354
      %v2356 = vrot.slane %v2144, 1
      %v2357 = vsel %vm2350, %v2354, %v2356
      %v2358 = vrot.slane %v2145, 1
      %v2359 = vsel %vm2350, %v2356, %v2358
      %v2360 = vrot.slane %v2146, 1
      %v2361 = vsel %vm2350, %v2358, %v2360
      %v2362 = vrot.slane %v2147, 1
      %v2363 = vsel %vm2350, %v2360, %v2362
      %v2364 = vrot.slane %v2148, 1
      %v2365 = vsel %vm2350, %v2362, %v2364
      %v2366 = vrot.slane %v2149, 1
      %v2367 = vsel %vm2350, %v2364, %v2366
      %v2368 = vrot.slane %v2150, 1
      %v2369 = vsel %vm2350, %v2366, %v2368
      %v2370 = vrot.slane %v2151, 1
      %v2371 = vsel %vm2350, %v2368, %v2370
      %v2372 = vrot.slane %v2152, 1
      %v2373 = vsel %vm2350, %v2370, %v2372
      %v2374 = vrot.slane %v2153, 1
      %v2375 = vsel %vm2350, %v2372, %v2374
      %v2376 = vrot.slane %v2154, 1
      %v2377 = vsel %vm2350, %v2374, %v2376
      %v2378 = vrot.slane %v2155, 1
      %v2379 = vsel %vm2350, %v2376, %v2378
      %v2380 = vrot.slane %v2156, 1
      %v2381 = vsel %vm2350, %v2378, %v2380
      %v2382 = vrot.slane %v2157, 1
      %v2383 = vsel %vm2350, %v2380, %v2382
      %v2384 = vrot.slane %v2158, 1
      %v2385 = vsel %vm2350, %v2382, %v2384
      %v2386 = vrot.slane %v2179, 1
      %v2387 = vsel %vm2350, %v2384, %v2386
      %v2410 = vunpack.c.l.b16 %v2057
      %v2411 = vunpack.c.l.b16 %v2058
      %v2412 = vunpack.c.l.b16 %v2059
      %v2413 = vunpack.c.l.b16 %v2060
      %v2414 = vpack.c.b16 %v2108, %v2410
      %v2415 = vpack.c.b16 %v2412, %v2411
      %v2416 = vpack.c.b16 %v2413, %v2413
      %v2417 = vrot.slane %v2414, 1
      %v2418 = vsel %vm2350, %v2417, %v2354
      %v2419 = vrot.slane %v2415, 1
      %v2420 = vsel %vm2350, %v2384, %v2419
      %v2421 = vrot.slane %v2416, 1
      %v2422 = vsel %vm2350, %v2419, %v2421
      %v2427 = vunpack.c.l.b16 %v2061
      %v2428 = vpack.c.b16 %v2427, %v2427
      %vm2429 = vsmask.f32 6400
      %v2431 = vshrl.u32 %v2414, 16
      %v2433 = vrot.slane %v2431, 1
      %v2434 = vshll.u32 %v2414, 16
      %v2436 = vrot.slane %v2434, 2
      %v2437 = vor.u32 %v2433, %v2436
      %v2438 = vrot.slane %v2201, 1
      %v2439 = vrot.slane %v2197, 2
      %v2440 = vor.u32 %v2438, %v2439
      %v2441 = vsel %vm2429, %v2437, %v2440
      %v2442 = vrot.slane %v2209, 1
      %v2443 = vrot.slane %v2205, 2
      %v2444 = vor.u32 %v2442, %v2443
      %v2445 = vsel %vm2429, %v2440, %v2444
      %v2446 = vrot.slane %v2217, 1
      %v2447 = vrot.slane %v2213, 2
      %v2448 = vor.u32 %v2446, %v2447
      %v2449 = vsel %vm2429, %v2444, %v2448
      %v2450 = vrot.slane %v2225, 1
      %v2451 = vrot.slane %v2221, 2
      %v2452 = vor.u32 %v2450, %v2451
      %v2453 = vsel %vm2429, %v2448, %v2452
      %v2454 = vrot.slane %v2233, 1
      %v2455 = vrot.slane %v2229, 2
      %v2456 = vor.u32 %v2454, %v2455
      %v2457 = vsel %vm2429, %v2452, %v2456
      %v2458 = vrot.slane %v2241, 1
      %v2459 = vrot.slane %v2237, 2
      %v2460 = vor.u32 %v2458, %v2459
      %v2461 = vsel %vm2429, %v2456, %v2460
      %v2462 = vrot.slane %v2249, 1
      %v2463 = vrot.slane %v2245, 2
      %v2464 = vor.u32 %v2462, %v2463
      %v2465 = vsel %vm2429, %v2460, %v2464
      %v2466 = vrot.slane %v2257, 1
      %v2467 = vrot.slane %v2253, 2
      %v2468 = vor.u32 %v2466, %v2467
      %v2469 = vsel %vm2429, %v2464, %v2468
      %v2470 = vrot.slane %v2265, 1
      %v2471 = vrot.slane %v2261, 2
      %v2472 = vor.u32 %v2470, %v2471
      %v2473 = vsel %vm2429, %v2468, %v2472
      %v2474 = vrot.slane %v2273, 1
      %v2475 = vrot.slane %v2269, 2
      %v2476 = vor.u32 %v2474, %v2475
      %v2477 = vsel %vm2429, %v2472, %v2476
      %v2478 = vrot.slane %v2281, 1
      %v2479 = vrot.slane %v2277, 2
      %v2480 = vor.u32 %v2478, %v2479
      %v2481 = vsel %vm2429, %v2476, %v2480
      %v2482 = vrot.slane %v2289, 1
      %v2483 = vrot.slane %v2285, 2
      %v2484 = vor.u32 %v2482, %v2483
      %v2485 = vsel %vm2429, %v2480, %v2484
      %v2486 = vrot.slane %v2297, 1
      %v2487 = vrot.slane %v2293, 2
      %v2488 = vor.u32 %v2486, %v2487
      %v2489 = vsel %vm2429, %v2484, %v2488
      %v2490 = vrot.slane %v2305, 1
      %v2491 = vrot.slane %v2301, 2
      %v2492 = vor.u32 %v2490, %v2491
      %v2493 = vsel %vm2429, %v2488, %v2492
      %v2494 = vrot.slane %v2313, 1
      %v2495 = vrot.slane %v2309, 2
      %v2496 = vor.u32 %v2494, %v2495
      %v2497 = vsel %vm2429, %v2492, %v2496
      %v2498 = vrot.slane %v2321, 1
      %v2499 = vrot.slane %v2317, 2
      %v2500 = vor.u32 %v2498, %v2499
      %v2501 = vsel %vm2429, %v2496, %v2500
      %v2503 = vshrl.u32 %v2415, 16
      %v2505 = vrot.slane %v2503, 1
      %v2506 = vshll.u32 %v2415, 16
      %v2508 = vrot.slane %v2506, 2
      %v2509 = vor.u32 %v2505, %v2508
      %v2510 = vsel %vm2429, %v2500, %v2509
      %v2512 = vshrl.u32 %v2428, 16
      %v2514 = vrot.slane %v2512, 1
      %v2515 = vshll.u32 %v2428, 16
      %v2517 = vrot.slane %v2515, 2
      %v2518 = vor.u32 %v2514, %v2517
      %v2519 = vsel %vm2429, %v2509, %v2518
      %v2539 = vunpack.c.l.b16 %v2062
      %v2540 = vpack.c.b16 %v2108, %v2539
      %vm2541 = vcmask 1045504
      %v2542 = vrot.slane %v2540, 2
      %v2543 = vrot.slane %v2143, 2
      %v2544 = vsel %vm2541, %v2542, %v2543
      %v2545 = vrot.slane %v2144, 2
      %v2546 = vsel %vm2541, %v2543, %v2545
      %v2547 = vrot.slane %v2145, 2
      %v2548 = vsel %vm2541, %v2545, %v2547
      %v2549 = vrot.slane %v2146, 2
      %v2550 = vsel %vm2541, %v2547, %v2549
      %v2551 = vrot.slane %v2147, 2
      %v2552 = vsel %vm2541, %v2549, %v2551
      %v2553 = vrot.slane %v2148, 2
      %v2554 = vsel %vm2541, %v2551, %v2553
      %v2555 = vrot.slane %v2149, 2
      %v2556 = vsel %vm2541, %v2553, %v2555
      %v2557 = vrot.slane %v2150, 2
      %v2558 = vsel %vm2541, %v2555, %v2557
      %v2559 = vrot.slane %v2151, 2
      %v2560 = vsel %vm2541, %v2557, %v2559
      %v2561 = vrot.slane %v2152, 2
      %v2562 = vsel %vm2541, %v2559, %v2561
      %v2563 = vrot.slane %v2153, 2
      %v2564 = vsel %vm2541, %v2561, %v2563
      %v2565 = vrot.slane %v2154, 2
      %v2566 = vsel %vm2541, %v2563, %v2565
      %v2567 = vrot.slane %v2155, 2
      %v2568 = vsel %vm2541, %v2565, %v2567
      %v2569 = vrot.slane %v2156, 2
      %v2570 = vsel %vm2541, %v2567, %v2569
      %v2571 = vrot.slane %v2157, 2
      %v2572 = vsel %vm2541, %v2569, %v2571
      %v2573 = vrot.slane %v2158, 2
      %v2574 = vsel %vm2541, %v2571, %v2573
      %v2575 = vrot.slane %v2415, 2
      %v2576 = vsel %vm2541, %v2573, %v2575
      %v2577 = vrot.slane %v2428, 2
      %v2578 = vsel %vm2541, %v2575, %v2577
      %v2601 = vunpack.c.l.b16 %v2063
      %v2602 = vunpack.c.l.b16 %v2064
      %v2603 = vunpack.c.l.b16 %v2065
      %v2604 = vunpack.c.l.b16 %v2066
      %v2605 = vpack.c.b16 %v2110, %v2601
      %v2606 = vpack.c.b16 %v2603, %v2602
      %v2607 = vpack.c.b16 %v2604, %v2604
      %v2608 = vrot.slane %v2605, 2
      %v2609 = vsel %vm2541, %v2608, %v2545
      %v2610 = vrot.slane %v2606, 2
      %v2611 = vsel %vm2541, %v2575, %v2610
      %v2612 = vrot.slane %v2607, 2
      %v2613 = vsel %vm2541, %v2610, %v2612
      %v2618 = vunpack.c.l.b16 %v2067
      %v2619 = vpack.c.b16 %v2618, %v2618
      %vm2620 = vsmask.f32 5376
      %v2622 = vshrl.u32 %v2605, 16
      %v2624 = vrot.slane %v2622, 2
      %v2625 = vshll.u32 %v2605, 16
      %v2627 = vrot.slane %v2625, 3
      %v2628 = vor.u32 %v2624, %v2627
      %v2629 = vrot.slane %v2209, 2
      %v2630 = vrot.slane %v2205, 3
      %v2631 = vor.u32 %v2629, %v2630
      %v2632 = vsel %vm2620, %v2628, %v2631
      %v2633 = vrot.slane %v2217, 2
      %v2634 = vrot.slane %v2213, 3
      %v2635 = vor.u32 %v2633, %v2634
      %v2636 = vsel %vm2620, %v2631, %v2635
      %v2637 = vrot.slane %v2225, 2
      %v2638 = vrot.slane %v2221, 3
      %v2639 = vor.u32 %v2637, %v2638
      %v2640 = vsel %vm2620, %v2635, %v2639
      %v2641 = vrot.slane %v2233, 2
      %v2642 = vrot.slane %v2229, 3
      %v2643 = vor.u32 %v2641, %v2642
      %v2644 = vsel %vm2620, %v2639, %v2643
      %v2645 = vrot.slane %v2241, 2
      %v2646 = vrot.slane %v2237, 3
      %v2647 = vor.u32 %v2645, %v2646
      %v2648 = vsel %vm2620, %v2643, %v2647
      %v2649 = vrot.slane %v2249, 2
      %v2650 = vrot.slane %v2245, 3
      %v2651 = vor.u32 %v2649, %v2650
      %v2652 = vsel %vm2620, %v2647, %v2651
      %v2653 = vrot.slane %v2257, 2
      %v2654 = vrot.slane %v2253, 3
      %v2655 = vor.u32 %v2653, %v2654
      %v2656 = vsel %vm2620, %v2651, %v2655
      %v2657 = vrot.slane %v2265, 2
      %v2658 = vrot.slane %v2261, 3
      %v2659 = vor.u32 %v2657, %v2658
      %v2660 = vsel %vm2620, %v2655, %v2659
      %v2661 = vrot.slane %v2273, 2
      %v2662 = vrot.slane %v2269, 3
      %v2663 = vor.u32 %v2661, %v2662
      %v2664 = vsel %vm2620, %v2659, %v2663
      %v2665 = vrot.slane %v2281, 2
      %v2666 = vrot.slane %v2277, 3
      %v2667 = vor.u32 %v2665, %v2666
      %v2668 = vsel %vm2620, %v2663, %v2667
      %v2669 = vrot.slane %v2289, 2
      %v2670 = vrot.slane %v2285, 3
      %v2671 = vor.u32 %v2669, %v2670
      %v2672 = vsel %vm2620, %v2667, %v2671
      %v2673 = vrot.slane %v2297, 2
      %v2674 = vrot.slane %v2293, 3
      %v2675 = vor.u32 %v2673, %v2674
      %v2676 = vsel %vm2620, %v2671, %v2675
      %v2677 = vrot.slane %v2305, 2
      %v2678 = vrot.slane %v2301, 3
      %v2679 = vor.u32 %v2677, %v2678
      %v2680 = vsel %vm2620, %v2675, %v2679
      %v2681 = vrot.slane %v2313, 2
      %v2682 = vrot.slane %v2309, 3
      %v2683 = vor.u32 %v2681, %v2682
      %v2684 = vsel %vm2620, %v2679, %v2683
      %v2685 = vrot.slane %v2321, 2
      %v2686 = vrot.slane %v2317, 3
      %v2687 = vor.u32 %v2685, %v2686
      %v2688 = vsel %vm2620, %v2683, %v2687
      %v2689 = vrot.slane %v2503, 2
      %v2690 = vrot.slane %v2506, 3
      %v2691 = vor.u32 %v2689, %v2690
      %v2692 = vsel %vm2620, %v2687, %v2691
      %v2694 = vshrl.u32 %v2606, 16
      %v2696 = vrot.slane %v2694, 2
      %v2697 = vshll.u32 %v2606, 16
      %v2699 = vrot.slane %v2697, 3
      %v2700 = vor.u32 %v2696, %v2699
      %v2701 = vsel %vm2620, %v2691, %v2700
      %v2703 = vshrl.u32 %v2619, 16
      %v2705 = vrot.slane %v2703, 2
      %v2706 = vshll.u32 %v2619, 16
      %v2708 = vrot.slane %v2706, 3
      %v2709 = vor.u32 %v2705, %v2708
      %v2710 = vsel %vm2620, %v2700, %v2709
      %v2730 = vunpack.c.l.b16 %v2068
      %v2731 = vpack.c.b16 %v2110, %v2730
      %vm2732 = vcmask 1044480
      %v2733 = vrot.slane %v2731, 3
      %v2734 = vrot.slane %v2144, 3
      %v2735 = vsel %vm2732, %v2733, %v2734
      %v2736 = vrot.slane %v2145, 3
      %v2737 = vsel %vm2732, %v2734, %v2736
      %v2738 = vrot.slane %v2146, 3
      %v2739 = vsel %vm2732, %v2736, %v2738
      %v2740 = vrot.slane %v2147, 3
      %v2741 = vsel %vm2732, %v2738, %v2740
      %v2742 = vrot.slane %v2148, 3
      %v2743 = vsel %vm2732, %v2740, %v2742
      %v2744 = vrot.slane %v2149, 3
      %v2745 = vsel %vm2732, %v2742, %v2744
      %v2746 = vrot.slane %v2150, 3
      %v2747 = vsel %vm2732, %v2744, %v2746
      %v2748 = vrot.slane %v2151, 3
      %v2749 = vsel %vm2732, %v2746, %v2748
      %v2750 = vrot.slane %v2152, 3
      %v2751 = vsel %vm2732, %v2748, %v2750
      %v2752 = vrot.slane %v2153, 3
      %v2753 = vsel %vm2732, %v2750, %v2752
      %v2754 = vrot.slane %v2154, 3
      %v2755 = vsel %vm2732, %v2752, %v2754
      %v2756 = vrot.slane %v2155, 3
      %v2757 = vsel %vm2732, %v2754, %v2756
      %v2758 = vrot.slane %v2156, 3
      %v2759 = vsel %vm2732, %v2756, %v2758
      %v2760 = vrot.slane %v2157, 3
      %v2761 = vsel %vm2732, %v2758, %v2760
      %v2762 = vrot.slane %v2158, 3
      %v2763 = vsel %vm2732, %v2760, %v2762
      %v2764 = vrot.slane %v2415, 3
      %v2765 = vsel %vm2732, %v2762, %v2764
      %v2766 = vrot.slane %v2606, 3
      %v2767 = vsel %vm2732, %v2764, %v2766
      %v2768 = vrot.slane %v2619, 3
      %v2769 = vsel %vm2732, %v2766, %v2768
      %v2788 = vld [vmem:[%s3] sm:$0xf]
      %v2789 = vld [vmem:[%s3 + $0x4] sm:$0xf]
      %v2790 = vld [vmem:[%s3 + $0x8] sm:$0xf]
      %v2791 = vld [vmem:[%s3 + $0xc] sm:$0xf]
      %v2792 = vld [vmem:[%s3 + $0x10] sm:$0xf]
      %v2793 = vld [vmem:[%s3 + $0x14] sm:$0xf]
      %v2794 = vld [vmem:[%s3 + $0x18] sm:$0xf]
      %v2795 = vld [vmem:[%s3 + $0x1c] sm:$0xf]
      %v2796 = vld [vmem:[%s3 + $0x20] sm:$0xf]
      %v2797 = vld [vmem:[%s3 + $0x24] sm:$0xf]
      %v2798 = vld [vmem:[%s3 + $0x28] sm:$0xf]
      %v2799 = vld [vmem:[%s3 + $0x2c] sm:$0xf]
      %v2800 = vld [vmem:[%s3 + $0x30] sm:$0xf]
      %v2801 = vld [vmem:[%s3 + $0x34] sm:$0xf]
      %v2802 = vld [vmem:[%s3 + $0x38] sm:$0xf]
      %v2803 = vld [vmem:[%s3 + $0x3c] sm:$0xf]
      %v2804 = vld [vmem:[%s3 + $0x40] sm:$0xf]
      %v2805 = vld [vmem:[%s3 + $0x44] sm:$0xf]
      %v2806 = vld [vmem:[%s3 + $0x48] sm:$0xf]
      %v2807 = vld [vmem:[%s3 + $0x4c] sm:$0xf]
      %v2808 = vld [vmem:[%s3 + $0x50] sm:$0xf]
      %v2809 = vld [vmem:[%s3 + $0x54] sm:$0xf]
      %v2810 = vld [vmem:[%s3 + $0x58] sm:$0xf]
      %v2811 = vld [vmem:[%s3 + $0x5c] sm:$0xf]
      %v2812 = vld [vmem:[%s3 + $0x60] sm:$0xf]
      %v2813 = vld [vmem:[%s3 + $0x64] sm:$0xf]
      %v2814 = vld [vmem:[%s3 + $0x68] sm:$0xf]
      %v2815 = vld [vmem:[%s3 + $0x6c] sm:$0xf]
      %v2816 = vld [vmem:[%s3 + $0x70] sm:$0xf]
      %v2817 = vld [vmem:[%s3 + $0x74] sm:$0xf]
      %v2818 = vld [vmem:[%s3 + $0x78] sm:$0xf]
      %v2819 = vld [vmem:[%s3 + $0x7c] sm:$0xf]
      %v2820 = vld [vmem:[%s3 + $0x80] sm:$0xf]
      %v2821 = vld [vmem:[%s3 + $0x84] sm:$0xf]
      %v2822 = vld [vmem:[%s3 + $0x88] sm:$0xf]
      %v2823 = vld [vmem:[%s3 + $0x8c] sm:$0xf]
      %v2824 = vld [vmem:[%s3 + $0x90] sm:$0xf]
      %v2825 = vld [vmem:[%s3 + $0x94] sm:$0xf]
      %v2826 = vld [vmem:[%s3 + $0x98] sm:$0xf]
      %v2827 = vld [vmem:[%s3 + $0x9c] sm:$0xf]
      %v2828 = vld [vmem:[%s3 + $0xa0] sm:$0xf]
      %v2829 = vld [vmem:[%s3 + $0xa4] sm:$0xf]
      %v2830 = vld [vmem:[%s3 + $0xa8] sm:$0xf]
      %v2831 = vld [vmem:[%s3 + $0xac] sm:$0xf]
      %v2832 = vld [vmem:[%s3 + $0xb0] sm:$0xf]
      %v2833 = vld [vmem:[%s3 + $0xb4] sm:$0xf]
      %v2834 = vld [vmem:[%s3 + $0xb8] sm:$0xf]
      %v2835 = vld [vmem:[%s3 + $0xbc] sm:$0xf]
      %v2836 = vld [vmem:[%s3 + $0xc0] sm:$0xf]
      %v2837 = vld [vmem:[%s3 + $0xc4] sm:$0xf]
      %v2838 = vld [vmem:[%s3 + $0xc8] sm:$0xf]
      %v2839 = vld [vmem:[%s3 + $0xcc] sm:$0xf]
      %v2840 = vld [vmem:[%s3 + $0xd0] sm:$0xf]
      %v2841 = vld [vmem:[%s3 + $0xd4] sm:$0xf]
      %v2842 = vld [vmem:[%s3 + $0xd8] sm:$0xf]
      %v2843 = vld [vmem:[%s3 + $0xdc] sm:$0xf]
      %v2844 = vld [vmem:[%s3 + $0xe0] sm:$0xf]
      %v2845 = vld [vmem:[%s3 + $0xe4] sm:$0xf]
      %v2846 = vld [vmem:[%s3 + $0xe8] sm:$0xf]
      %v2847 = vld [vmem:[%s3 + $0xec] sm:$0xf]
      %v2848 = vld [vmem:[%s3 + $0xf0] sm:$0xf]
      %v2849 = vld [vmem:[%s3 + $0xf4] sm:$0xf]
      %v2850 = vld [vmem:[%s3 + $0xf8] sm:$0xf]
      %v2851 = vld [vmem:[%s3 + $0xfc] sm:$0xf]
      %v2852 = vld [vmem:[%s3 + $0x100] sm:$0xf]
      %v2853 = vld [vmem:[%s3 + $0x104] sm:$0xf]
      %v2854 = vld [vmem:[%s3 + $0x108] sm:$0xf]
      %v2855 = vld [vmem:[%s3 + $0x10c] sm:$0xf]
      %v2856 = vld [vmem:[%s3 + $0x110] sm:$0xf]
      %v2857 = vld [vmem:[%s3 + $0x114] sm:$0xf]
      %v2858 = vld [vmem:[%s3 + $0x118] sm:$0xf]
      %v2859 = vld [vmem:[%s3 + $0x11c] sm:$0xf]
      %v2860 = vld [vmem:[%s3 + $0x120] sm:$0xf]
      %v2861 = vld [vmem:[%s3 + $0x124] sm:$0xf]
      %v2862 = vld [vmem:[%s3 + $0x128] sm:$0xf]
      %v2863 = vld [vmem:[%s3 + $0x12c] sm:$0xf]
      %v2864 = vld [vmem:[%s3 + $0x130] sm:$0xf]
      %v2865 = vld [vmem:[%s3 + $0x134] sm:$0xf]
      %v2866 = vld [vmem:[%s3 + $0x138] sm:$0xf]
      %v2867 = vld [vmem:[%s3 + $0x13c] sm:$0xf]
      %v2868 = vld [vmem:[%s3 + $0x140] sm:$0xf]
      %v2869 = vld [vmem:[%s3 + $0x144] sm:$0xf]
      %v2870 = vld [vmem:[%s3 + $0x148] sm:$0xf]
      %v2871 = vld [vmem:[%s3 + $0x14c] sm:$0xf]
      %v2872 = vld [vmem:[%s3 + $0x150] sm:$0xf]
      %v2873 = vld [vmem:[%s3 + $0x154] sm:$0xf]
      %v2874 = vld [vmem:[%s3 + $0x158] sm:$0xf]
      %v2875 = vld [vmem:[%s3 + $0x15c] sm:$0xf]
      %v2876 = vld [vmem:[%s3 + $0x160] sm:$0xf]
      %v2877 = vld [vmem:[%s3 + $0x164] sm:$0xf]
      %v2878 = vld [vmem:[%s3 + $0x168] sm:$0xf]
      %v2879 = vld [vmem:[%s3 + $0x16c] sm:$0xf]
      %v2880 = vld [vmem:[%s3 + $0x170] sm:$0xf]
      %v2881 = vld [vmem:[%s3 + $0x174] sm:$0xf]
      %v2882 = vld [vmem:[%s3 + $0x178] sm:$0xf]
      %v2883 = vld [vmem:[%s3 + $0x17c] sm:$0xf]
      %v2884 = vld [vmem:[%s3 + $0x180] sm:$0xf]
      %v2885 = vld [vmem:[%s3 + $0x184] sm:$0xf]
      %v2886 = vld [vmem:[%s3 + $0x188] sm:$0xf]
      %v2887 = vld [vmem:[%s3 + $0x18c] sm:$0xf]
      %v2888 = vld [vmem:[%s3 + $0x190] sm:$0xf]
      %v2889 = vld [vmem:[%s3 + $0x194] sm:$0xf]
      %v2890 = vld [vmem:[%s3 + $0x198] sm:$0xf]
      %v2891 = vld [vmem:[%s3 + $0x19c] sm:$0xf]
      %v2892 = vld [vmem:[%s3 + $0x1a0] sm:$0xf]
      %v2893 = vld [vmem:[%s3 + $0x1a4] sm:$0xf]
      %v2894 = vld [vmem:[%s3 + $0x1a8] sm:$0xf]
      %v2895 = vld [vmem:[%s3 + $0x1ac] sm:$0xf]
      %v2896 = vld [vmem:[%s3 + $0x1b0] sm:$0xf]
      %v2897 = vld [vmem:[%s3 + $0x1b4] sm:$0xf]
      %v2898 = vld [vmem:[%s3 + $0x1b8] sm:$0xf]
      %v2899 = vld [vmem:[%s3 + $0x1bc] sm:$0xf]
      %v2900 = vld [vmem:[%s3 + $0x1c0] sm:$0xf]
      %v2901 = vld [vmem:[%s3 + $0x1c4] sm:$0xf]
      %v2902 = vld [vmem:[%s3 + $0x1c8] sm:$0xf]
      %v2903 = vld [vmem:[%s3 + $0x1cc] sm:$0xf]
      %v2904 = vld [vmem:[%s3 + $0x1d0] sm:$0xf]
      %v2905 = vld [vmem:[%s3 + $0x1d4] sm:$0xf]
      %v2906 = vld [vmem:[%s3 + $0x1d8] sm:$0xf]
      %v2907 = vld [vmem:[%s3 + $0x1dc] sm:$0xf]
      %v2908 = vld [vmem:[%s3 + $0x1e0] sm:$0xf]
      %v2909 = vld [vmem:[%s3 + $0x1e4] sm:$0xf]
      %v2910 = vld [vmem:[%s3 + $0x1e8] sm:$0xf]
      %v2911 = vld [vmem:[%s3 + $0x1ec] sm:$0xf]
      %v2912 = vld [vmem:[%s3 + $0x1f0] sm:$0xf]
      %v2913 = vld [vmem:[%s3 + $0x1f4] sm:$0xf]
      %v2914 = vld [vmem:[%s3 + $0x1f8] sm:$0xf]
      %v2915 = vld [vmem:[%s3 + $0x1fc] sm:$0xf]
      %v2916 = vld [vmem:[%s3 + $0x200] sm:$0xf]
      %v2917 = vld [vmem:[%s3 + $0x204] sm:$0xf]
      %v2918 = vld [vmem:[%s3 + $0x208] sm:$0xf]
      %v2919 = vld [vmem:[%s3 + $0x20c] sm:$0xf]
      %v2920 = vld [vmem:[%s3 + $0x210] sm:$0xf]
      %v2921 = vld [vmem:[%s3 + $0x214] sm:$0xf]
      %v2922 = vld [vmem:[%s3 + $0x218] sm:$0xf]
      %v2923 = vld [vmem:[%s3 + $0x21c] sm:$0xf]
      %v2924 = vld [vmem:[%s3 + $0x220] sm:$0xf]
      %v2925 = vld [vmem:[%s3 + $0x224] sm:$0xf]
      %v2926 = vld [vmem:[%s3 + $0x228] sm:$0xf]
      %v2927 = vld [vmem:[%s3 + $0x22c] sm:$0xf]
      %v2928 = vld [vmem:[%s3 + $0x230] sm:$0xf]
      %v2929 = vld [vmem:[%s3 + $0x234] sm:$0xf]
      %v2930 = vld [vmem:[%s3 + $0x238] sm:$0xf]
      %v2931 = vld [vmem:[%s3 + $0x23c] sm:$0xf]
      %v2932 = vld [vmem:[%s4] sm:$0x1]
      %v2934 = vlaneseq
      %v2935 = vshrl.u32 %v2934, 7
      %v2936 = vsub.s32 0, %v2935
      %v2937 = vrot.slane %v2932, %v2936
      %v3083 = vunpack.c.l.b16 %v2788
      %v3084 = vunpack.c.l.b16 %v2789
      %v3085 = vunpack.c.l.b16 %v2790
      %v3086 = vunpack.c.l.b16 %v2791
      %v3087 = vunpack.c.l.b16 %v2792
      %v3088 = vunpack.c.l.b16 %v2793
      %v3089 = vunpack.c.l.b16 %v2794
      %v3090 = vunpack.c.l.b16 %v2795
      %v3091 = vunpack.c.l.b16 %v2796
      %v3092 = vunpack.c.l.b16 %v2797
      %v3093 = vunpack.c.l.b16 %v2798
      %v3094 = vunpack.c.l.b16 %v2799
      %v3095 = vunpack.c.l.b16 %v2800
      %v3096 = vunpack.c.l.b16 %v2801
      %v3097 = vunpack.c.l.b16 %v2802
      %v3098 = vunpack.c.l.b16 %v2803
      %v3099 = vunpack.c.l.b16 %v2804
      %v3100 = vunpack.c.l.b16 %v2805
      %v3101 = vunpack.c.l.b16 %v2806
      %v3102 = vunpack.c.l.b16 %v2807
      %v3103 = vunpack.c.l.b16 %v2808
      %v3104 = vunpack.c.l.b16 %v2809
      %v3105 = vunpack.c.l.b16 %v2810
      %v3106 = vunpack.c.l.b16 %v2811
      %v3107 = vunpack.c.l.b16 %v2812
      %v3108 = vunpack.c.l.b16 %v2813
      %v3109 = vunpack.c.l.b16 %v2814
      %v3110 = vunpack.c.l.b16 %v2815
      %v3111 = vunpack.c.l.b16 %v2816
      %v3112 = vunpack.c.l.b16 %v2817
      %v3113 = vunpack.c.l.b16 %v2818
      %v3114 = vunpack.c.l.b16 %v2819
      %v3115 = vunpack.c.l.b16 %v2820
      %v3116 = vunpack.c.l.b16 %v2821
      %v3117 = vunpack.c.l.b16 %v2822
      %v3118 = vunpack.c.l.b16 %v2823
      %v3119 = vunpack.c.l.b16 %v2824
      %v3120 = vunpack.c.l.b16 %v2825
      %v3121 = vunpack.c.l.b16 %v2826
      %v3122 = vunpack.c.l.b16 %v2827
      %v3123 = vunpack.c.l.b16 %v2828
      %v3124 = vunpack.c.l.b16 %v2829
      %v3125 = vunpack.c.l.b16 %v2830
      %v3126 = vunpack.c.l.b16 %v2831
      %v3127 = vunpack.c.l.b16 %v2832
      %v3128 = vunpack.c.l.b16 %v2833
      %v3129 = vunpack.c.l.b16 %v2834
      %v3130 = vunpack.c.l.b16 %v2835
      %v3131 = vunpack.c.l.b16 %v2836
      %v3132 = vunpack.c.l.b16 %v2837
      %v3133 = vunpack.c.l.b16 %v2838
      %v3134 = vunpack.c.l.b16 %v2839
      %v3135 = vunpack.c.l.b16 %v2840
      %v3136 = vunpack.c.l.b16 %v2841
      %v3137 = vunpack.c.l.b16 %v2842
      %v3138 = vunpack.c.l.b16 %v2843
      %v3139 = vunpack.c.l.b16 %v2844
      %v3140 = vunpack.c.l.b16 %v2845
      %v3141 = vunpack.c.l.b16 %v2846
      %v3142 = vunpack.c.l.b16 %v2847
      %v3143 = vunpack.c.l.b16 %v2848
      %v3144 = vunpack.c.l.b16 %v2849
      %v3145 = vunpack.c.l.b16 %v2850
      %v3146 = vunpack.c.l.b16 %v2851
      %v3147 = vunpack.c.l.b16 %v2852
      %v3148 = vunpack.c.l.b16 %v2853
      %v3149 = vunpack.c.l.b16 %v2854
      %v3150 = vunpack.c.l.b16 %v2855
      %v3151 = vunpack.c.l.b16 %v2856
      %v3152 = vunpack.c.l.b16 %v2857
      %v3153 = vunpack.c.l.b16 %v2858
      %v3154 = vunpack.c.l.b16 %v2859
      %v3155 = vunpack.c.l.b16 %v2860
      %v3156 = vunpack.c.l.b16 %v2861
      %v3157 = vunpack.c.l.b16 %v2862
      %v3158 = vunpack.c.l.b16 %v2863
      %v3159 = vunpack.c.l.b16 %v2864
      %v3160 = vunpack.c.l.b16 %v2865
      %v3161 = vunpack.c.l.b16 %v2866
      %v3162 = vunpack.c.l.b16 %v2867
      %v3163 = vunpack.c.l.b16 %v2868
      %v3164 = vunpack.c.l.b16 %v2869
      %v3165 = vunpack.c.l.b16 %v2870
      %v3166 = vunpack.c.l.b16 %v2871
      %v3167 = vunpack.c.l.b16 %v2872
      %v3168 = vunpack.c.l.b16 %v2873
      %v3169 = vunpack.c.l.b16 %v2874
      %v3170 = vunpack.c.l.b16 %v2875
      %v3171 = vunpack.c.l.b16 %v2876
      %v3172 = vunpack.c.l.b16 %v2877
      %v3173 = vunpack.c.l.b16 %v2878
      %v3174 = vunpack.c.l.b16 %v2879
      %v3175 = vunpack.c.l.b16 %v2880
      %v3176 = vunpack.c.l.b16 %v2881
      %v3177 = vunpack.c.l.b16 %v2882
      %v3178 = vunpack.c.l.b16 %v2883
      %v3179 = vunpack.c.l.b16 %v2884
      %v3180 = vunpack.c.l.b16 %v2885
      %v3181 = vunpack.c.l.b16 %v2886
      %v3182 = vunpack.c.l.b16 %v2887
      %v3183 = vunpack.c.l.b16 %v2888
      %v3184 = vunpack.c.l.b16 %v2889
      %v3185 = vunpack.c.l.b16 %v2890
      %v3186 = vunpack.c.l.b16 %v2891
      %v3187 = vunpack.c.l.b16 %v2892
      %v3188 = vunpack.c.l.b16 %v2893
      %v3189 = vunpack.c.l.b16 %v2894
      %v3190 = vunpack.c.l.b16 %v2895
      %v3191 = vunpack.c.l.b16 %v2896
      %v3192 = vunpack.c.l.b16 %v2897
      %v3193 = vunpack.c.l.b16 %v2898
      %v3194 = vunpack.c.l.b16 %v2899
      %v3195 = vunpack.c.l.b16 %v2900
      %v3196 = vunpack.c.l.b16 %v2901
      %v3197 = vunpack.c.l.b16 %v2902
      %v3198 = vunpack.c.l.b16 %v2903
      %v3199 = vunpack.c.l.b16 %v2904
      %v3200 = vunpack.c.l.b16 %v2905
      %v3201 = vunpack.c.l.b16 %v2906
      %v3202 = vunpack.c.l.b16 %v2907
      %v3203 = vunpack.c.l.b16 %v2908
      %v3204 = vunpack.c.l.b16 %v2909
      %v3205 = vunpack.c.l.b16 %v2910
      %v3206 = vunpack.c.l.b16 %v2911
      %v3207 = vunpack.c.l.b16 %v2912
      %v3208 = vunpack.c.l.b16 %v2913
      %v3209 = vunpack.c.l.b16 %v2914
      %v3210 = vunpack.c.l.b16 %v2915
      %v3211 = vunpack.c.l.b16 %v2916
      %v3212 = vunpack.c.l.b16 %v2917
      %v3213 = vunpack.c.l.b16 %v2918
      %v3214 = vunpack.c.l.b16 %v2919
      %v3215 = vunpack.c.l.b16 %v2920
      %v3216 = vunpack.c.l.b16 %v2921
      %v3217 = vunpack.c.l.b16 %v2922
      %v3218 = vunpack.c.l.b16 %v2923
      %v3219 = vunpack.c.l.b16 %v2924
      %v3220 = vunpack.c.l.b16 %v2925
      %v3221 = vunpack.c.l.b16 %v2926
      %v3222 = vunpack.c.l.b16 %v2927
      %v3223 = vunpack.c.l.b16 %v2928
      %v3224 = vunpack.c.l.b16 %v2929
      %v3225 = vunpack.c.l.b16 %v2930
      %v3226 = vunpack.c.l.b16 %v2931
      %v3227 = vpack.c.b16 %v3084, %v3083
      %v3228 = vpack.c.b16 %v3086, %v3085
      %v3229 = vpack.c.b16 %v3088, %v3087
      %v3230 = vpack.c.b16 %v3090, %v3089
      %v3231 = vpack.c.b16 %v3092, %v3091
      %v3232 = vpack.c.b16 %v3094, %v3093
      %v3233 = vpack.c.b16 %v3096, %v3095
      %v3234 = vpack.c.b16 %v3098, %v3097
      %v3235 = vpack.c.b16 %v3100, %v3099
      %v3236 = vpack.c.b16 %v3102, %v3101
      %v3237 = vpack.c.b16 %v3104, %v3103
      %v3238 = vpack.c.b16 %v3106, %v3105
      %v3239 = vpack.c.b16 %v3108, %v3107
      %v3240 = vpack.c.b16 %v3110, %v3109
      %v3241 = vpack.c.b16 %v3112, %v3111
      %v3242 = vpack.c.b16 %v3114, %v3113
      %v3243 = vpack.c.b16 %v3116, %v3115
      %v3244 = vpack.c.b16 %v3118, %v3117
      %v3245 = vpack.c.b16 %v3120, %v3119
      %v3246 = vpack.c.b16 %v3122, %v3121
      %v3247 = vpack.c.b16 %v3124, %v3123
      %v3248 = vpack.c.b16 %v3126, %v3125
      %v3249 = vpack.c.b16 %v3128, %v3127
      %v3250 = vpack.c.b16 %v3130, %v3129
      %v3251 = vpack.c.b16 %v3132, %v3131
      %v3252 = vpack.c.b16 %v3134, %v3133
      %v3253 = vpack.c.b16 %v3136, %v3135
      %v3254 = vpack.c.b16 %v3138, %v3137
      %v3255 = vpack.c.b16 %v3140, %v3139
      %v3256 = vpack.c.b16 %v3142, %v3141
      %v3257 = vpack.c.b16 %v3144, %v3143
      %v3258 = vpack.c.b16 %v3146, %v3145
      %v3259 = vpack.c.b16 %v3148, %v3147
      %v3260 = vpack.c.b16 %v3150, %v3149
      %v3261 = vpack.c.b16 %v3152, %v3151
      %v3262 = vpack.c.b16 %v3154, %v3153
      %v3263 = vpack.c.b16 %v3156, %v3155
      %v3264 = vpack.c.b16 %v3158, %v3157
      %v3265 = vpack.c.b16 %v3160, %v3159
      %v3266 = vpack.c.b16 %v3162, %v3161
      %v3267 = vpack.c.b16 %v3164, %v3163
      %v3268 = vpack.c.b16 %v3166, %v3165
      %v3269 = vpack.c.b16 %v3168, %v3167
      %v3270 = vpack.c.b16 %v3170, %v3169
      %v3271 = vpack.c.b16 %v3172, %v3171
      %v3272 = vpack.c.b16 %v3174, %v3173
      %v3273 = vpack.c.b16 %v3176, %v3175
      %v3274 = vpack.c.b16 %v3178, %v3177
      %v3275 = vpack.c.b16 %v3180, %v3179
      %v3276 = vpack.c.b16 %v3182, %v3181
      %v3277 = vpack.c.b16 %v3184, %v3183
      %v3278 = vpack.c.b16 %v3186, %v3185
      %v3279 = vpack.c.b16 %v3188, %v3187
      %v3280 = vpack.c.b16 %v3190, %v3189
      %v3281 = vpack.c.b16 %v3192, %v3191
      %v3282 = vpack.c.b16 %v3194, %v3193
      %v3283 = vpack.c.b16 %v3196, %v3195
      %v3284 = vpack.c.b16 %v3198, %v3197
      %v3285 = vpack.c.b16 %v3200, %v3199
      %v3286 = vpack.c.b16 %v3202, %v3201
      %v3287 = vpack.c.b16 %v3204, %v3203
      %v3288 = vpack.c.b16 %v3206, %v3205
      %v3289 = vpack.c.b16 %v3208, %v3207
      %v3290 = vpack.c.b16 %v3210, %v3209
      %v3291 = vpack.c.b16 %v3212, %v3211
      %v3292 = vpack.c.b16 %v3214, %v3213
      %v3293 = vpack.c.b16 %v3216, %v3215
      %v3294 = vpack.c.b16 %v3218, %v3217
      %v3295 = vpack.c.b16 %v3220, %v3219
      %v3296 = vpack.c.b16 %v3222, %v3221
      %v3297 = vpack.c.b16 %v3224, %v3223
      %v3298 = vpack.c.b16 %v3226, %v3225
      %3371 = vmatprep.subr.bf16.mxu0 0
      %3372 = vmatpush1.bf16.msra.mxu0 %v3227
      %3373 = vmatprep.subr.bf16.mxu0 0
      %3374 = vmatpush1.bf16.msra.mxu0 %v3228
      %3375 = vmatprep.subr.bf16.mxu0 0
      %3376 = vmatpush1.bf16.msra.mxu0 %v3229
      %3377 = vmatprep.subr.bf16.mxu0 0
      %3378 = vmatpush1.bf16.msra.mxu0 %v3230
      %3379 = vmatprep.subr.bf16.mxu0 0
      %3380 = vmatpush1.bf16.msra.mxu0 %v3231
      %3381 = vmatprep.subr.bf16.mxu0 0
      %3382 = vmatpush1.bf16.msra.mxu0 %v3232
      %3383 = vmatprep.subr.bf16.mxu0 0
      %3384 = vmatpush1.bf16.msra.mxu0 %v3233
      %3385 = vmatprep.subr.bf16.mxu0 0
      %3386 = vmatpush1.bf16.msra.mxu0 %v3234
      %3387 = vmatprep.subr.bf16.mxu0 0
      %3388 = vmatpush1.bf16.msra.mxu0 %v3235
      %3389 = vmatprep.subr.bf16.mxu0 0
      %3390 = vmatpush1.bf16.msra.mxu0 %v3236
      %3391 = vmatprep.subr.bf16.mxu0 0
      %3392 = vmatpush1.bf16.msra.mxu0 %v3237
      %3393 = vmatprep.subr.bf16.mxu0 0
      %3394 = vmatpush1.bf16.msra.mxu0 %v3238
      %3395 = vmatprep.subr.bf16.mxu0 0
      %3396 = vmatpush1.bf16.msra.mxu0 %v3239
      %3397 = vmatprep.subr.bf16.mxu0 0
      %3398 = vmatpush1.bf16.msra.mxu0 %v3240
      %3399 = vmatprep.subr.bf16.mxu0 0
      %3400 = vmatpush1.bf16.msra.mxu0 %v3241
      %3401 = vmatprep.subr.bf16.mxu0 0
      %3402 = vmatpush1.bf16.msra.mxu0 %v3242
      %3403 = vmatprep.mubr.bf16.mxu0 %v2192
      %3404 = vmatmul.mubr.bf16.gmra.mrb[0].mxu0 %v2141
      %v3405 = vpop.f32.mrb[0].mxu0
      %v3406 = vadd.f32 %v2937, %v3405
      %v3407 = vpop.f32.mrb[0].mxu0
      %v3408 = vpop.f32.mrb[0].mxu0
      %v3409 = vadd.f32 %v2937, %v3408
      %v3410 = vpop.f32.mrb[0].mxu0
      %3411 = vmatprep.mubr.bf16.mxu0 %v2200
      %3412 = vmatmul.mubr.bf16.gmra.mrb[0].mxu0 %v2142
      %v3413 = vpop.f32.mrb[0].mxu0
      %v3414 = vadd.f32 %v2937, %v3413
      %v3415 = vpop.f32.mrb[0].mxu0
      %v3416 = vpop.f32.mrb[0].mxu0
      %v3417 = vadd.f32 %v2937, %v3416
      %v3418 = vpop.f32.mrb[0].mxu0
      %3419 = vmatprep.mubr.bf16.mxu0 %v2208
      %3420 = vmatmul.mubr.bf16.gmra.mrb[0].mxu0 %v2143
      %v3421 = vpop.f32.mrb[0].mxu0
      %v3422 = vadd.f32 %v2937, %v3421
      %v3423 = vpop.f32.mrb[0].mxu0
      %v3424 = vpop.f32.mrb[0].mxu0
      %v3425 = vadd.f32 %v2937, %v3424
      %v3426 = vpop.f32.mrb[0].mxu0
      %3427 = vmatprep.mubr.bf16.mxu0 %v2216
      %3428 = vmatmul.mubr.bf16.gmra.mrb[0].mxu0 %v2144
      %v3429 = vpop.f32.mrb[0].mxu0
      %v3430 = vadd.f32 %v2937, %v3429
      %v3431 = vpop.f32.mrb[0].mxu0
      %v3432 = vpop.f32.mrb[0].mxu0
      %v3433 = vadd.f32 %v2937, %v3432
      %v3434 = vpop.f32.mrb[0].mxu0
      %3435 = vmatprep.mubr.bf16.mxu0 %v2224
      %3436 = vmatmul.mubr.bf16.gmra.mrb[0].mxu0 %v2145
      %v3437 = vpop.f32.mrb[0].mxu0
      %v3438 = vadd.f32 %v2937, %v3437
      %v3439 = vpop.f32.mrb[0].mxu0
      %v3440 = vpop.f32.mrb[0].mxu0
      %v3441 = vadd.f32 %v2937, %v3440
      %v3442 = vpop.f32.mrb[0].mxu0
      %3443 = vmatprep.mubr.bf16.mxu0 %v2232
      %3444 = vmatmul.mubr.bf16.gmra.mrb[0].mxu0 %v2146
      %v3445 = vpop.f32.mrb[0].mxu0
      %v3446 = vadd.f32 %v2937, %v3445
      %v3447 = vpop.f32.mrb[0].mxu0
      %v3448 = vpop.f32.mrb[0].mxu0
      %v3449 = vadd.f32 %v2937, %v3448
      %v3450 = vpop.f32.mrb[0].mxu0
      %3451 = vmatprep.mubr.bf16.mxu0 %v2240
      %3452 = vmatmul.mubr.bf16.gmra.mrb[0].mxu0 %v2147
      %v3453 = vpop.f32.mrb[0].mxu0
      %v3454 = vadd.f32 %v2937, %v3453
      %v3455 = vpop.f32.mrb[0].mxu0
      %v3456 = vpop.f32.mrb[0].mxu0
      %v3457 = vadd.f32 %v2937, %v3456
      %v3458 = vpop.f32.mrb[0].mxu0
      %3459 = vmatprep.mubr.bf16.mxu0 %v2248
      %3460 = vmatmul.mubr.bf16.gmra.mrb[0].mxu0 %v2148
      %v3461 = vpop.f32.mrb[0].mxu0
      %v3462 = vadd.f32 %v2937, %v3461
      %v3463 = vpop.f32.mrb[0].mxu0
      %v3464 = vpop.f32.mrb[0].mxu0
      %v3465 = vadd.f32 %v2937, %v3464
      %v3466 = vpop.f32.mrb[0].mxu0
      %3467 = vmatprep.mubr.bf16.mxu0 %v2256
      %3468 = vmatmul.mubr.bf16.gmra.mrb[0].mxu0 %v2149
      %v3469 = vpop.f32.mrb[0].mxu0
      %v3470 = vadd.f32 %v2937, %v3469
      %v3471 = vpop.f32.mrb[0].mxu0
      %v3472 = vpop.f32.mrb[0].mxu0
      %v3473 = vadd.f32 %v2937, %v3472
      %v3474 = vpop.f32.mrb[0].mxu0
      %3475 = vmatprep.mubr.bf16.mxu0 %v2264
      %3476 = vmatmul.mubr.bf16.gmra.mrb[0].mxu0 %v2150
      %v3477 = vpop.f32.mrb[0].mxu0
      %v3478 = vadd.f32 %v2937, %v3477
      %v3479 = vpop.f32.mrb[0].mxu0
      %v3480 = vpop.f32.mrb[0].mxu0
      %v3481 = vadd.f32 %v2937, %v3480
      %v3482 = vpop.f32.mrb[0].mxu0
      %3483 = vmatprep.mubr.bf16.mxu0 %v2272
      %3484 = vmatmul.mubr.bf16.gmra.mrb[0].mxu0 %v2151
      %v3485 = vpop.f32.mrb[0].mxu0
      %v3486 = vadd.f32 %v2937, %v3485
      %v3487 = vpop.f32.mrb[0].mxu0
      %v3488 = vpop.f32.mrb[0].mxu0
      %v3489 = vadd.f32 %v2937, %v3488
      %v3490 = vpop.f32.mrb[0].mxu0
      %3491 = vmatprep.mubr.bf16.mxu0 %v2280
      %3492 = vmatmul.mubr.bf16.gmra.mrb[0].mxu0 %v2152
      %v3493 = vpop.f32.mrb[0].mxu0
      %v3494 = vadd.f32 %v2937, %v3493
      %v3495 = vpop.f32.mrb[0].mxu0
      %v3496 = vpop.f32.mrb[0].mxu0
      %v3497 = vadd.f32 %v2937, %v3496
      %v3498 = vpop.f32.mrb[0].mxu0
      %3499 = vmatprep.mubr.bf16.mxu0 %v2288
      %3500 = vmatmul.mubr.bf16.gmra.mrb[0].mxu0 %v2153
      %v3501 = vpop.f32.mrb[0].mxu0
      %v3502 = vadd.f32 %v2937, %v3501
      %v3503 = vpop.f32.mrb[0].mxu0
      %v3504 = vpop.f32.mrb[0].mxu0
      %v3505 = vadd.f32 %v2937, %v3504
      %v3506 = vpop.f32.mrb[0].mxu0
      %3507 = vmatprep.mubr.bf16.mxu0 %v2296
      %3508 = vmatmul.mubr.bf16.gmra.mrb[0].mxu0 %v2154
      %v3509 = vpop.f32.mrb[0].mxu0
      %v3510 = vadd.f32 %v2937, %v3509
      %v3511 = vpop.f32.mrb[0].mxu0
      %v3512 = vpop.f32.mrb[0].mxu0
      %v3513 = vadd.f32 %v2937, %v3512
      %v3514 = vpop.f32.mrb[0].mxu0
      %3515 = vmatprep.mubr.bf16.mxu0 %v2304
      %3516 = vmatmul.mubr.bf16.gmra.mrb[0].mxu0 %v2155
      %v3517 = vpop.f32.mrb[0].mxu0
      %v3518 = vadd.f32 %v2937, %v3517
      %v3519 = vpop.f32.mrb[0].mxu0
      %v3520 = vpop.f32.mrb[0].mxu0
      %v3521 = vadd.f32 %v2937, %v3520
      %v3522 = vpop.f32.mrb[0].mxu0
      %3523 = vmatprep.mubr.bf16.mxu0 %v2312
      %3524 = vmatmul.mubr.bf16.gmra.mrb[0].mxu0 %v2156
      %v3525 = vpop.f32.mrb[0].mxu0
      %v3526 = vadd.f32 %v2937, %v3525
      %v3527 = vpop.f32.mrb[0].mxu0
      %v3528 = vpop.f32.mrb[0].mxu0
      %v3529 = vadd.f32 %v2937, %v3528
      %v3530 = vpop.f32.mrb[0].mxu0
      %3531 = vmatprep.mubr.bf16.mxu0 %v2320
      %3532 = vmatmul.mubr.bf16.gmra.mrb[0].mxu0 %v2157
      %v3533 = vpop.f32.mrb[0].mxu0
      %v3534 = vadd.f32 %v2937, %v3533
      %v3535 = vpop.f32.mrb[0].mxu0
      %v3536 = vpop.f32.mrb[0].mxu0
      %v3537 = vadd.f32 %v2937, %v3536
      %v3538 = vpop.f32.mrb[0].mxu0
      %3539 = vmatprep.mubr.bf16.mxu0 %v2328
      %3540 = vmatmul.mubr.bf16.gmra.mrb[0].mxu0 %v2158
      %v3541 = vpop.f32.mrb[0].mxu0
      %v3542 = vadd.f32 %v2937, %v3541
      %v3543 = vpop.f32.mrb[0].mxu0
      %v3544 = vpop.f32.mrb[0].mxu0
      %v3545 = vadd.f32 %v2937, %v3544
      %v3546 = vpop.f32.mrb[0].mxu0
      %3547 = vdwg.mxu0
      %3548 = vmatprep.subr.bf16.mxu0 0
      %3549 = vmatpush1.bf16.msra.mxu0 %v3243
      %3550 = vmatprep.subr.bf16.mxu0 0
      %3551 = vmatpush1.bf16.msra.mxu0 %v3244
      %3552 = vmatprep.subr.bf16.mxu0 0
      %3553 = vmatpush1.bf16.msra.mxu0 %v3245
      %3554 = vmatprep.subr.bf16.mxu0 0
      %3555 = vmatpush1.bf16.msra.mxu0 %v3246
      %3556 = vmatprep.subr.bf16.mxu0 0
      %3557 = vmatpush1.bf16.msra.mxu0 %v3247
      %3558 = vmatprep.subr.bf16.mxu0 0
      %3559 = vmatpush1.bf16.msra.mxu0 %v3248
      %3560 = vmatprep.subr.bf16.mxu0 0
      %3561 = vmatpush1.bf16.msra.mxu0 %v3249
      %3562 = vmatprep.subr.bf16.mxu0 0
      %3563 = vmatpush1.bf16.msra.mxu0 %v3250
      %3564 = vmatprep.subr.bf16.mxu0 0
      %3565 = vmatpush1.bf16.msra.mxu0 %v3251
      %3566 = vmatprep.subr.bf16.mxu0 0
      %3567 = vmatpush1.bf16.msra.mxu0 %v3252
      %3568 = vmatprep.subr.bf16.mxu0 0
      %3569 = vmatpush1.bf16.msra.mxu0 %v3253
      %3570 = vmatprep.subr.bf16.mxu0 0
      %3571 = vmatpush1.bf16.msra.mxu0 %v3254
      %3572 = vmatprep.subr.bf16.mxu0 0
      %3573 = vmatpush1.bf16.msra.mxu0 %v3255
      %3574 = vmatprep.subr.bf16.mxu0 0
      %3575 = vmatpush1.bf16.msra.mxu0 %v3256
      %3576 = vmatprep.subr.bf16.mxu0 0
      %3577 = vmatpush1.bf16.msra.mxu0 %v3257
      %3578 = vmatprep.subr.bf16.mxu0 0
      %3579 = vmatpush1.bf16.msra.mxu0 %v3258
      %3580 = vmatprep.mubr.bf16.mxu0 %v2418
      %3581 = vmatmul.mubr.bf16.gmra.mrb[0].mxu0 %v2353
      %v3582 = vpop.f32.mrb[0].mxu0
      %v3583 = vadd.f32 %v3406, %v3582
      %v3584 = vpop.f32.mrb[0].mxu0
      %v3585 = vpop.f32.mrb[0].mxu0
      %v3586 = vadd.f32 %v3409, %v3585
      %v3587 = vpop.f32.mrb[0].mxu0
      %3588 = vmatprep.mubr.bf16.mxu0 %v2357
      %3589 = vmatmul.mubr.bf16.gmra.mrb[0].mxu0 %v2355
      %v3590 = vpop.f32.mrb[0].mxu0
      %v3591 = vadd.f32 %v3414, %v3590
      %v3592 = vpop.f32.mrb[0].mxu0
      %v3593 = vpop.f32.mrb[0].mxu0
      %v3594 = vadd.f32 %v3417, %v3593
      %v3595 = vpop.f32.mrb[0].mxu0
      %3596 = vmatprep.mubr.bf16.mxu0 %v2359
      %3597 = vmatmul.mubr.bf16.gmra.mrb[0].mxu0 %v2357
      %v3598 = vpop.f32.mrb[0].mxu0
      %v3599 = vadd.f32 %v3422, %v3598
      %v3600 = vpop.f32.mrb[0].mxu0
      %v3601 = vpop.f32.mrb[0].mxu0
      %v3602 = vadd.f32 %v3425, %v3601
      %v3603 = vpop.f32.mrb[0].mxu0
      %3604 = vmatprep.mubr.bf16.mxu0 %v2361
      %3605 = vmatmul.mubr.bf16.gmra.mrb[0].mxu0 %v2359
      %v3606 = vpop.f32.mrb[0].mxu0
      %v3607 = vadd.f32 %v3430, %v3606
      %v3608 = vpop.f32.mrb[0].mxu0
      %v3609 = vpop.f32.mrb[0].mxu0
      %v3610 = vadd.f32 %v3433, %v3609
      %v3611 = vpop.f32.mrb[0].mxu0
      %3612 = vmatprep.mubr.bf16.mxu0 %v2363
      %3613 = vmatmul.mubr.bf16.gmra.mrb[0].mxu0 %v2361
      %v3614 = vpop.f32.mrb[0].mxu0
      %v3615 = vadd.f32 %v3438, %v3614
      %v3616 = vpop.f32.mrb[0].mxu0
      %v3617 = vpop.f32.mrb[0].mxu0
      %v3618 = vadd.f32 %v3441, %v3617
      %v3619 = vpop.f32.mrb[0].mxu0
      %3620 = vmatprep.mubr.bf16.mxu0 %v2365
      %3621 = vmatmul.mubr.bf16.gmra.mrb[0].mxu0 %v2363
      %v3622 = vpop.f32.mrb[0].mxu0
      %v3623 = vadd.f32 %v3446, %v3622
      %v3624 = vpop.f32.mrb[0].mxu0
      %v3625 = vpop.f32.mrb[0].mxu0
      %v3626 = vadd.f32 %v3449, %v3625
      %v3627 = vpop.f32.mrb[0].mxu0
      %3628 = vmatprep.mubr.bf16.mxu0 %v2367
      %3629 = vmatmul.mubr.bf16.gmra.mrb[0].mxu0 %v2365
      %v3630 = vpop.f32.mrb[0].mxu0
      %v3631 = vadd.f32 %v3454, %v3630
      %v3632 = vpop.f32.mrb[0].mxu0
      %v3633 = vpop.f32.mrb[0].mxu0
      %v3634 = vadd.f32 %v3457, %v3633
      %v3635 = vpop.f32.mrb[0].mxu0
      %3636 = vmatprep.mubr.bf16.mxu0 %v2369
      %3637 = vmatmul.mubr.bf16.gmra.mrb[0].mxu0 %v2367
      %v3638 = vpop.f32.mrb[0].mxu0
      %v3639 = vadd.f32 %v3462, %v3638
      %v3640 = vpop.f32.mrb[0].mxu0
      %v3641 = vpop.f32.mrb[0].mxu0
      %v3642 = vadd.f32 %v3465, %v3641
      %v3643 = vpop.f32.mrb[0].mxu0
      %3644 = vmatprep.mubr.bf16.mxu0 %v2371
      %3645 = vmatmul.mubr.bf16.gmra.mrb[0].mxu0 %v2369
      %v3646 = vpop.f32.mrb[0].mxu0
      %v3647 = vadd.f32 %v3470, %v3646
      %v3648 = vpop.f32.mrb[0].mxu0
      %v3649 = vpop.f32.mrb[0].mxu0
      %v3650 = vadd.f32 %v3473, %v3649
      %v3651 = vpop.f32.mrb[0].mxu0
      %3652 = vmatprep.mubr.bf16.mxu0 %v2373
      %3653 = vmatmul.mubr.bf16.gmra.mrb[0].mxu0 %v2371
      %v3654 = vpop.f32.mrb[0].mxu0
      %v3655 = vadd.f32 %v3478, %v3654
      %v3656 = vpop.f32.mrb[0].mxu0
      %v3657 = vpop.f32.mrb[0].mxu0
      %v3658 = vadd.f32 %v3481, %v3657
      %v3659 = vpop.f32.mrb[0].mxu0
      %3660 = vmatprep.mubr.bf16.mxu0 %v2375
      %3661 = vmatmul.mubr.bf16.gmra.mrb[0].mxu0 %v2373
      %v3662 = vpop.f32.mrb[0].mxu0
      %v3663 = vadd.f32 %v3486, %v3662
      %v3664 = vpop.f32.mrb[0].mxu0
      %v3665 = vpop.f32.mrb[0].mxu0
      %v3666 = vadd.f32 %v3489, %v3665
      %v3667 = vpop.f32.mrb[0].mxu0
      %3668 = vmatprep.mubr.bf16.mxu0 %v2377
      %3669 = vmatmul.mubr.bf16.gmra.mrb[0].mxu0 %v2375
      %v3670 = vpop.f32.mrb[0].mxu0
      %v3671 = vadd.f32 %v3494, %v3670
      %v3672 = vpop.f32.mrb[0].mxu0
      %v3673 = vpop.f32.mrb[0].mxu0
      %v3674 = vadd.f32 %v3497, %v3673
      %v3675 = vpop.f32.mrb[0].mxu0
      %3676 = vmatprep.mubr.bf16.mxu0 %v2379
      %3677 = vmatmul.mubr.bf16.gmra.mrb[0].mxu0 %v2377
      %v3678 = vpop.f32.mrb[0].mxu0
      %v3679 = vadd.f32 %v3502, %v3678
      %v3680 = vpop.f32.mrb[0].mxu0
      %v3681 = vpop.f32.mrb[0].mxu0
      %v3682 = vadd.f32 %v3505, %v3681
      %v3683 = vpop.f32.mrb[0].mxu0
      %3684 = vmatprep.mubr.bf16.mxu0 %v2381
      %3685 = vmatmul.mubr.bf16.gmra.mrb[0].mxu0 %v2379
      %v3686 = vpop.f32.mrb[0].mxu0
      %v3687 = vadd.f32 %v3510, %v3686
      %v3688 = vpop.f32.mrb[0].mxu0
      %v3689 = vpop.f32.mrb[0].mxu0
      %v3690 = vadd.f32 %v3513, %v3689
      %v3691 = vpop.f32.mrb[0].mxu0
      %3692 = vmatprep.mubr.bf16.mxu0 %v2383
      %3693 = vmatmul.mubr.bf16.gmra.mrb[0].mxu0 %v2381
      %v3694 = vpop.f32.mrb[0].mxu0
      %v3695 = vadd.f32 %v3518, %v3694
      %v3696 = vpop.f32.mrb[0].mxu0
      %v3697 = vpop.f32.mrb[0].mxu0
      %v3698 = vadd.f32 %v3521, %v3697
      %v3699 = vpop.f32.mrb[0].mxu0
      %3700 = vmatprep.mubr.bf16.mxu0 %v2385
      %3701 = vmatmul.mubr.bf16.gmra.mrb[0].mxu0 %v2383
      %v3702 = vpop.f32.mrb[0].mxu0
      %v3703 = vadd.f32 %v3526, %v3702
      %v3704 = vpop.f32.mrb[0].mxu0
      %v3705 = vpop.f32.mrb[0].mxu0
      %v3706 = vadd.f32 %v3529, %v3705
      %v3707 = vpop.f32.mrb[0].mxu0
      %3708 = vmatprep.mubr.bf16.mxu0 %v2420
      %3709 = vmatmul.mubr.bf16.gmra.mrb[0].mxu0 %v2385
      %v3710 = vpop.f32.mrb[0].mxu0
      %v3711 = vadd.f32 %v3534, %v3710
      %v3712 = vpop.f32.mrb[0].mxu0
      %v3713 = vpop.f32.mrb[0].mxu0
      %v3714 = vadd.f32 %v3537, %v3713
      %v3715 = vpop.f32.mrb[0].mxu0
      %3716 = vmatprep.mubr.bf16.mxu0 %v2422
      %3717 = vmatmul.mubr.bf16.gmra.mrb[0].mxu0 %v2387
      %v3718 = vpop.f32.mrb[0].mxu0
      %v3719 = vadd.f32 %v3542, %v3718
      %v3720 = vpop.f32.mrb[0].mxu0
      %v3721 = vpop.f32.mrb[0].mxu0
      %v3722 = vadd.f32 %v3545, %v3721
      %v3723 = vpop.f32.mrb[0].mxu0
      %3724 = vdwg.mxu0
      %3725 = vmatprep.subr.bf16.mxu0 0
      %3726 = vmatpush1.bf16.msra.mxu0 %v3259
      %3727 = vmatprep.subr.bf16.mxu0 0
      %3728 = vmatpush1.bf16.msra.mxu0 %v3260
      %3729 = vmatprep.subr.bf16.mxu0 0
      %3730 = vmatpush1.bf16.msra.mxu0 %v3261
      %3731 = vmatprep.subr.bf16.mxu0 0
      %3732 = vmatpush1.bf16.msra.mxu0 %v3262
      %3733 = vmatprep.subr.bf16.mxu0 0
      %3734 = vmatpush1.bf16.msra.mxu0 %v3263
      %3735 = vmatprep.subr.bf16.mxu0 0
      %3736 = vmatpush1.bf16.msra.mxu0 %v3264
      %3737 = vmatprep.subr.bf16.mxu0 0
      %3738 = vmatpush1.bf16.msra.mxu0 %v3265
      %3739 = vmatprep.subr.bf16.mxu0 0
      %3740 = vmatpush1.bf16.msra.mxu0 %v3266
      %3741 = vmatprep.subr.bf16.mxu0 0
      %3742 = vmatpush1.bf16.msra.mxu0 %v3267
      %3743 = vmatprep.subr.bf16.mxu0 0
      %3744 = vmatpush1.bf16.msra.mxu0 %v3268
      %3745 = vmatprep.subr.bf16.mxu0 0
      %3746 = vmatpush1.bf16.msra.mxu0 %v3269
      %3747 = vmatprep.subr.bf16.mxu0 0
      %3748 = vmatpush1.bf16.msra.mxu0 %v3270
      %3749 = vmatprep.subr.bf16.mxu0 0
      %3750 = vmatpush1.bf16.msra.mxu0 %v3271
      %3751 = vmatprep.subr.bf16.mxu0 0
      %3752 = vmatpush1.bf16.msra.mxu0 %v3272
      %3753 = vmatprep.subr.bf16.mxu0 0
      %3754 = vmatpush1.bf16.msra.mxu0 %v3273
      %3755 = vmatprep.subr.bf16.mxu0 0
      %3756 = vmatpush1.bf16.msra.mxu0 %v3274
      %3757 = vmatprep.mubr.bf16.mxu0 %v2544
      %3758 = vmatmul.mubr.bf16.gmra.mrb[0].mxu0 %v2441
      %v3759 = vpop.f32.mrb[0].mxu0
      %v3760 = vadd.f32 %v3583, %v3759
      %v3761 = vpop.f32.mrb[0].mxu0
      %v3762 = vpop.f32.mrb[0].mxu0
      %v3763 = vadd.f32 %v3586, %v3762
      %v3764 = vpop.f32.mrb[0].mxu0
      %3765 = vmatprep.mubr.bf16.mxu0 %v2546
      %3766 = vmatmul.mubr.bf16.gmra.mrb[0].mxu0 %v2445
      %v3767 = vpop.f32.mrb[0].mxu0
      %v3768 = vadd.f32 %v3591, %v3767
      %v3769 = vpop.f32.mrb[0].mxu0
      %v3770 = vpop.f32.mrb[0].mxu0
      %v3771 = vadd.f32 %v3594, %v3770
      %v3772 = vpop.f32.mrb[0].mxu0
      %3773 = vmatprep.mubr.bf16.mxu0 %v2548
      %3774 = vmatmul.mubr.bf16.gmra.mrb[0].mxu0 %v2449
      %v3775 = vpop.f32.mrb[0].mxu0
      %v3776 = vadd.f32 %v3599, %v3775
      %v3777 = vpop.f32.mrb[0].mxu0
      %v3778 = vpop.f32.mrb[0].mxu0
      %v3779 = vadd.f32 %v3602, %v3778
      %v3780 = vpop.f32.mrb[0].mxu0
      %3781 = vmatprep.mubr.bf16.mxu0 %v2550
      %3782 = vmatmul.mubr.bf16.gmra.mrb[0].mxu0 %v2453
      %v3783 = vpop.f32.mrb[0].mxu0
      %v3784 = vadd.f32 %v3607, %v3783
      %v3785 = vpop.f32.mrb[0].mxu0
      %v3786 = vpop.f32.mrb[0].mxu0
      %v3787 = vadd.f32 %v3610, %v3786
      %v3788 = vpop.f32.mrb[0].mxu0
      %3789 = vmatprep.mubr.bf16.mxu0 %v2552
      %3790 = vmatmul.mubr.bf16.gmra.mrb[0].mxu0 %v2457
      %v3791 = vpop.f32.mrb[0].mxu0
      %v3792 = vadd.f32 %v3615, %v3791
      %v3793 = vpop.f32.mrb[0].mxu0
      %v3794 = vpop.f32.mrb[0].mxu0
      %v3795 = vadd.f32 %v3618, %v3794
      %v3796 = vpop.f32.mrb[0].mxu0
      %3797 = vmatprep.mubr.bf16.mxu0 %v2554
      %3798 = vmatmul.mubr.bf16.gmra.mrb[0].mxu0 %v2461
      %v3799 = vpop.f32.mrb[0].mxu0
      %v3800 = vadd.f32 %v3623, %v3799
      %v3801 = vpop.f32.mrb[0].mxu0
      %v3802 = vpop.f32.mrb[0].mxu0
      %v3803 = vadd.f32 %v3626, %v3802
      %v3804 = vpop.f32.mrb[0].mxu0
      %3805 = vmatprep.mubr.bf16.mxu0 %v2556
      %3806 = vmatmul.mubr.bf16.gmra.mrb[0].mxu0 %v2465
      %v3807 = vpop.f32.mrb[0].mxu0
      %v3808 = vadd.f32 %v3631, %v3807
      %v3809 = vpop.f32.mrb[0].mxu0
      %v3810 = vpop.f32.mrb[0].mxu0
      %v3811 = vadd.f32 %v3634, %v3810
      %v3812 = vpop.f32.mrb[0].mxu0
      %3813 = vmatprep.mubr.bf16.mxu0 %v2558
      %3814 = vmatmul.mubr.bf16.gmra.mrb[0].mxu0 %v2469
      %v3815 = vpop.f32.mrb[0].mxu0
      %v3816 = vadd.f32 %v3639, %v3815
      %v3817 = vpop.f32.mrb[0].mxu0
      %v3818 = vpop.f32.mrb[0].mxu0
      %v3819 = vadd.f32 %v3642, %v3818
      %v3820 = vpop.f32.mrb[0].mxu0
      %3821 = vmatprep.mubr.bf16.mxu0 %v2560
      %3822 = vmatmul.mubr.bf16.gmra.mrb[0].mxu0 %v2473
      %v3823 = vpop.f32.mrb[0].mxu0
      %v3824 = vadd.f32 %v3647, %v3823
      %v3825 = vpop.f32.mrb[0].mxu0
      %v3826 = vpop.f32.mrb[0].mxu0
      %v3827 = vadd.f32 %v3650, %v3826
      %v3828 = vpop.f32.mrb[0].mxu0
      %3829 = vmatprep.mubr.bf16.mxu0 %v2562
      %3830 = vmatmul.mubr.bf16.gmra.mrb[0].mxu0 %v2477
      %v3831 = vpop.f32.mrb[0].mxu0
      %v3832 = vadd.f32 %v3655, %v3831
      %v3833 = vpop.f32.mrb[0].mxu0
      %v3834 = vpop.f32.mrb[0].mxu0
      %v3835 = vadd.f32 %v3658, %v3834
      %v3836 = vpop.f32.mrb[0].mxu0
      %3837 = vmatprep.mubr.bf16.mxu0 %v2564
      %3838 = vmatmul.mubr.bf16.gmra.mrb[0].mxu0 %v2481
      %v3839 = vpop.f32.mrb[0].mxu0
      %v3840 = vadd.f32 %v3663, %v3839
      %v3841 = vpop.f32.mrb[0].mxu0
      %v3842 = vpop.f32.mrb[0].mxu0
      %v3843 = vadd.f32 %v3666, %v3842
      %v3844 = vpop.f32.mrb[0].mxu0
      %3845 = vmatprep.mubr.bf16.mxu0 %v2566
      %3846 = vmatmul.mubr.bf16.gmra.mrb[0].mxu0 %v2485
      %v3847 = vpop.f32.mrb[0].mxu0
      %v3848 = vadd.f32 %v3671, %v3847
      %v3849 = vpop.f32.mrb[0].mxu0
      %v3850 = vpop.f32.mrb[0].mxu0
      %v3851 = vadd.f32 %v3674, %v3850
      %v3852 = vpop.f32.mrb[0].mxu0
      %3853 = vmatprep.mubr.bf16.mxu0 %v2568
      %3854 = vmatmul.mubr.bf16.gmra.mrb[0].mxu0 %v2489
      %v3855 = vpop.f32.mrb[0].mxu0
      %v3856 = vadd.f32 %v3679, %v3855
      %v3857 = vpop.f32.mrb[0].mxu0
      %v3858 = vpop.f32.mrb[0].mxu0
      %v3859 = vadd.f32 %v3682, %v3858
      %v3860 = vpop.f32.mrb[0].mxu0
      %3861 = vmatprep.mubr.bf16.mxu0 %v2570
      %3862 = vmatmul.mubr.bf16.gmra.mrb[0].mxu0 %v2493
      %v3863 = vpop.f32.mrb[0].mxu0
      %v3864 = vadd.f32 %v3687, %v3863
      %v3865 = vpop.f32.mrb[0].mxu0
      %v3866 = vpop.f32.mrb[0].mxu0
      %v3867 = vadd.f32 %v3690, %v3866
      %v3868 = vpop.f32.mrb[0].mxu0
      %3869 = vmatprep.mubr.bf16.mxu0 %v2572
      %3870 = vmatmul.mubr.bf16.gmra.mrb[0].mxu0 %v2497
      %v3871 = vpop.f32.mrb[0].mxu0
      %v3872 = vadd.f32 %v3695, %v3871
      %v3873 = vpop.f32.mrb[0].mxu0
      %v3874 = vpop.f32.mrb[0].mxu0
      %v3875 = vadd.f32 %v3698, %v3874
      %v3876 = vpop.f32.mrb[0].mxu0
      %3877 = vmatprep.mubr.bf16.mxu0 %v2574
      %3878 = vmatmul.mubr.bf16.gmra.mrb[0].mxu0 %v2501
      %v3879 = vpop.f32.mrb[0].mxu0
      %v3880 = vadd.f32 %v3703, %v3879
      %v3881 = vpop.f32.mrb[0].mxu0
      %v3882 = vpop.f32.mrb[0].mxu0
      %v3883 = vadd.f32 %v3706, %v3882
      %v3884 = vpop.f32.mrb[0].mxu0
      %3885 = vmatprep.mubr.bf16.mxu0 %v2576
      %3886 = vmatmul.mubr.bf16.gmra.mrb[0].mxu0 %v2510
      %v3887 = vpop.f32.mrb[0].mxu0
      %v3888 = vadd.f32 %v3711, %v3887
      %v3889 = vpop.f32.mrb[0].mxu0
      %v3890 = vpop.f32.mrb[0].mxu0
      %v3891 = vadd.f32 %v3714, %v3890
      %v3892 = vpop.f32.mrb[0].mxu0
      %3893 = vmatprep.mubr.bf16.mxu0 %v2578
      %3894 = vmatmul.mubr.bf16.gmra.mrb[0].mxu0 %v2519
      %v3895 = vpop.f32.mrb[0].mxu0
      %v3896 = vadd.f32 %v3719, %v3895
      %v3897 = vpop.f32.mrb[0].mxu0
      %v3898 = vpop.f32.mrb[0].mxu0
      %v3899 = vadd.f32 %v3722, %v3898
      %v3900 = vpop.f32.mrb[0].mxu0
      %3901 = vdwg.mxu0
      %3902 = vmatprep.subr.bf16.mxu0 0
      %3903 = vmatpush1.bf16.msra.mxu0 %v3275
      %3904 = vmatprep.subr.bf16.mxu0 0
      %3905 = vmatpush1.bf16.msra.mxu0 %v3276
      %3906 = vmatprep.subr.bf16.mxu0 0
      %3907 = vmatpush1.bf16.msra.mxu0 %v3277
      %3908 = vmatprep.subr.bf16.mxu0 0
      %3909 = vmatpush1.bf16.msra.mxu0 %v3278
      %3910 = vmatprep.subr.bf16.mxu0 0
      %3911 = vmatpush1.bf16.msra.mxu0 %v3279
      %3912 = vmatprep.subr.bf16.mxu0 0
      %3913 = vmatpush1.bf16.msra.mxu0 %v3280
      %3914 = vmatprep.subr.bf16.mxu0 0
      %3915 = vmatpush1.bf16.msra.mxu0 %v3281
      %3916 = vmatprep.subr.bf16.mxu0 0
      %3917 = vmatpush1.bf16.msra.mxu0 %v3282
      %3918 = vmatprep.subr.bf16.mxu0 0
      %3919 = vmatpush1.bf16.msra.mxu0 %v3283
      %3920 = vmatprep.subr.bf16.mxu0 0
      %3921 = vmatpush1.bf16.msra.mxu0 %v3284
      %3922 = vmatprep.subr.bf16.mxu0 0
      %3923 = vmatpush1.bf16.msra.mxu0 %v3285
      %3924 = vmatprep.subr.bf16.mxu0 0
      %3925 = vmatpush1.bf16.msra.mxu0 %v3286
      %3926 = vmatprep.subr.bf16.mxu0 0
      %3927 = vmatpush1.bf16.msra.mxu0 %v3287
      %3928 = vmatprep.subr.bf16.mxu0 0
      %3929 = vmatpush1.bf16.msra.mxu0 %v3288
      %3930 = vmatprep.subr.bf16.mxu0 0
      %3931 = vmatpush1.bf16.msra.mxu0 %v3289
      %3932 = vmatprep.subr.bf16.mxu0 0
      %3933 = vmatpush1.bf16.msra.mxu0 %v3290
      %3934 = vmatprep.mubr.bf16.mxu0 %v2632
      %3935 = vmatmul.mubr.bf16.gmra.mrb[0].mxu0 %v2609
      %v3936 = vpop.f32.mrb[0].mxu0
      %v3937 = vadd.f32 %v3760, %v3936
      %v3938 = vpop.f32.mrb[0].mxu0
      %v3939 = vpop.f32.mrb[0].mxu0
      %v3940 = vadd.f32 %v3763, %v3939
      %v3941 = vpop.f32.mrb[0].mxu0
      %3942 = vmatprep.mubr.bf16.mxu0 %v2636
      %3943 = vmatmul.mubr.bf16.gmra.mrb[0].mxu0 %v2548
      %v3944 = vpop.f32.mrb[0].mxu0
      %v3945 = vadd.f32 %v3768, %v3944
      %v3946 = vpop.f32.mrb[0].mxu0
      %v3947 = vpop.f32.mrb[0].mxu0
      %v3948 = vadd.f32 %v3771, %v3947
      %v3949 = vpop.f32.mrb[0].mxu0
      %3950 = vmatprep.mubr.bf16.mxu0 %v2640
      %3951 = vmatmul.mubr.bf16.gmra.mrb[0].mxu0 %v2550
      %v3952 = vpop.f32.mrb[0].mxu0
      %v3953 = vadd.f32 %v3776, %v3952
      %v3954 = vpop.f32.mrb[0].mxu0
      %v3955 = vpop.f32.mrb[0].mxu0
      %v3956 = vadd.f32 %v3779, %v3955
      %v3957 = vpop.f32.mrb[0].mxu0
      %3958 = vmatprep.mubr.bf16.mxu0 %v2644
      %3959 = vmatmul.mubr.bf16.gmra.mrb[0].mxu0 %v2552
      %v3960 = vpop.f32.mrb[0].mxu0
      %v3961 = vadd.f32 %v3784, %v3960
      %v3962 = vpop.f32.mrb[0].mxu0
      %v3963 = vpop.f32.mrb[0].mxu0
      %v3964 = vadd.f32 %v3787, %v3963
      %v3965 = vpop.f32.mrb[0].mxu0
      %3966 = vmatprep.mubr.bf16.mxu0 %v2648
      %3967 = vmatmul.mubr.bf16.gmra.mrb[0].mxu0 %v2554
      %v3968 = vpop.f32.mrb[0].mxu0
      %v3969 = vadd.f32 %v3792, %v3968
      %v3970 = vpop.f32.mrb[0].mxu0
      %v3971 = vpop.f32.mrb[0].mxu0
      %v3972 = vadd.f32 %v3795, %v3971
      %v3973 = vpop.f32.mrb[0].mxu0
      %3974 = vmatprep.mubr.bf16.mxu0 %v2652
      %3975 = vmatmul.mubr.bf16.gmra.mrb[0].mxu0 %v2556
      %v3976 = vpop.f32.mrb[0].mxu0
      %v3977 = vadd.f32 %v3800, %v3976
      %v3978 = vpop.f32.mrb[0].mxu0
      %v3979 = vpop.f32.mrb[0].mxu0
      %v3980 = vadd.f32 %v3803, %v3979
      %v3981 = vpop.f32.mrb[0].mxu0
      %3982 = vmatprep.mubr.bf16.mxu0 %v2656
      %3983 = vmatmul.mubr.bf16.gmra.mrb[0].mxu0 %v2558
      %v3984 = vpop.f32.mrb[0].mxu0
      %v3985 = vadd.f32 %v3808, %v3984
      %v3986 = vpop.f32.mrb[0].mxu0
      %v3987 = vpop.f32.mrb[0].mxu0
      %v3988 = vadd.f32 %v3811, %v3987
      %v3989 = vpop.f32.mrb[0].mxu0
      %3990 = vmatprep.mubr.bf16.mxu0 %v2660
      %3991 = vmatmul.mubr.bf16.gmra.mrb[0].mxu0 %v2560
      %v3992 = vpop.f32.mrb[0].mxu0
      %v3993 = vadd.f32 %v3816, %v3992
      %v3994 = vpop.f32.mrb[0].mxu0
      %v3995 = vpop.f32.mrb[0].mxu0
      %v3996 = vadd.f32 %v3819, %v3995
      %v3997 = vpop.f32.mrb[0].mxu0
      %3998 = vmatprep.mubr.bf16.mxu0 %v2664
      %3999 = vmatmul.mubr.bf16.gmra.mrb[0].mxu0 %v2562
      %v4000 = vpop.f32.mrb[0].mxu0
      %v4001 = vadd.f32 %v3824, %v4000
      %v4002 = vpop.f32.mrb[0].mxu0
      %v4003 = vpop.f32.mrb[0].mxu0
      %v4004 = vadd.f32 %v3827, %v4003
      %v4005 = vpop.f32.mrb[0].mxu0
      %4006 = vmatprep.mubr.bf16.mxu0 %v2668
      %4007 = vmatmul.mubr.bf16.gmra.mrb[0].mxu0 %v2564
      %v4008 = vpop.f32.mrb[0].mxu0
      %v4009 = vadd.f32 %v3832, %v4008
      %v4010 = vpop.f32.mrb[0].mxu0
      %v4011 = vpop.f32.mrb[0].mxu0
      %v4012 = vadd.f32 %v3835, %v4011
      %v4013 = vpop.f32.mrb[0].mxu0
      %4014 = vmatprep.mubr.bf16.mxu0 %v2672
      %4015 = vmatmul.mubr.bf16.gmra.mrb[0].mxu0 %v2566
      %v4016 = vpop.f32.mrb[0].mxu0
      %v4017 = vadd.f32 %v3840, %v4016
      %v4018 = vpop.f32.mrb[0].mxu0
      %v4019 = vpop.f32.mrb[0].mxu0
      %v4020 = vadd.f32 %v3843, %v4019
      %v4021 = vpop.f32.mrb[0].mxu0
      %4022 = vmatprep.mubr.bf16.mxu0 %v2676
      %4023 = vmatmul.mubr.bf16.gmra.mrb[0].mxu0 %v2568
      %v4024 = vpop.f32.mrb[0].mxu0
      %v4025 = vadd.f32 %v3848, %v4024
      %v4026 = vpop.f32.mrb[0].mxu0
      %v4027 = vpop.f32.mrb[0].mxu0
      %v4028 = vadd.f32 %v3851, %v4027
      %v4029 = vpop.f32.mrb[0].mxu0
      %4030 = vmatprep.mubr.bf16.mxu0 %v2680
      %4031 = vmatmul.mubr.bf16.gmra.mrb[0].mxu0 %v2570
      %v4032 = vpop.f32.mrb[0].mxu0
      %v4033 = vadd.f32 %v3856, %v4032
      %v4034 = vpop.f32.mrb[0].mxu0
      %v4035 = vpop.f32.mrb[0].mxu0
      %v4036 = vadd.f32 %v3859, %v4035
      %v4037 = vpop.f32.mrb[0].mxu0
      %4038 = vmatprep.mubr.bf16.mxu0 %v2684
      %4039 = vmatmul.mubr.bf16.gmra.mrb[0].mxu0 %v2572
      %v4040 = vpop.f32.mrb[0].mxu0
      %v4041 = vadd.f32 %v3864, %v4040
      %v4042 = vpop.f32.mrb[0].mxu0
      %v4043 = vpop.f32.mrb[0].mxu0
      %v4044 = vadd.f32 %v3867, %v4043
      %v4045 = vpop.f32.mrb[0].mxu0
      %4046 = vmatprep.mubr.bf16.mxu0 %v2688
      %4047 = vmatmul.mubr.bf16.gmra.mrb[0].mxu0 %v2574
      %v4048 = vpop.f32.mrb[0].mxu0
      %v4049 = vadd.f32 %v3872, %v4048
      %v4050 = vpop.f32.mrb[0].mxu0
      %v4051 = vpop.f32.mrb[0].mxu0
      %v4052 = vadd.f32 %v3875, %v4051
      %v4053 = vpop.f32.mrb[0].mxu0
      %4054 = vmatprep.mubr.bf16.mxu0 %v2692
      %4055 = vmatmul.mubr.bf16.gmra.mrb[0].mxu0 %v2576
      %v4056 = vpop.f32.mrb[0].mxu0
      %v4057 = vadd.f32 %v3880, %v4056
      %v4058 = vpop.f32.mrb[0].mxu0
      %v4059 = vpop.f32.mrb[0].mxu0
      %v4060 = vadd.f32 %v3883, %v4059
      %v4061 = vpop.f32.mrb[0].mxu0
      %4062 = vmatprep.mubr.bf16.mxu0 %v2701
      %4063 = vmatmul.mubr.bf16.gmra.mrb[0].mxu0 %v2611
      %v4064 = vpop.f32.mrb[0].mxu0
      %v4065 = vadd.f32 %v3888, %v4064
      %v4066 = vpop.f32.mrb[0].mxu0
      %v4067 = vpop.f32.mrb[0].mxu0
      %v4068 = vadd.f32 %v3891, %v4067
      %v4069 = vpop.f32.mrb[0].mxu0
      %4070 = vmatprep.mubr.bf16.mxu0 %v2710
      %4071 = vmatmul.mubr.bf16.gmra.mrb[0].mxu0 %v2613
      %v4072 = vpop.f32.mrb[0].mxu0
      %v4073 = vadd.f32 %v3896, %v4072
      %v4074 = vpop.f32.mrb[0].mxu0
      %v4075 = vpop.f32.mrb[0].mxu0
      %v4076 = vadd.f32 %v3899, %v4075
      %v4077 = vpop.f32.mrb[0].mxu0
      %4078 = vdwg.mxu0
      %4079 = vmatprep.subr.bf16.mxu0 0
      %4080 = vmatpush1.bf16.msra.mxu0 %v3291
      %4081 = vmatprep.subr.bf16.mxu0 0
      %4082 = vmatpush1.bf16.msra.mxu0 %v3292
      %4083 = vmatprep.subr.bf16.mxu0 0
      %4084 = vmatpush1.bf16.msra.mxu0 %v3293
      %4085 = vmatprep.subr.bf16.mxu0 0
      %4086 = vmatpush1.bf16.msra.mxu0 %v3294
      %4087 = vmatprep.subr.bf16.mxu0 0
      %4088 = vmatpush1.bf16.msra.mxu0 %v3295
      %4089 = vmatprep.subr.bf16.mxu0 0
      %4090 = vmatpush1.bf16.msra.mxu0 %v3296
      %4091 = vmatprep.subr.bf16.mxu0 0
      %4092 = vmatpush1.bf16.msra.mxu0 %v3297
      %4093 = vmatprep.subr.bf16.mxu0 0
      %4094 = vmatpush1.bf16.msra.mxu0 %v3298
      %4095 = vmatprep.subr.bf16.mxu0 0
      %4096 = vmatpush1.bf16.msra.mxu0 0
      %4097 = vmatprep.subr.bf16.mxu0 0
      %4098 = vmatpush1.bf16.msra.mxu0 0
      %4099 = vmatprep.subr.bf16.mxu0 0
      %4100 = vmatpush1.bf16.msra.mxu0 0
      %4101 = vmatprep.subr.bf16.mxu0 0
      %4102 = vmatpush1.bf16.msra.mxu0 0
      %4103 = vmatprep.subr.bf16.mxu0 0
      %4104 = vmatpush1.bf16.msra.mxu0 0
      %4105 = vmatprep.subr.bf16.mxu0 0
      %4106 = vmatpush1.bf16.msra.mxu0 0
      %4107 = vmatprep.subr.bf16.mxu0 0
      %4108 = vmatpush1.bf16.msra.mxu0 0
      %4109 = vmatprep.subr.bf16.mxu0 0
      %4110 = vmatpush1.bf16.msra.mxu0 0
      %4111 = vmatprep.mubr.bf16.mxu0 0
      %4112 = vmatmul.mubr.bf16.gmra.mrb[0].mxu0 %v2735
      %v4113 = vpop.f32.mrb[0].mxu0
      %v4114 = vadd.f32 %v3937, %v4113
      %v4115 = vpop.f32.mrb[0].mxu0
      %v4116 = vpop.f32.mrb[0].mxu0
      %v4117 = vadd.f32 %v3940, %v4116
      %v4118 = vpop.f32.mrb[0].mxu0
      %4119 = vmatprep.mubr.bf16.mxu0 0
      %4120 = vmatmul.mubr.bf16.gmra.mrb[0].mxu0 %v2737
      %v4121 = vpop.f32.mrb[0].mxu0
      %v4122 = vadd.f32 %v3945, %v4121
      %v4123 = vpop.f32.mrb[0].mxu0
      %v4124 = vpop.f32.mrb[0].mxu0
      %v4125 = vadd.f32 %v3948, %v4124
      %v4126 = vpop.f32.mrb[0].mxu0
      %4127 = vmatprep.mubr.bf16.mxu0 0
      %4128 = vmatmul.mubr.bf16.gmra.mrb[0].mxu0 %v2739
      %v4129 = vpop.f32.mrb[0].mxu0
      %v4130 = vadd.f32 %v3953, %v4129
      %v4131 = vpop.f32.mrb[0].mxu0
      %v4132 = vpop.f32.mrb[0].mxu0
      %v4133 = vadd.f32 %v3956, %v4132
      %v4134 = vpop.f32.mrb[0].mxu0
      %4135 = vmatprep.mubr.bf16.mxu0 0
      %4136 = vmatmul.mubr.bf16.gmra.mrb[0].mxu0 %v2741
      %v4137 = vpop.f32.mrb[0].mxu0
      %v4138 = vadd.f32 %v3961, %v4137
      %v4139 = vpop.f32.mrb[0].mxu0
      %v4140 = vpop.f32.mrb[0].mxu0
      %v4141 = vadd.f32 %v3964, %v4140
      %v4142 = vpop.f32.mrb[0].mxu0
      %4143 = vmatprep.mubr.bf16.mxu0 0
      %4144 = vmatmul.mubr.bf16.gmra.mrb[0].mxu0 %v2743
      %v4145 = vpop.f32.mrb[0].mxu0
      %v4146 = vadd.f32 %v3969, %v4145
      %v4147 = vpop.f32.mrb[0].mxu0
      %v4148 = vpop.f32.mrb[0].mxu0
      %v4149 = vadd.f32 %v3972, %v4148
      %v4150 = vpop.f32.mrb[0].mxu0
      %4151 = vmatprep.mubr.bf16.mxu0 0
      %4152 = vmatmul.mubr.bf16.gmra.mrb[0].mxu0 %v2745
      %v4153 = vpop.f32.mrb[0].mxu0
      %v4154 = vadd.f32 %v3977, %v4153
      %v4155 = vpop.f32.mrb[0].mxu0
      %v4156 = vpop.f32.mrb[0].mxu0
      %v4157 = vadd.f32 %v3980, %v4156
      %v4158 = vpop.f32.mrb[0].mxu0
      %4159 = vmatprep.mubr.bf16.mxu0 0
      %4160 = vmatmul.mubr.bf16.gmra.mrb[0].mxu0 %v2747
      %v4161 = vpop.f32.mrb[0].mxu0
      %v4162 = vadd.f32 %v3985, %v4161
      %v4163 = vpop.f32.mrb[0].mxu0
      %v4164 = vpop.f32.mrb[0].mxu0
      %v4165 = vadd.f32 %v3988, %v4164
      %v4166 = vpop.f32.mrb[0].mxu0
      %4167 = vmatprep.mubr.bf16.mxu0 0
      %4168 = vmatmul.mubr.bf16.gmra.mrb[0].mxu0 %v2749
      %v4169 = vpop.f32.mrb[0].mxu0
      %v4170 = vadd.f32 %v3993, %v4169
      %v4171 = vpop.f32.mrb[0].mxu0
      %v4172 = vpop.f32.mrb[0].mxu0
      %v4173 = vadd.f32 %v3996, %v4172
      %v4174 = vpop.f32.mrb[0].mxu0
      %4175 = vmatprep.mubr.bf16.mxu0 0
      %4176 = vmatmul.mubr.bf16.gmra.mrb[0].mxu0 %v2751
      %v4177 = vpop.f32.mrb[0].mxu0
      %v4178 = vadd.f32 %v4001, %v4177
      %v4179 = vpop.f32.mrb[0].mxu0
      %v4180 = vpop.f32.mrb[0].mxu0
      %v4181 = vadd.f32 %v4004, %v4180
      %v4182 = vpop.f32.mrb[0].mxu0
      %4183 = vmatprep.mubr.bf16.mxu0 0
      %4184 = vmatmul.mubr.bf16.gmra.mrb[0].mxu0 %v2753
      %v4185 = vpop.f32.mrb[0].mxu0
      %v4186 = vadd.f32 %v4009, %v4185
      %v4187 = vpop.f32.mrb[0].mxu0
      %v4188 = vpop.f32.mrb[0].mxu0
      %v4189 = vadd.f32 %v4012, %v4188
      %v4190 = vpop.f32.mrb[0].mxu0
      %4191 = vmatprep.mubr.bf16.mxu0 0
      %4192 = vmatmul.mubr.bf16.gmra.mrb[0].mxu0 %v2755
      %v4193 = vpop.f32.mrb[0].mxu0
      %v4194 = vadd.f32 %v4017, %v4193
      %v4195 = vpop.f32.mrb[0].mxu0
      %v4196 = vpop.f32.mrb[0].mxu0
      %v4197 = vadd.f32 %v4020, %v4196
      %v4198 = vpop.f32.mrb[0].mxu0
      %4199 = vmatprep.mubr.bf16.mxu0 0
      %4200 = vmatmul.mubr.bf16.gmra.mrb[0].mxu0 %v2757
      %v4201 = vpop.f32.mrb[0].mxu0
      %v4202 = vadd.f32 %v4025, %v4201
      %v4203 = vpop.f32.mrb[0].mxu0
      %v4204 = vpop.f32.mrb[0].mxu0
      %v4205 = vadd.f32 %v4028, %v4204
      %v4206 = vpop.f32.mrb[0].mxu0
      %4207 = vmatprep.mubr.bf16.mxu0 0
      %4208 = vmatmul.mubr.bf16.gmra.mrb[0].mxu0 %v2759
      %v4209 = vpop.f32.mrb[0].mxu0
      %v4210 = vadd.f32 %v4033, %v4209
      %v4211 = vpop.f32.mrb[0].mxu0
      %v4212 = vpop.f32.mrb[0].mxu0
      %v4213 = vadd.f32 %v4036, %v4212
      %v4214 = vpop.f32.mrb[0].mxu0
      %4215 = vmatprep.mubr.bf16.mxu0 0
      %4216 = vmatmul.mubr.bf16.gmra.mrb[0].mxu0 %v2761
      %v4217 = vpop.f32.mrb[0].mxu0
      %v4218 = vadd.f32 %v4041, %v4217
      %v4219 = vpop.f32.mrb[0].mxu0
      %v4220 = vpop.f32.mrb[0].mxu0
      %v4221 = vadd.f32 %v4044, %v4220
      %v4222 = vpop.f32.mrb[0].mxu0
      %4223 = vmatprep.mubr.bf16.mxu0 0
      %4224 = vmatmul.mubr.bf16.gmra.mrb[0].mxu0 %v2763
      %v4225 = vpop.f32.mrb[0].mxu0
      %v4226 = vadd.f32 %v4049, %v4225
      %v4227 = vpop.f32.mrb[0].mxu0
      %v4228 = vpop.f32.mrb[0].mxu0
      %v4229 = vadd.f32 %v4052, %v4228
      %v4230 = vpop.f32.mrb[0].mxu0
      %4231 = vmatprep.mubr.bf16.mxu0 0
      %4232 = vmatmul.mubr.bf16.gmra.mrb[0].mxu0 %v2765
      %v4233 = vpop.f32.mrb[0].mxu0
      %v4234 = vadd.f32 %v4057, %v4233
      %v4235 = vpop.f32.mrb[0].mxu0
      %v4236 = vpop.f32.mrb[0].mxu0
      %v4237 = vadd.f32 %v4060, %v4236
      %v4238 = vpop.f32.mrb[0].mxu0
      %4239 = vmatprep.mubr.bf16.mxu0 0
      %4240 = vmatmul.mubr.bf16.gmra.mrb[0].mxu0 %v2767
      %v4241 = vpop.f32.mrb[0].mxu0
      %v4242 = vadd.f32 %v4065, %v4241
      %v4243 = vpop.f32.mrb[0].mxu0
      %v4244 = vpop.f32.mrb[0].mxu0
      %v4245 = vadd.f32 %v4068, %v4244
      %v4246 = vpop.f32.mrb[0].mxu0
      %4247 = vmatprep.mubr.bf16.mxu0 0
      %4248 = vmatmul.mubr.bf16.gmra.mrb[0].mxu0 %v2769
      %v4249 = vpop.f32.mrb[0].mxu0
      %v4250 = vadd.f32 %v4073, %v4249
      %v4251 = vpop.f32.mrb[0].mxu0
      %v4252 = vpop.f32.mrb[0].mxu0
      %v4253 = vadd.f32 %v4076, %v4252
      %v4254 = vpop.f32.mrb[0].mxu0
      %4255 = vdwg.mxu0
      %v4256 = vmax.f32 %v4114, 0.0
      %v4257 = vmax.f32 %v4117, 0.0
      %v4258 = vmax.f32 %v4122, 0.0
      %v4259 = vmax.f32 %v4125, 0.0
      %v4260 = vmax.f32 %v4130, 0.0
      %v4261 = vmax.f32 %v4133, 0.0
      %v4262 = vmax.f32 %v4138, 0.0
      %v4263 = vmax.f32 %v4141, 0.0
      %v4264 = vmax.f32 %v4146, 0.0
      %v4265 = vmax.f32 %v4149, 0.0
      %v4266 = vmax.f32 %v4154, 0.0
      %v4267 = vmax.f32 %v4157, 0.0
      %v4268 = vmax.f32 %v4162, 0.0
      %v4269 = vmax.f32 %v4165, 0.0
      %v4270 = vmax.f32 %v4170, 0.0
      %v4271 = vmax.f32 %v4173, 0.0
      %v4272 = vmax.f32 %v4178, 0.0
      %v4273 = vmax.f32 %v4181, 0.0
      %v4274 = vmax.f32 %v4186, 0.0
      %v4275 = vmax.f32 %v4189, 0.0
      %v4276 = vmax.f32 %v4194, 0.0
      %v4277 = vmax.f32 %v4197, 0.0
      %v4278 = vmax.f32 %v4202, 0.0
      %v4279 = vmax.f32 %v4205, 0.0
      %v4280 = vmax.f32 %v4210, 0.0
      %v4281 = vmax.f32 %v4213, 0.0
      %v4282 = vmax.f32 %v4218, 0.0
      %v4283 = vmax.f32 %v4221, 0.0
      %v4284 = vmax.f32 %v4226, 0.0
      %v4285 = vmax.f32 %v4229, 0.0
      %v4286 = vmax.f32 %v4234, 0.0
      %v4287 = vmax.f32 %v4237, 0.0
      %v4288 = vmax.f32 %v4242, 0.0
      %v4289 = vmax.f32 %v4245, 0.0
      %v4290 = vmax.f32 %v4250, 0.0
      %v4291 = vmax.f32 %v4253, 0.0
      %v4292 = vld [vmem:[%s295] sm:$0x1]
      %v4294 = vlaneseq
      %v4295 = vshrl.u32 %v4294, 7
      %v4296 = vsub.s32 0, %v4295
      %v4297 = vrot.slane %v4292, %v4296
      %v4299 = vadd.f32 %v4256, %v4297
      %v4300 = vadd.f32 %v4257, %v4297
      %v4301 = vadd.f32 %v4258, %v4297
      %v4302 = vadd.f32 %v4259, %v4297
      %v4303 = vadd.f32 %v4260, %v4297
      %v4304 = vadd.f32 %v4261, %v4297
      %v4305 = vadd.f32 %v4262, %v4297
      %v4306 = vadd.f32 %v4263, %v4297
      %v4307 = vadd.f32 %v4264, %v4297
      %v4308 = vadd.f32 %v4265, %v4297
      %v4309 = vadd.f32 %v4266, %v4297
      %v4310 = vadd.f32 %v4267, %v4297
      %v4311 = vadd.f32 %v4268, %v4297
      %v4312 = vadd.f32 %v4269, %v4297
      %v4313 = vadd.f32 %v4270, %v4297
      %v4314 = vadd.f32 %v4271, %v4297
      %v4315 = vadd.f32 %v4272, %v4297
      %v4316 = vadd.f32 %v4273, %v4297
      %v4317 = vadd.f32 %v4274, %v4297
      %v4318 = vadd.f32 %v4275, %v4297
      %v4319 = vadd.f32 %v4276, %v4297
      %v4320 = vadd.f32 %v4277, %v4297
      %v4321 = vadd.f32 %v4278, %v4297
      %v4322 = vadd.f32 %v4279, %v4297
      %v4323 = vadd.f32 %v4280, %v4297
      %v4324 = vadd.f32 %v4281, %v4297
      %v4325 = vadd.f32 %v4282, %v4297
      %v4326 = vadd.f32 %v4283, %v4297
      %v4327 = vadd.f32 %v4284, %v4297
      %v4328 = vadd.f32 %v4285, %v4297
      %v4329 = vadd.f32 %v4286, %v4297
      %v4330 = vadd.f32 %v4287, %v4297
      %v4331 = vadd.f32 %v4288, %v4297
      %v4332 = vadd.f32 %v4289, %v4297
      %v4333 = vadd.f32 %v4290, %v4297
      %v4334 = vadd.f32 %v4291, %v4297
      %v4371 = vcombine.high %v4299, %v4299
      %v4373 = vunpack.c.l.s4 1983009808
      %v4374 = vunpack.c.0.s8 %v4373
      %v4375 = vlaneseq
      %v4376 = vshrl.u32 %v4375, 7
      %v4377 = vsub.s32 %v4374, %v4376
      %v4378 = vrot.slane %v4299, %v4377
      %v4380 = vunpack.c.l.s4 1983009808
      %v4381 = vunpack.c.0.s8 %v4380
      %v4382 = vlaneseq
      %v4383 = vshrl.u32 %v4382, 7
      %v4384 = vsub.s32 %v4381, %v4383
      %v4385 = vrot.slane %v4371, %v4384
      %v4386 = vcombine.high %v4378, %v4378
      %v4387 = vcombine.high %v4385, %v4385
      %v4388 = vcombine.high %v4300, %v4300
      %v4390 = vunpack.c.l.s4 1983009808
      %v4391 = vunpack.c.0.s8 %v4390
      %v4392 = vlaneseq
      %v4393 = vshrl.u32 %v4392, 7
      %v4394 = vsub.s32 %v4391, %v4393
      %v4395 = vrot.slane %v4300, %v4394
      %v4397 = vunpack.c.l.s4 1983009808
      %v4398 = vunpack.c.0.s8 %v4397
      %v4399 = vlaneseq
      %v4400 = vshrl.u32 %v4399, 7
      %v4401 = vsub.s32 %v4398, %v4400
      %v4402 = vrot.slane %v4388, %v4401
      %v4403 = vcombine.high %v4395, %v4395
      %v4404 = vcombine.high %v4402, %v4402
      %v4405 = vcombine.high %v4301, %v4301
      %v4407 = vunpack.c.l.s4 1983009808
      %v4408 = vunpack.c.0.s8 %v4407
      %v4409 = vlaneseq
      %v4410 = vshrl.u32 %v4409, 7
      %v4411 = vsub.s32 %v4408, %v4410
      %v4412 = vrot.slane %v4301, %v4411
      %v4414 = vunpack.c.l.s4 1983009808
      %v4415 = vunpack.c.0.s8 %v4414
      %v4416 = vlaneseq
      %v4417 = vshrl.u32 %v4416, 7
      %v4418 = vsub.s32 %v4415, %v4417
      %v4419 = vrot.slane %v4405, %v4418
      %v4420 = vcombine.high %v4412, %v4412
      %v4421 = vcombine.high %v4419, %v4419
      %v4422 = vcombine.high %v4302, %v4302
      %v4424 = vunpack.c.l.s4 1983009808
      %v4425 = vunpack.c.0.s8 %v4424
      %v4426 = vlaneseq
      %v4427 = vshrl.u32 %v4426, 7
      %v4428 = vsub.s32 %v4425, %v4427
      %v4429 = vrot.slane %v4302, %v4428
      %v4431 = vunpack.c.l.s4 1983009808
      %v4432 = vunpack.c.0.s8 %v4431
      %v4433 = vlaneseq
      %v4434 = vshrl.u32 %v4433, 7
      %v4435 = vsub.s32 %v4432, %v4434
      %v4436 = vrot.slane %v4422, %v4435
      %v4437 = vcombine.high %v4429, %v4429
      %v4438 = vcombine.high %v4436, %v4436
      %v4439 = vcombine.high %v4303, %v4303
      %v4441 = vunpack.c.l.s4 1983009808
      %v4442 = vunpack.c.0.s8 %v4441
      %v4443 = vlaneseq
      %v4444 = vshrl.u32 %v4443, 7
      %v4445 = vsub.s32 %v4442, %v4444
      %v4446 = vrot.slane %v4303, %v4445
      %v4448 = vunpack.c.l.s4 1983009808
      %v4449 = vunpack.c.0.s8 %v4448
      %v4450 = vlaneseq
      %v4451 = vshrl.u32 %v4450, 7
      %v4452 = vsub.s32 %v4449, %v4451
      %v4453 = vrot.slane %v4439, %v4452
      %v4454 = vcombine.high %v4453, %v4453
      %v4455 = vcombine.high %v4304, %v4304
      %v4457 = vunpack.c.l.s4 1983009808
      %v4458 = vunpack.c.0.s8 %v4457
      %v4459 = vlaneseq
      %v4460 = vshrl.u32 %v4459, 7
      %v4461 = vsub.s32 %v4458, %v4460
      %v4462 = vrot.slane %v4304, %v4461
      %v4464 = vunpack.c.l.s4 1983009808
      %v4465 = vunpack.c.0.s8 %v4464
      %v4466 = vlaneseq
      %v4467 = vshrl.u32 %v4466, 7
      %v4468 = vsub.s32 %v4465, %v4467
      %v4469 = vrot.slane %v4455, %v4468
      %v4470 = vcombine.high %v4462, %v4462
      %v4471 = vcombine.high %v4469, %v4469
      %v4472 = vcombine.high %v4305, %v4305
      %v4474 = vunpack.c.l.s4 1983009808
      %v4475 = vunpack.c.0.s8 %v4474
      %v4476 = vlaneseq
      %v4477 = vshrl.u32 %v4476, 7
      %v4478 = vsub.s32 %v4475, %v4477
      %v4479 = vrot.slane %v4305, %v4478
      %v4481 = vunpack.c.l.s4 1983009808
      %v4482 = vunpack.c.0.s8 %v4481
      %v4483 = vlaneseq
      %v4484 = vshrl.u32 %v4483, 7
      %v4485 = vsub.s32 %v4482, %v4484
      %v4486 = vrot.slane %v4472, %v4485
      %v4487 = vcombine.high %v4479, %v4479
      %v4488 = vcombine.high %v4486, %v4486
      %v4489 = vcombine.high %v4306, %v4306
      %v4491 = vunpack.c.l.s4 1983009808
      %v4492 = vunpack.c.0.s8 %v4491
      %v4493 = vlaneseq
      %v4494 = vshrl.u32 %v4493, 7
      %v4495 = vsub.s32 %v4492, %v4494
      %v4496 = vrot.slane %v4306, %v4495
      %v4498 = vunpack.c.l.s4 1983009808
      %v4499 = vunpack.c.0.s8 %v4498
      %v4500 = vlaneseq
      %v4501 = vshrl.u32 %v4500, 7
      %v4502 = vsub.s32 %v4499, %v4501
      %v4503 = vrot.slane %v4489, %v4502
      %v4504 = vcombine.high %v4496, %v4496
      %v4505 = vcombine.high %v4503, %v4503
      %v4506 = vcombine.high %v4307, %v4307
      %v4508 = vunpack.c.l.s4 1983009808
      %v4509 = vunpack.c.0.s8 %v4508
      %v4510 = vlaneseq
      %v4511 = vshrl.u32 %v4510, 7
      %v4512 = vsub.s32 %v4509, %v4511
      %v4513 = vrot.slane %v4307, %v4512
      %v4515 = vunpack.c.l.s4 1983009808
      %v4516 = vunpack.c.0.s8 %v4515
      %v4517 = vlaneseq
      %v4518 = vshrl.u32 %v4517, 7
      %v4519 = vsub.s32 %v4516, %v4518
      %v4520 = vrot.slane %v4506, %v4519
      %v4521 = vcombine.high %v4513, %v4513
      %v4522 = vcombine.high %v4308, %v4308
      %v4524 = vunpack.c.l.s4 1983009808
      %v4525 = vunpack.c.0.s8 %v4524
      %v4526 = vlaneseq
      %v4527 = vshrl.u32 %v4526, 7
      %v4528 = vsub.s32 %v4525, %v4527
      %v4529 = vrot.slane %v4308, %v4528
      %v4531 = vunpack.c.l.s4 1983009808
      %v4532 = vunpack.c.0.s8 %v4531
      %v4533 = vlaneseq
      %v4534 = vshrl.u32 %v4533, 7
      %v4535 = vsub.s32 %v4532, %v4534
      %v4536 = vrot.slane %v4522, %v4535
      %v4537 = vcombine.high %v4529, %v4529
      %v4538 = vcombine.high %v4536, %v4536
      %v4539 = vcombine.high %v4309, %v4309
      %v4541 = vunpack.c.l.s4 1983009808
      %v4542 = vunpack.c.0.s8 %v4541
      %v4543 = vlaneseq
      %v4544 = vshrl.u32 %v4543, 7
      %v4545 = vsub.s32 %v4542, %v4544
      %v4546 = vrot.slane %v4309, %v4545
      %v4548 = vunpack.c.l.s4 1983009808
      %v4549 = vunpack.c.0.s8 %v4548
      %v4550 = vlaneseq
      %v4551 = vshrl.u32 %v4550, 7
      %v4552 = vsub.s32 %v4549, %v4551
      %v4553 = vrot.slane %v4539, %v4552
      %v4554 = vcombine.high %v4546, %v4546
      %v4555 = vcombine.high %v4553, %v4553
      %v4556 = vcombine.high %v4310, %v4310
      %v4558 = vunpack.c.l.s4 1983009808
      %v4559 = vunpack.c.0.s8 %v4558
      %v4560 = vlaneseq
      %v4561 = vshrl.u32 %v4560, 7
      %v4562 = vsub.s32 %v4559, %v4561
      %v4563 = vrot.slane %v4310, %v4562
      %v4565 = vunpack.c.l.s4 1983009808
      %v4566 = vunpack.c.0.s8 %v4565
      %v4567 = vlaneseq
      %v4568 = vshrl.u32 %v4567, 7
      %v4569 = vsub.s32 %v4566, %v4568
      %v4570 = vrot.slane %v4556, %v4569
      %v4571 = vcombine.high %v4563, %v4563
      %v4572 = vcombine.high %v4570, %v4570
      %v4573 = vcombine.high %v4311, %v4311
      %v4575 = vunpack.c.l.s4 1983009808
      %v4576 = vunpack.c.0.s8 %v4575
      %v4577 = vlaneseq
      %v4578 = vshrl.u32 %v4577, 7
      %v4579 = vsub.s32 %v4576, %v4578
      %v4580 = vrot.slane %v4311, %v4579
      %v4582 = vunpack.c.l.s4 1983009808
      %v4583 = vunpack.c.0.s8 %v4582
      %v4584 = vlaneseq
      %v4585 = vshrl.u32 %v4584, 7
      %v4586 = vsub.s32 %v4583, %v4585
      %v4587 = vrot.slane %v4573, %v4586
      %v4588 = vcombine.high %v4580, %v4580
      %v4589 = vcombine.high %v4587, %v4587
      %v4590 = vcombine.high %v4312, %v4312
      %v4592 = vunpack.c.l.s4 1983009808
      %v4593 = vunpack.c.0.s8 %v4592
      %v4594 = vlaneseq
      %v4595 = vshrl.u32 %v4594, 7
      %v4596 = vsub.s32 %v4593, %v4595
      %v4597 = vrot.slane %v4312, %v4596
      %v4599 = vunpack.c.l.s4 1983009808
      %v4600 = vunpack.c.0.s8 %v4599
      %v4601 = vlaneseq
      %v4602 = vshrl.u32 %v4601, 7
      %v4603 = vsub.s32 %v4600, %v4602
      %v4604 = vrot.slane %v4590, %v4603
      %v4605 = vcombine.high %v4604, %v4604
      %v4606 = vcombine.high %v4313, %v4313
      %v4608 = vunpack.c.l.s4 1983009808
      %v4609 = vunpack.c.0.s8 %v4608
      %v4610 = vlaneseq
      %v4611 = vshrl.u32 %v4610, 7
      %v4612 = vsub.s32 %v4609, %v4611
      %v4613 = vrot.slane %v4313, %v4612
      %v4615 = vunpack.c.l.s4 1983009808
      %v4616 = vunpack.c.0.s8 %v4615
      %v4617 = vlaneseq
      %v4618 = vshrl.u32 %v4617, 7
      %v4619 = vsub.s32 %v4616, %v4618
      %v4620 = vrot.slane %v4606, %v4619
      %v4621 = vcombine.high %v4613, %v4613
      %v4622 = vcombine.high %v4620, %v4620
      %v4623 = vcombine.high %v4314, %v4314
      %v4625 = vunpack.c.l.s4 1983009808
      %v4626 = vunpack.c.0.s8 %v4625
      %v4627 = vlaneseq
      %v4628 = vshrl.u32 %v4627, 7
      %v4629 = vsub.s32 %v4626, %v4628
      %v4630 = vrot.slane %v4314, %v4629
      %v4632 = vunpack.c.l.s4 1983009808
      %v4633 = vunpack.c.0.s8 %v4632
      %v4634 = vlaneseq
      %v4635 = vshrl.u32 %v4634, 7
      %v4636 = vsub.s32 %v4633, %v4635
      %v4637 = vrot.slane %v4623, %v4636
      %v4638 = vcombine.high %v4630, %v4630
      %v4639 = vcombine.high %v4637, %v4637
      %v4640 = vcombine.high %v4315, %v4315
      %v4642 = vunpack.c.l.s4 1983009808
      %v4643 = vunpack.c.0.s8 %v4642
      %v4644 = vlaneseq
      %v4645 = vshrl.u32 %v4644, 7
      %v4646 = vsub.s32 %v4643, %v4645
      %v4647 = vrot.slane %v4315, %v4646
      %v4649 = vunpack.c.l.s4 1983009808
      %v4650 = vunpack.c.0.s8 %v4649
      %v4651 = vlaneseq
      %v4652 = vshrl.u32 %v4651, 7
      %v4653 = vsub.s32 %v4650, %v4652
      %v4654 = vrot.slane %v4640, %v4653
      %v4655 = vcombine.high %v4647, %v4647
      %v4656 = vcombine.high %v4654, %v4654
      %v4657 = vcombine.high %v4316, %v4316
      %v4659 = vunpack.c.l.s4 1983009808
      %v4660 = vunpack.c.0.s8 %v4659
      %v4661 = vlaneseq
      %v4662 = vshrl.u32 %v4661, 7
      %v4663 = vsub.s32 %v4660, %v4662
      %v4664 = vrot.slane %v4316, %v4663
      %v4666 = vunpack.c.l.s4 1983009808
      %v4667 = vunpack.c.0.s8 %v4666
      %v4668 = vlaneseq
      %v4669 = vshrl.u32 %v4668, 7
      %v4670 = vsub.s32 %v4667, %v4669
      %v4671 = vrot.slane %v4657, %v4670
      %v4672 = vcombine.high %v4664, %v4664
      %v4673 = vcombine.high %v4317, %v4317
      %v4675 = vunpack.c.l.s4 1983009808
      %v4676 = vunpack.c.0.s8 %v4675
      %v4677 = vlaneseq
      %v4678 = vshrl.u32 %v4677, 7
      %v4679 = vsub.s32 %v4676, %v4678
      %v4680 = vrot.slane %v4317, %v4679
      %v4682 = vunpack.c.l.s4 1983009808
      %v4683 = vunpack.c.0.s8 %v4682
      %v4684 = vlaneseq
      %v4685 = vshrl.u32 %v4684, 7
      %v4686 = vsub.s32 %v4683, %v4685
      %v4687 = vrot.slane %v4673, %v4686
      %v4688 = vcombine.high %v4680, %v4680
      %v4689 = vcombine.high %v4687, %v4687
      %v4690 = vcombine.high %v4318, %v4318
      %v4692 = vunpack.c.l.s4 1983009808
      %v4693 = vunpack.c.0.s8 %v4692
      %v4694 = vlaneseq
      %v4695 = vshrl.u32 %v4694, 7
      %v4696 = vsub.s32 %v4693, %v4695
      %v4697 = vrot.slane %v4318, %v4696
      %v4699 = vunpack.c.l.s4 1983009808
      %v4700 = vunpack.c.0.s8 %v4699
      %v4701 = vlaneseq
      %v4702 = vshrl.u32 %v4701, 7
      %v4703 = vsub.s32 %v4700, %v4702
      %v4704 = vrot.slane %v4690, %v4703
      %v4705 = vcombine.high %v4697, %v4697
      %v4706 = vcombine.high %v4704, %v4704
      %v4707 = vcombine.high %v4319, %v4319
      %v4709 = vunpack.c.l.s4 1983009808
      %v4710 = vunpack.c.0.s8 %v4709
      %v4711 = vlaneseq
      %v4712 = vshrl.u32 %v4711, 7
      %v4713 = vsub.s32 %v4710, %v4712
      %v4714 = vrot.slane %v4319, %v4713
      %v4716 = vunpack.c.l.s4 1983009808
      %v4717 = vunpack.c.0.s8 %v4716
      %v4718 = vlaneseq
      %v4719 = vshrl.u32 %v4718, 7
      %v4720 = vsub.s32 %v4717, %v4719
      %v4721 = vrot.slane %v4707, %v4720
      %v4722 = vcombine.high %v4714, %v4714
      %v4723 = vcombine.high %v4721, %v4721
      %v4724 = vcombine.high %v4320, %v4320
      %v4726 = vunpack.c.l.s4 1983009808
      %v4727 = vunpack.c.0.s8 %v4726
      %v4728 = vlaneseq
      %v4729 = vshrl.u32 %v4728, 7
      %v4730 = vsub.s32 %v4727, %v4729
      %v4731 = vrot.slane %v4320, %v4730
      %v4733 = vunpack.c.l.s4 1983009808
      %v4734 = vunpack.c.0.s8 %v4733
      %v4735 = vlaneseq
      %v4736 = vshrl.u32 %v4735, 7
      %v4737 = vsub.s32 %v4734, %v4736
      %v4738 = vrot.slane %v4724, %v4737
      %v4739 = vcombine.high %v4731, %v4731
      %v4740 = vcombine.high %v4738, %v4738
      %v4741 = vcombine.high %v4321, %v4321
      %v4743 = vunpack.c.l.s4 1983009808
      %v4744 = vunpack.c.0.s8 %v4743
      %v4745 = vlaneseq
      %v4746 = vshrl.u32 %v4745, 7
      %v4747 = vsub.s32 %v4744, %v4746
      %v4748 = vrot.slane %v4321, %v4747
      %v4750 = vunpack.c.l.s4 1983009808
      %v4751 = vunpack.c.0.s8 %v4750
      %v4752 = vlaneseq
      %v4753 = vshrl.u32 %v4752, 7
      %v4754 = vsub.s32 %v4751, %v4753
      %v4755 = vrot.slane %v4741, %v4754
      %v4756 = vcombine.high %v4755, %v4755
      %v4757 = vcombine.high %v4322, %v4322
      %v4759 = vunpack.c.l.s4 1983009808
      %v4760 = vunpack.c.0.s8 %v4759
      %v4761 = vlaneseq
      %v4762 = vshrl.u32 %v4761, 7
      %v4763 = vsub.s32 %v4760, %v4762
      %v4764 = vrot.slane %v4322, %v4763
      %v4766 = vunpack.c.l.s4 1983009808
      %v4767 = vunpack.c.0.s8 %v4766
      %v4768 = vlaneseq
      %v4769 = vshrl.u32 %v4768, 7
      %v4770 = vsub.s32 %v4767, %v4769
      %v4771 = vrot.slane %v4757, %v4770
      %v4772 = vcombine.high %v4764, %v4764
      %v4773 = vcombine.high %v4771, %v4771
      %v4774 = vcombine.high %v4323, %v4323
      %v4776 = vunpack.c.l.s4 1983009808
      %v4777 = vunpack.c.0.s8 %v4776
      %v4778 = vlaneseq
      %v4779 = vshrl.u32 %v4778, 7
      %v4780 = vsub.s32 %v4777, %v4779
      %v4781 = vrot.slane %v4323, %v4780
      %v4783 = vunpack.c.l.s4 1983009808
      %v4784 = vunpack.c.0.s8 %v4783
      %v4785 = vlaneseq
      %v4786 = vshrl.u32 %v4785, 7
      %v4787 = vsub.s32 %v4784, %v4786
      %v4788 = vrot.slane %v4774, %v4787
      %v4789 = vcombine.high %v4781, %v4781
      %v4790 = vcombine.high %v4788, %v4788
      %v4791 = vcombine.high %v4324, %v4324
      %v4793 = vunpack.c.l.s4 1983009808
      %v4794 = vunpack.c.0.s8 %v4793
      %v4795 = vlaneseq
      %v4796 = vshrl.u32 %v4795, 7
      %v4797 = vsub.s32 %v4794, %v4796
      %v4798 = vrot.slane %v4324, %v4797
      %v4800 = vunpack.c.l.s4 1983009808
      %v4801 = vunpack.c.0.s8 %v4800
      %v4802 = vlaneseq
      %v4803 = vshrl.u32 %v4802, 7
      %v4804 = vsub.s32 %v4801, %v4803
      %v4805 = vrot.slane %v4791, %v4804
      %v4806 = vcombine.high %v4798, %v4798
      %v4807 = vcombine.high %v4805, %v4805
      %v4808 = vcombine.high %v4325, %v4325
      %v4810 = vunpack.c.l.s4 1983009808
      %v4811 = vunpack.c.0.s8 %v4810
      %v4812 = vlaneseq
      %v4813 = vshrl.u32 %v4812, 7
      %v4814 = vsub.s32 %v4811, %v4813
      %v4815 = vrot.slane %v4325, %v4814
      %v4817 = vunpack.c.l.s4 1983009808
      %v4818 = vunpack.c.0.s8 %v4817
      %v4819 = vlaneseq
      %v4820 = vshrl.u32 %v4819, 7
      %v4821 = vsub.s32 %v4818, %v4820
      %v4822 = vrot.slane %v4808, %v4821
      %v4823 = vcombine.high %v4815, %v4815
      %v4824 = vcombine.high %v4326, %v4326
      %v4826 = vunpack.c.l.s4 1983009808
      %v4827 = vunpack.c.0.s8 %v4826
      %v4828 = vlaneseq
      %v4829 = vshrl.u32 %v4828, 7
      %v4830 = vsub.s32 %v4827, %v4829
      %v4831 = vrot.slane %v4326, %v4830
      %v4833 = vunpack.c.l.s4 1983009808
      %v4834 = vunpack.c.0.s8 %v4833
      %v4835 = vlaneseq
      %v4836 = vshrl.u32 %v4835, 7
      %v4837 = vsub.s32 %v4834, %v4836
      %v4838 = vrot.slane %v4824, %v4837
      %v4839 = vcombine.high %v4831, %v4831
      %v4840 = vcombine.high %v4838, %v4838
      %v4841 = vcombine.high %v4327, %v4327
      %v4843 = vunpack.c.l.s4 1983009808
      %v4844 = vunpack.c.0.s8 %v4843
      %v4845 = vlaneseq
      %v4846 = vshrl.u32 %v4845, 7
      %v4847 = vsub.s32 %v4844, %v4846
      %v4848 = vrot.slane %v4327, %v4847
      %v4850 = vunpack.c.l.s4 1983009808
      %v4851 = vunpack.c.0.s8 %v4850
      %v4852 = vlaneseq
      %v4853 = vshrl.u32 %v4852, 7
      %v4854 = vsub.s32 %v4851, %v4853
      %v4855 = vrot.slane %v4841, %v4854
      %v4856 = vcombine.high %v4848, %v4848
      %v4857 = vcombine.high %v4855, %v4855
      %v4858 = vcombine.high %v4328, %v4328
      %v4860 = vunpack.c.l.s4 1983009808
      %v4861 = vunpack.c.0.s8 %v4860
      %v4862 = vlaneseq
      %v4863 = vshrl.u32 %v4862, 7
      %v4864 = vsub.s32 %v4861, %v4863
      %v4865 = vrot.slane %v4328, %v4864
      %v4867 = vunpack.c.l.s4 1983009808
      %v4868 = vunpack.c.0.s8 %v4867
      %v4869 = vlaneseq
      %v4870 = vshrl.u32 %v4869, 7
      %v4871 = vsub.s32 %v4868, %v4870
      %v4872 = vrot.slane %v4858, %v4871
      %v4873 = vcombine.high %v4865, %v4865
      %v4874 = vcombine.high %v4872, %v4872
      %v4875 = vcombine.high %v4329, %v4329
      %v4877 = vunpack.c.l.s4 1983009808
      %v4878 = vunpack.c.0.s8 %v4877
      %v4879 = vlaneseq
      %v4880 = vshrl.u32 %v4879, 7
      %v4881 = vsub.s32 %v4878, %v4880
      %v4882 = vrot.slane %v4329, %v4881
      %v4884 = vunpack.c.l.s4 1983009808
      %v4885 = vunpack.c.0.s8 %v4884
      %v4886 = vlaneseq
      %v4887 = vshrl.u32 %v4886, 7
      %v4888 = vsub.s32 %v4885, %v4887
      %v4889 = vrot.slane %v4875, %v4888
      %v4890 = vcombine.high %v4882, %v4882
      %v4891 = vcombine.high %v4889, %v4889
      %v4892 = vcombine.high %v4330, %v4330
      %v4894 = vunpack.c.l.s4 1983009808
      %v4895 = vunpack.c.0.s8 %v4894
      %v4896 = vlaneseq
      %v4897 = vshrl.u32 %v4896, 7
      %v4898 = vsub.s32 %v4895, %v4897
      %v4899 = vrot.slane %v4330, %v4898
      %v4901 = vunpack.c.l.s4 1983009808
      %v4902 = vunpack.c.0.s8 %v4901
      %v4903 = vlaneseq
      %v4904 = vshrl.u32 %v4903, 7
      %v4905 = vsub.s32 %v4902, %v4904
      %v4906 = vrot.slane %v4892, %v4905
      %v4907 = vcombine.high %v4906, %v4906
      %v4908 = vcombine.high %v4331, %v4331
      %v4910 = vunpack.c.l.s4 1983009808
      %v4911 = vunpack.c.0.s8 %v4910
      %v4912 = vlaneseq
      %v4913 = vshrl.u32 %v4912, 7
      %v4914 = vsub.s32 %v4911, %v4913
      %v4915 = vrot.slane %v4331, %v4914
      %v4917 = vunpack.c.l.s4 1983009808
      %v4918 = vunpack.c.0.s8 %v4917
      %v4919 = vlaneseq
      %v4920 = vshrl.u32 %v4919, 7
      %v4921 = vsub.s32 %v4918, %v4920
      %v4922 = vrot.slane %v4908, %v4921
      %v4923 = vcombine.high %v4915, %v4915
      %v4924 = vcombine.high %v4922, %v4922
      %v4925 = vcombine.high %v4332, %v4332
      %v4927 = vunpack.c.l.s4 1983009808
      %v4928 = vunpack.c.0.s8 %v4927
      %v4929 = vlaneseq
      %v4930 = vshrl.u32 %v4929, 7
      %v4931 = vsub.s32 %v4928, %v4930
      %v4932 = vrot.slane %v4332, %v4931
      %v4934 = vunpack.c.l.s4 1983009808
      %v4935 = vunpack.c.0.s8 %v4934
      %v4936 = vlaneseq
      %v4937 = vshrl.u32 %v4936, 7
      %v4938 = vsub.s32 %v4935, %v4937
      %v4939 = vrot.slane %v4925, %v4938
      %v4940 = vcombine.high %v4932, %v4932
      %v4941 = vcombine.high %v4939, %v4939
      %v4942 = vcombine.high %v4333, %v4333
      %v4944 = vunpack.c.l.s4 1983009808
      %v4945 = vunpack.c.0.s8 %v4944
      %v4946 = vlaneseq
      %v4947 = vshrl.u32 %v4946, 7
      %v4948 = vsub.s32 %v4945, %v4947
      %v4949 = vrot.slane %v4333, %v4948
      %v4951 = vunpack.c.l.s4 1983009808
      %v4952 = vunpack.c.0.s8 %v4951
      %v4953 = vlaneseq
      %v4954 = vshrl.u32 %v4953, 7
      %v4955 = vsub.s32 %v4952, %v4954
      %v4956 = vrot.slane %v4942, %v4955
      %v4957 = vcombine.high %v4949, %v4949
      %v4958 = vcombine.high %v4956, %v4956
      %v4959 = vcombine.high %v4334, %v4334
      %v4961 = vunpack.c.l.s4 1983009808
      %v4962 = vunpack.c.0.s8 %v4961
      %v4963 = vlaneseq
      %v4964 = vshrl.u32 %v4963, 7
      %v4965 = vsub.s32 %v4962, %v4964
      %v4966 = vrot.slane %v4334, %v4965
      %v4968 = vunpack.c.l.s4 1983009808
      %v4969 = vunpack.c.0.s8 %v4968
      %v4970 = vlaneseq
      %v4971 = vshrl.u32 %v4970, 7
      %v4972 = vsub.s32 %v4969, %v4971
      %v4973 = vrot.slane %v4959, %v4972
      %v4974 = vcombine.high %v4966, %v4966
      %v5103 = vcombine.low %v4378, %v4386
      %v5104 = vcombine.low %v4385, %v4387
      %v5106 = vunpack.c.l.s4 1983009808
      %v5107 = vunpack.c.0.s8 %v5106
      %v5108 = vlaneseq
      %v5109 = vshrl.u32 %v5108, 7
      %v5110 = vsub.s32 %v5107, %v5109
      %v5111 = vrot.slane %v5103, %v5110
      %v5113 = vunpack.c.l.s4 1983009808
      %v5114 = vunpack.c.0.s8 %v5113
      %v5115 = vlaneseq
      %v5116 = vshrl.u32 %v5115, 7
      %v5117 = vsub.s32 %v5114, %v5116
      %v5118 = vrot.slane %v5104, %v5117
      %v5119 = vcombine.low %v5111, %v5118
      %v5120 = vcombine.low %v4395, %v4403
      %v5121 = vcombine.low %v4402, %v4404
      %v5123 = vunpack.c.l.s4 1983009808
      %v5124 = vunpack.c.0.s8 %v5123
      %v5125 = vlaneseq
      %v5126 = vshrl.u32 %v5125, 7
      %v5127 = vsub.s32 %v5124, %v5126
      %v5128 = vrot.slane %v5120, %v5127
      %v5130 = vunpack.c.l.s4 1983009808
      %v5131 = vunpack.c.0.s8 %v5130
      %v5132 = vlaneseq
      %v5133 = vshrl.u32 %v5132, 7
      %v5134 = vsub.s32 %v5131, %v5133
      %v5135 = vrot.slane %v5121, %v5134
      %v5136 = vcombine.low %v5128, %v5135
      %v5137 = vcombine.low %v4420, %v4419
      %v5138 = vcombine.low %v4421, %v4429
      %v5140 = vunpack.c.l.s4 1983009808
      %v5141 = vunpack.c.0.s8 %v5140
      %v5142 = vlaneseq
      %v5143 = vshrl.u32 %v5142, 7
      %v5144 = vsub.s32 %v5141, %v5143
      %v5145 = vrot.slane %v5137, %v5144
      %v5147 = vunpack.c.l.s4 1983009808
      %v5148 = vunpack.c.0.s8 %v5147
      %v5149 = vlaneseq
      %v5150 = vshrl.u32 %v5149, 7
      %v5151 = vsub.s32 %v5148, %v5150
      %v5152 = vrot.slane %v5138, %v5151
      %v5153 = vcombine.low %v5145, %v5152
      %v5154 = vcombine.low %v4437, %v4436
      %v5155 = vcombine.low %v4438, %v4446
      %v5157 = vunpack.c.l.s4 1983009808
      %v5158 = vunpack.c.0.s8 %v5157
      %v5159 = vlaneseq
      %v5160 = vshrl.u32 %v5159, 7
      %v5161 = vsub.s32 %v5158, %v5160
      %v5162 = vrot.slane %v5154, %v5161
      %v5164 = vunpack.c.l.s4 1983009808
      %v5165 = vunpack.c.0.s8 %v5164
      %v5166 = vlaneseq
      %v5167 = vshrl.u32 %v5166, 7
      %v5168 = vsub.s32 %v5165, %v5167
      %v5169 = vrot.slane %v5155, %v5168
      %v5170 = vcombine.low %v5162, %v5169
      %v5171 = vcombine.low %v4453, %v4454
      %v5172 = vcombine.low %v4462, %v4470
      %v5174 = vunpack.c.l.s4 1983009808
      %v5175 = vunpack.c.0.s8 %v5174
      %v5176 = vlaneseq
      %v5177 = vshrl.u32 %v5176, 7
      %v5178 = vsub.s32 %v5175, %v5177
      %v5179 = vrot.slane %v5171, %v5178
      %v5181 = vunpack.c.l.s4 1983009808
      %v5182 = vunpack.c.0.s8 %v5181
      %v5183 = vlaneseq
      %v5184 = vshrl.u32 %v5183, 7
      %v5185 = vsub.s32 %v5182, %v5184
      %v5186 = vrot.slane %v5172, %v5185
      %v5187 = vcombine.low %v5179, %v5186
      %v5188 = vcombine.low %v4469, %v4471
      %v5189 = vcombine.low %v4479, %v4487
      %v5191 = vunpack.c.l.s4 1983009808
      %v5192 = vunpack.c.0.s8 %v5191
      %v5193 = vlaneseq
      %v5194 = vshrl.u32 %v5193, 7
      %v5195 = vsub.s32 %v5192, %v5194
      %v5196 = vrot.slane %v5188, %v5195
      %v5198 = vunpack.c.l.s4 1983009808
      %v5199 = vunpack.c.0.s8 %v5198
      %v5200 = vlaneseq
      %v5201 = vshrl.u32 %v5200, 7
      %v5202 = vsub.s32 %v5199, %v5201
      %v5203 = vrot.slane %v5189, %v5202
      %v5204 = vcombine.low %v5196, %v5203
      %v5205 = vcombine.low %v4488, %v4496
      %v5206 = vcombine.low %v4504, %v4503
      %v5208 = vunpack.c.l.s4 1983009808
      %v5209 = vunpack.c.0.s8 %v5208
      %v5210 = vlaneseq
      %v5211 = vshrl.u32 %v5210, 7
      %v5212 = vsub.s32 %v5209, %v5211
      %v5213 = vrot.slane %v5205, %v5212
      %v5215 = vunpack.c.l.s4 1983009808
      %v5216 = vunpack.c.0.s8 %v5215
      %v5217 = vlaneseq
      %v5218 = vshrl.u32 %v5217, 7
      %v5219 = vsub.s32 %v5216, %v5218
      %v5220 = vrot.slane %v5206, %v5219
      %v5221 = vcombine.low %v5213, %v5220
      %v5222 = vcombine.low %v4505, %v4513
      %v5223 = vcombine.low %v4521, %v4520
      %v5225 = vunpack.c.l.s4 1983009808
      %v5226 = vunpack.c.0.s8 %v5225
      %v5227 = vlaneseq
      %v5228 = vshrl.u32 %v5227, 7
      %v5229 = vsub.s32 %v5226, %v5228
      %v5230 = vrot.slane %v5222, %v5229
      %v5232 = vunpack.c.l.s4 1983009808
      %v5233 = vunpack.c.0.s8 %v5232
      %v5234 = vlaneseq
      %v5235 = vshrl.u32 %v5234, 7
      %v5236 = vsub.s32 %v5233, %v5235
      %v5237 = vrot.slane %v5223, %v5236
      %v5238 = vcombine.low %v5230, %v5237
      %v5239 = vcombine.low %v4529, %v4537
      %v5240 = vcombine.low %v4536, %v4538
      %v5242 = vunpack.c.l.s4 1983009808
      %v5243 = vunpack.c.0.s8 %v5242
      %v5244 = vlaneseq
      %v5245 = vshrl.u32 %v5244, 7
      %v5246 = vsub.s32 %v5243, %v5245
      %v5247 = vrot.slane %v5239, %v5246
      %v5249 = vunpack.c.l.s4 1983009808
      %v5250 = vunpack.c.0.s8 %v5249
      %v5251 = vlaneseq
      %v5252 = vshrl.u32 %v5251, 7
      %v5253 = vsub.s32 %v5250, %v5252
      %v5254 = vrot.slane %v5240, %v5253
      %v5255 = vcombine.low %v5247, %v5254
      %v5256 = vcombine.low %v4546, %v4554
      %v5257 = vcombine.low %v4553, %v4555
      %v5259 = vunpack.c.l.s4 1983009808
      %v5260 = vunpack.c.0.s8 %v5259
      %v5261 = vlaneseq
      %v5262 = vshrl.u32 %v5261, 7
      %v5263 = vsub.s32 %v5260, %v5262
      %v5264 = vrot.slane %v5256, %v5263
      %v5266 = vunpack.c.l.s4 1983009808
      %v5267 = vunpack.c.0.s8 %v5266
      %v5268 = vlaneseq
      %v5269 = vshrl.u32 %v5268, 7
      %v5270 = vsub.s32 %v5267, %v5269
      %v5271 = vrot.slane %v5257, %v5270
      %v5272 = vcombine.low %v5264, %v5271
      %v5273 = vcombine.low %v4571, %v4570
      %v5274 = vcombine.low %v4572, %v4580
      %v5276 = vunpack.c.l.s4 1983009808
      %v5277 = vunpack.c.0.s8 %v5276
      %v5278 = vlaneseq
      %v5279 = vshrl.u32 %v5278, 7
      %v5280 = vsub.s32 %v5277, %v5279
      %v5281 = vrot.slane %v5273, %v5280
      %v5283 = vunpack.c.l.s4 1983009808
      %v5284 = vunpack.c.0.s8 %v5283
      %v5285 = vlaneseq
      %v5286 = vshrl.u32 %v5285, 7
      %v5287 = vsub.s32 %v5284, %v5286
      %v5288 = vrot.slane %v5274, %v5287
      %v5289 = vcombine.low %v5281, %v5288
      %v5290 = vcombine.low %v4588, %v4587
      %v5291 = vcombine.low %v4589, %v4597
      %v5293 = vunpack.c.l.s4 1983009808
      %v5294 = vunpack.c.0.s8 %v5293
      %v5295 = vlaneseq
      %v5296 = vshrl.u32 %v5295, 7
      %v5297 = vsub.s32 %v5294, %v5296
      %v5298 = vrot.slane %v5290, %v5297
      %v5300 = vunpack.c.l.s4 1983009808
      %v5301 = vunpack.c.0.s8 %v5300
      %v5302 = vlaneseq
      %v5303 = vshrl.u32 %v5302, 7
      %v5304 = vsub.s32 %v5301, %v5303
      %v5305 = vrot.slane %v5291, %v5304
      %v5306 = vcombine.low %v5298, %v5305
      %v5307 = vcombine.low %v4604, %v4605
      %v5308 = vcombine.low %v4613, %v4621
      %v5310 = vunpack.c.l.s4 1983009808
      %v5311 = vunpack.c.0.s8 %v5310
      %v5312 = vlaneseq
      %v5313 = vshrl.u32 %v5312, 7
      %v5314 = vsub.s32 %v5311, %v5313
      %v5315 = vrot.slane %v5307, %v5314
      %v5317 = vunpack.c.l.s4 1983009808
      %v5318 = vunpack.c.0.s8 %v5317
      %v5319 = vlaneseq
      %v5320 = vshrl.u32 %v5319, 7
      %v5321 = vsub.s32 %v5318, %v5320
      %v5322 = vrot.slane %v5308, %v5321
      %v5323 = vcombine.low %v5315, %v5322
      %v5324 = vcombine.low %v4620, %v4622
      %v5325 = vcombine.low %v4630, %v4638
      %v5327 = vunpack.c.l.s4 1983009808
      %v5328 = vunpack.c.0.s8 %v5327
      %v5329 = vlaneseq
      %v5330 = vshrl.u32 %v5329, 7
      %v5331 = vsub.s32 %v5328, %v5330
      %v5332 = vrot.slane %v5324, %v5331
      %v5334 = vunpack.c.l.s4 1983009808
      %v5335 = vunpack.c.0.s8 %v5334
      %v5336 = vlaneseq
      %v5337 = vshrl.u32 %v5336, 7
      %v5338 = vsub.s32 %v5335, %v5337
      %v5339 = vrot.slane %v5325, %v5338
      %v5340 = vcombine.low %v5332, %v5339
      %v5341 = vcombine.low %v4639, %v4647
      %v5342 = vcombine.low %v4655, %v4654
      %v5344 = vunpack.c.l.s4 1983009808
      %v5345 = vunpack.c.0.s8 %v5344
      %v5346 = vlaneseq
      %v5347 = vshrl.u32 %v5346, 7
      %v5348 = vsub.s32 %v5345, %v5347
      %v5349 = vrot.slane %v5341, %v5348
      %v5351 = vunpack.c.l.s4 1983009808
      %v5352 = vunpack.c.0.s8 %v5351
      %v5353 = vlaneseq
      %v5354 = vshrl.u32 %v5353, 7
      %v5355 = vsub.s32 %v5352, %v5354
      %v5356 = vrot.slane %v5342, %v5355
      %v5357 = vcombine.low %v5349, %v5356
      %v5358 = vcombine.low %v4656, %v4664
      %v5359 = vcombine.low %v4672, %v4671
      %v5361 = vunpack.c.l.s4 1983009808
      %v5362 = vunpack.c.0.s8 %v5361
      %v5363 = vlaneseq
      %v5364 = vshrl.u32 %v5363, 7
      %v5365 = vsub.s32 %v5362, %v5364
      %v5366 = vrot.slane %v5358, %v5365
      %v5368 = vunpack.c.l.s4 1983009808
      %v5369 = vunpack.c.0.s8 %v5368
      %v5370 = vlaneseq
      %v5371 = vshrl.u32 %v5370, 7
      %v5372 = vsub.s32 %v5369, %v5371
      %v5373 = vrot.slane %v5359, %v5372
      %v5374 = vcombine.low %v5366, %v5373
      %v5375 = vcombine.low %v4680, %v4688
      %v5376 = vcombine.low %v4687, %v4689
      %v5378 = vunpack.c.l.s4 1983009808
      %v5379 = vunpack.c.0.s8 %v5378
      %v5380 = vlaneseq
      %v5381 = vshrl.u32 %v5380, 7
      %v5382 = vsub.s32 %v5379, %v5381
      %v5383 = vrot.slane %v5375, %v5382
      %v5385 = vunpack.c.l.s4 1983009808
      %v5386 = vunpack.c.0.s8 %v5385
      %v5387 = vlaneseq
      %v5388 = vshrl.u32 %v5387, 7
      %v5389 = vsub.s32 %v5386, %v5388
      %v5390 = vrot.slane %v5376, %v5389
      %v5391 = vcombine.low %v5383, %v5390
      %v5392 = vcombine.low %v4697, %v4705
      %v5393 = vcombine.low %v4704, %v4706
      %v5395 = vunpack.c.l.s4 1983009808
      %v5396 = vunpack.c.0.s8 %v5395
      %v5397 = vlaneseq
      %v5398 = vshrl.u32 %v5397, 7
      %v5399 = vsub.s32 %v5396, %v5398
      %v5400 = vrot.slane %v5392, %v5399
      %v5402 = vunpack.c.l.s4 1983009808
      %v5403 = vunpack.c.0.s8 %v5402
      %v5404 = vlaneseq
      %v5405 = vshrl.u32 %v5404, 7
      %v5406 = vsub.s32 %v5403, %v5405
      %v5407 = vrot.slane %v5393, %v5406
      %v5408 = vcombine.low %v5400, %v5407
      %v5409 = vcombine.low %v4722, %v4721
      %v5410 = vcombine.low %v4723, %v4731
      %v5412 = vunpack.c.l.s4 1983009808
      %v5413 = vunpack.c.0.s8 %v5412
      %v5414 = vlaneseq
      %v5415 = vshrl.u32 %v5414, 7
      %v5416 = vsub.s32 %v5413, %v5415
      %v5417 = vrot.slane %v5409, %v5416
      %v5419 = vunpack.c.l.s4 1983009808
      %v5420 = vunpack.c.0.s8 %v5419
      %v5421 = vlaneseq
      %v5422 = vshrl.u32 %v5421, 7
      %v5423 = vsub.s32 %v5420, %v5422
      %v5424 = vrot.slane %v5410, %v5423
      %v5425 = vcombine.low %v5417, %v5424
      %v5426 = vcombine.low %v4739, %v4738
      %v5427 = vcombine.low %v4740, %v4748
      %v5429 = vunpack.c.l.s4 1983009808
      %v5430 = vunpack.c.0.s8 %v5429
      %v5431 = vlaneseq
      %v5432 = vshrl.u32 %v5431, 7
      %v5433 = vsub.s32 %v5430, %v5432
      %v5434 = vrot.slane %v5426, %v5433
      %v5436 = vunpack.c.l.s4 1983009808
      %v5437 = vunpack.c.0.s8 %v5436
      %v5438 = vlaneseq
      %v5439 = vshrl.u32 %v5438, 7
      %v5440 = vsub.s32 %v5437, %v5439
      %v5441 = vrot.slane %v5427, %v5440
      %v5442 = vcombine.low %v5434, %v5441
      %v5443 = vcombine.low %v4755, %v4756
      %v5444 = vcombine.low %v4764, %v4772
      %v5446 = vunpack.c.l.s4 1983009808
      %v5447 = vunpack.c.0.s8 %v5446
      %v5448 = vlaneseq
      %v5449 = vshrl.u32 %v5448, 7
      %v5450 = vsub.s32 %v5447, %v5449
      %v5451 = vrot.slane %v5443, %v5450
      %v5453 = vunpack.c.l.s4 1983009808
      %v5454 = vunpack.c.0.s8 %v5453
      %v5455 = vlaneseq
      %v5456 = vshrl.u32 %v5455, 7
      %v5457 = vsub.s32 %v5454, %v5456
      %v5458 = vrot.slane %v5444, %v5457
      %v5459 = vcombine.low %v5451, %v5458
      %v5460 = vcombine.low %v4771, %v4773
      %v5461 = vcombine.low %v4781, %v4789
      %v5463 = vunpack.c.l.s4 1983009808
      %v5464 = vunpack.c.0.s8 %v5463
      %v5465 = vlaneseq
      %v5466 = vshrl.u32 %v5465, 7
      %v5467 = vsub.s32 %v5464, %v5466
      %v5468 = vrot.slane %v5460, %v5467
      %v5470 = vunpack.c.l.s4 1983009808
      %v5471 = vunpack.c.0.s8 %v5470
      %v5472 = vlaneseq
      %v5473 = vshrl.u32 %v5472, 7
      %v5474 = vsub.s32 %v5471, %v5473
      %v5475 = vrot.slane %v5461, %v5474
      %v5476 = vcombine.low %v5468, %v5475
      %v5477 = vcombine.low %v4790, %v4798
      %v5478 = vcombine.low %v4806, %v4805
      %v5480 = vunpack.c.l.s4 1983009808
      %v5481 = vunpack.c.0.s8 %v5480
      %v5482 = vlaneseq
      %v5483 = vshrl.u32 %v5482, 7
      %v5484 = vsub.s32 %v5481, %v5483
      %v5485 = vrot.slane %v5477, %v5484
      %v5487 = vunpack.c.l.s4 1983009808
      %v5488 = vunpack.c.0.s8 %v5487
      %v5489 = vlaneseq
      %v5490 = vshrl.u32 %v5489, 7
      %v5491 = vsub.s32 %v5488, %v5490
      %v5492 = vrot.slane %v5478, %v5491
      %v5493 = vcombine.low %v5485, %v5492
      %v5494 = vcombine.low %v4807, %v4815
      %v5495 = vcombine.low %v4823, %v4822
      %v5497 = vunpack.c.l.s4 1983009808
      %v5498 = vunpack.c.0.s8 %v5497
      %v5499 = vlaneseq
      %v5500 = vshrl.u32 %v5499, 7
      %v5501 = vsub.s32 %v5498, %v5500
      %v5502 = vrot.slane %v5494, %v5501
      %v5504 = vunpack.c.l.s4 1983009808
      %v5505 = vunpack.c.0.s8 %v5504
      %v5506 = vlaneseq
      %v5507 = vshrl.u32 %v5506, 7
      %v5508 = vsub.s32 %v5505, %v5507
      %v5509 = vrot.slane %v5495, %v5508
      %v5510 = vcombine.low %v5502, %v5509
      %v5511 = vcombine.low %v4831, %v4839
      %v5512 = vcombine.low %v4838, %v4840
      %v5514 = vunpack.c.l.s4 1983009808
      %v5515 = vunpack.c.0.s8 %v5514
      %v5516 = vlaneseq
      %v5517 = vshrl.u32 %v5516, 7
      %v5518 = vsub.s32 %v5515, %v5517
      %v5519 = vrot.slane %v5511, %v5518
      %v5521 = vunpack.c.l.s4 1983009808
      %v5522 = vunpack.c.0.s8 %v5521
      %v5523 = vlaneseq
      %v5524 = vshrl.u32 %v5523, 7
      %v5525 = vsub.s32 %v5522, %v5524
      %v5526 = vrot.slane %v5512, %v5525
      %v5527 = vcombine.low %v5519, %v5526
      %v5528 = vcombine.low %v4848, %v4856
      %v5529 = vcombine.low %v4855, %v4857
      %v5531 = vunpack.c.l.s4 1983009808
      %v5532 = vunpack.c.0.s8 %v5531
      %v5533 = vlaneseq
      %v5534 = vshrl.u32 %v5533, 7
      %v5535 = vsub.s32 %v5532, %v5534
      %v5536 = vrot.slane %v5528, %v5535
      %v5538 = vunpack.c.l.s4 1983009808
      %v5539 = vunpack.c.0.s8 %v5538
      %v5540 = vlaneseq
      %v5541 = vshrl.u32 %v5540, 7
      %v5542 = vsub.s32 %v5539, %v5541
      %v5543 = vrot.slane %v5529, %v5542
      %v5544 = vcombine.low %v5536, %v5543
      %v5545 = vcombine.low %v4873, %v4872
      %v5546 = vcombine.low %v4874, %v4882
      %v5548 = vunpack.c.l.s4 1983009808
      %v5549 = vunpack.c.0.s8 %v5548
      %v5550 = vlaneseq
      %v5551 = vshrl.u32 %v5550, 7
      %v5552 = vsub.s32 %v5549, %v5551
      %v5553 = vrot.slane %v5545, %v5552
      %v5555 = vunpack.c.l.s4 1983009808
      %v5556 = vunpack.c.0.s8 %v5555
      %v5557 = vlaneseq
      %v5558 = vshrl.u32 %v5557, 7
      %v5559 = vsub.s32 %v5556, %v5558
      %v5560 = vrot.slane %v5546, %v5559
      %v5561 = vcombine.low %v5553, %v5560
      %v5562 = vcombine.low %v4890, %v4889
      %v5563 = vcombine.low %v4891, %v4899
      %v5565 = vunpack.c.l.s4 1983009808
      %v5566 = vunpack.c.0.s8 %v5565
      %v5567 = vlaneseq
      %v5568 = vshrl.u32 %v5567, 7
      %v5569 = vsub.s32 %v5566, %v5568
      %v5570 = vrot.slane %v5562, %v5569
      %v5572 = vunpack.c.l.s4 1983009808
      %v5573 = vunpack.c.0.s8 %v5572
      %v5574 = vlaneseq
      %v5575 = vshrl.u32 %v5574, 7
      %v5576 = vsub.s32 %v5573, %v5575
      %v5577 = vrot.slane %v5563, %v5576
      %v5578 = vcombine.low %v5570, %v5577
      %v5579 = vcombine.low %v4906, %v4907
      %v5580 = vcombine.low %v4915, %v4923
      %v5582 = vunpack.c.l.s4 1983009808
      %v5583 = vunpack.c.0.s8 %v5582
      %v5584 = vlaneseq
      %v5585 = vshrl.u32 %v5584, 7
      %v5586 = vsub.s32 %v5583, %v5585
      %v5587 = vrot.slane %v5579, %v5586
      %v5589 = vunpack.c.l.s4 1983009808
      %v5590 = vunpack.c.0.s8 %v5589
      %v5591 = vlaneseq
      %v5592 = vshrl.u32 %v5591, 7
      %v5593 = vsub.s32 %v5590, %v5592
      %v5594 = vrot.slane %v5580, %v5593
      %v5595 = vcombine.low %v5587, %v5594
      %v5596 = vcombine.low %v4922, %v4924
      %v5597 = vcombine.low %v4932, %v4940
      %v5599 = vunpack.c.l.s4 1983009808
      %v5600 = vunpack.c.0.s8 %v5599
      %v5601 = vlaneseq
      %v5602 = vshrl.u32 %v5601, 7
      %v5603 = vsub.s32 %v5600, %v5602
      %v5604 = vrot.slane %v5596, %v5603
      %v5606 = vunpack.c.l.s4 1983009808
      %v5607 = vunpack.c.0.s8 %v5606
      %v5608 = vlaneseq
      %v5609 = vshrl.u32 %v5608, 7
      %v5610 = vsub.s32 %v5607, %v5609
      %v5611 = vrot.slane %v5597, %v5610
      %v5612 = vcombine.low %v5604, %v5611
      %v5613 = vcombine.low %v4941, %v4949
      %v5614 = vcombine.low %v4957, %v4956
      %v5616 = vunpack.c.l.s4 1983009808
      %v5617 = vunpack.c.0.s8 %v5616
      %v5618 = vlaneseq
      %v5619 = vshrl.u32 %v5618, 7
      %v5620 = vsub.s32 %v5617, %v5619
      %v5621 = vrot.slane %v5613, %v5620
      %v5623 = vunpack.c.l.s4 1983009808
      %v5624 = vunpack.c.0.s8 %v5623
      %v5625 = vlaneseq
      %v5626 = vshrl.u32 %v5625, 7
      %v5627 = vsub.s32 %v5624, %v5626
      %v5628 = vrot.slane %v5614, %v5627
      %v5629 = vcombine.low %v5621, %v5628
      %v5630 = vcombine.low %v4958, %v4966
      %v5631 = vcombine.low %v4974, %v4973
      %v5633 = vunpack.c.l.s4 1983009808
      %v5634 = vunpack.c.0.s8 %v5633
      %v5635 = vlaneseq
      %v5636 = vshrl.u32 %v5635, 7
      %v5637 = vsub.s32 %v5634, %v5636
      %v5638 = vrot.slane %v5630, %v5637
      %v5640 = vunpack.c.l.s4 1983009808
      %v5641 = vunpack.c.0.s8 %v5640
      %v5642 = vlaneseq
      %v5643 = vshrl.u32 %v5642, 7
      %v5644 = vsub.s32 %v5641, %v5643
      %v5645 = vrot.slane %v5631, %v5644
      %v5646 = vcombine.low %v5638, %v5645
      %v5679 = vpack.c.bf16 %v5136, %v5119
      %v5680 = vpack.c.bf16 %v5170, %v5153
      %v5681 = vpack.c.bf16 %v5204, %v5187
      %v5682 = vpack.c.bf16 %v5238, %v5221
      %v5683 = vpack.c.bf16 %v5272, %v5255
      %v5684 = vpack.c.bf16 %v5306, %v5289
      %v5685 = vpack.c.bf16 %v5340, %v5323
      %v5686 = vpack.c.bf16 %v5374, %v5357
      %v5687 = vpack.c.bf16 %v5408, %v5391
      %v5688 = vpack.c.bf16 %v5442, %v5425
      %v5689 = vpack.c.bf16 %v5476, %v5459
      %v5690 = vpack.c.bf16 %v5510, %v5493
      %v5691 = vpack.c.bf16 %v5544, %v5527
      %v5692 = vpack.c.bf16 %v5578, %v5561
      %v5693 = vpack.c.bf16 %v5612, %v5595
      %v5694 = vpack.c.bf16 %v5646, %v5629
      %v5711 = vunpack.c.l.b16 %v5679
      %v5712 = vunpack.c.h.b16 %v5679
      %v5713 = vunpack.c.l.b16 %v5680
      %v5714 = vunpack.c.h.b16 %v5680
      %v5715 = vunpack.c.l.b16 %v5681
      %v5716 = vunpack.c.h.b16 %v5681
      %v5717 = vunpack.c.l.b16 %v5682
      %v5718 = vunpack.c.h.b16 %v5682
      %v5719 = vunpack.c.l.b16 %v5683
      %v5720 = vunpack.c.h.b16 %v5683
      %v5721 = vunpack.c.l.b16 %v5684
      %v5722 = vunpack.c.h.b16 %v5684
      %v5723 = vunpack.c.l.b16 %v5685
      %v5724 = vunpack.c.h.b16 %v5685
      %v5725 = vunpack.c.l.b16 %v5686
      %v5726 = vunpack.c.h.b16 %v5686
      %v5727 = vunpack.c.l.b16 %v5687
      %v5728 = vunpack.c.h.b16 %v5687
      %v5729 = vunpack.c.l.b16 %v5688
      %v5730 = vunpack.c.h.b16 %v5688
      %v5731 = vunpack.c.l.b16 %v5689
      %v5732 = vunpack.c.h.b16 %v5689
      %v5733 = vunpack.c.l.b16 %v5690
      %v5734 = vunpack.c.h.b16 %v5690
      %v5735 = vunpack.c.l.b16 %v5691
      %v5736 = vunpack.c.h.b16 %v5691
      %v5737 = vunpack.c.l.b16 %v5692
      %v5738 = vunpack.c.h.b16 %v5692
      %v5739 = vunpack.c.l.b16 %v5693
      %v5740 = vunpack.c.h.b16 %v5693
      %v5741 = vunpack.c.l.b16 %v5694
      %v5742 = vunpack.c.h.b16 %v5694
      %v5743 = vpack.c.b16 %v5711, %v5711
      %v5744 = vpack.c.b16 %v5712, %v5712
      %v5745 = vpack.c.b16 %v5713, %v5713
      %v5746 = vpack.c.b16 %v5714, %v5714
      %v5747 = vpack.c.b16 %v5715, %v5715
      %v5748 = vpack.c.b16 %v5716, %v5716
      %v5749 = vpack.c.b16 %v5717, %v5717
      %v5750 = vpack.c.b16 %v5718, %v5718
      %v5751 = vpack.c.b16 %v5719, %v5719
      %v5752 = vpack.c.b16 %v5720, %v5720
      %v5753 = vpack.c.b16 %v5721, %v5721
      %v5754 = vpack.c.b16 %v5722, %v5722
      %v5755 = vpack.c.b16 %v5723, %v5723
      %v5756 = vpack.c.b16 %v5724, %v5724
      %v5757 = vpack.c.b16 %v5725, %v5725
      %v5758 = vpack.c.b16 %v5726, %v5726
      %v5759 = vpack.c.b16 %v5727, %v5727
      %v5760 = vpack.c.b16 %v5728, %v5728
      %v5761 = vpack.c.b16 %v5729, %v5729
      %v5762 = vpack.c.b16 %v5730, %v5730
      %v5763 = vpack.c.b16 %v5731, %v5731
      %v5764 = vpack.c.b16 %v5732, %v5732
      %v5765 = vpack.c.b16 %v5733, %v5733
      %v5766 = vpack.c.b16 %v5734, %v5734
      %v5767 = vpack.c.b16 %v5735, %v5735
      %v5768 = vpack.c.b16 %v5736, %v5736
      %v5769 = vpack.c.b16 %v5737, %v5737
      %v5770 = vpack.c.b16 %v5738, %v5738
      %v5771 = vpack.c.b16 %v5739, %v5739
      %v5772 = vpack.c.b16 %v5740, %v5740
      %v5773 = vpack.c.b16 %v5741, %v5741
      %v5774 = vpack.c.b16 %v5742, %v5742
      %5807 = vst [vmem:[%s300] sm:$0xf] %v5743
      %5808 = vst [vmem:[%s300 + $0x4] sm:$0xf] %v5744
      %5809 = vst [vmem:[%s300 + $0x8] sm:$0xf] %v5745
      %5810 = vst [vmem:[%s300 + $0xc] sm:$0xf] %v5746
      %5811 = vst [vmem:[%s300 + $0x10] sm:$0xf] %v5747
      %5812 = vst [vmem:[%s300 + $0x14] sm:$0xf] %v5748
      %5813 = vst [vmem:[%s300 + $0x18] sm:$0xf] %v5749
      %5814 = vst [vmem:[%s300 + $0x1c] sm:$0xf] %v5750
      %5815 = vst [vmem:[%s300 + $0x20] sm:$0xf] %v5751
      %5816 = vst [vmem:[%s300 + $0x24] sm:$0xf] %v5752
      %5817 = vst [vmem:[%s300 + $0x28] sm:$0xf] %v5753
      %5818 = vst [vmem:[%s300 + $0x2c] sm:$0xf] %v5754
      %5819 = vst [vmem:[%s300 + $0x30] sm:$0xf] %v5755
      %5820 = vst [vmem:[%s300 + $0x34] sm:$0xf] %v5756
      %5821 = vst [vmem:[%s300 + $0x38] sm:$0xf] %v5757
      %5822 = vst [vmem:[%s300 + $0x3c] sm:$0xf] %v5758
      %5823 = vst [vmem:[%s300 + $0x40] sm:$0xf] %v5759
      %5824 = vst [vmem:[%s300 + $0x44] sm:$0xf] %v5760
      %5825 = vst [vmem:[%s300 + $0x48] sm:$0xf] %v5761
      %5826 = vst [vmem:[%s300 + $0x4c] sm:$0xf] %v5762
      %5827 = vst [vmem:[%s300 + $0x50] sm:$0xf] %v5763
      %5828 = vst [vmem:[%s300 + $0x54] sm:$0xf] %v5764
      %5829 = vst [vmem:[%s300 + $0x58] sm:$0xf] %v5765
      %5830 = vst [vmem:[%s300 + $0x5c] sm:$0xf] %v5766
      %5831 = vst [vmem:[%s300 + $0x60] sm:$0xf] %v5767
      %5832 = vst [vmem:[%s300 + $0x64] sm:$0xf] %v5768
      %5833 = vst [vmem:[%s300 + $0x68] sm:$0xf] %v5769
      %5834 = vst [vmem:[%s300 + $0x6c] sm:$0xf] %v5770
      %5835 = vst [vmem:[%s300 + $0x70] sm:$0xf] %v5771
      %5836 = vst [vmem:[%s300 + $0x74] sm:$0xf] %v5772
      %5837 = vst [vmem:[%s300 + $0x78] sm:$0xf] %v5773
      %5838 = vst [vmem:[%s300 + $0x7c] sm:$0xf] %v5774
      %v5839 = vrot.slane %v4378, 7
      %v5840 = vrot.slane %v5839, 2
      %v5841 = vrot.slane %v4386, 7
      %v5842 = vrot.slane %v5841, 2
      %v5843 = vrot.slane %v4385, 7
      %v5844 = vrot.slane %v5843, 2
      %v5845 = vrot.slane %v4387, 7
      %v5846 = vrot.slane %v5845, 2
      %v5847 = vrot.slane %v4395, 7
      %v5848 = vrot.slane %v5847, 2
      %v5849 = vrot.slane %v4403, 7
      %v5850 = vrot.slane %v5849, 2
      %v5851 = vrot.slane %v4402, 7
      %v5852 = vrot.slane %v5851, 2
      %v5853 = vrot.slane %v4404, 7
      %v5854 = vrot.slane %v5853, 2
      %v5855 = vrot.slane %v4420, 7
      %v5856 = vrot.slane %v5855, 2
      %v5857 = vrot.slane %v4419, 7
      %v5858 = vrot.slane %v5857, 2
      %v5859 = vrot.slane %v4421, 7
      %v5860 = vrot.slane %v5859, 2
      %v5861 = vrot.slane %v4429, 7
      %v5862 = vrot.slane %v5861, 2
      %v5863 = vrot.slane %v4437, 7
      %v5864 = vrot.slane %v5863, 2
      %v5865 = vrot.slane %v4436, 7
      %v5866 = vrot.slane %v5865, 2
      %v5867 = vrot.slane %v4438, 7
      %v5868 = vrot.slane %v5867, 2
      %v5869 = vrot.slane %v4446, 7
      %v5870 = vrot.slane %v5869, 2
      %v5871 = vrot.slane %v4453, 7
      %v5872 = vrot.slane %v5871, 2
      %v5873 = vrot.slane %v4454, 7
      %v5874 = vrot.slane %v5873, 2
      %v5875 = vrot.slane %v4462, 7
      %v5876 = vrot.slane %v5875, 2
      %v5877 = vrot.slane %v4470, 7
      %v5878 = vrot.slane %v5877, 2
      %v5879 = vrot.slane %v4469, 7
      %v5880 = vrot.slane %v5879, 2
      %v5881 = vrot.slane %v4471, 7
      %v5882 = vrot.slane %v5881, 2
      %v5883 = vrot.slane %v4479, 7
      %v5884 = vrot.slane %v5883, 2
      %v5885 = vrot.slane %v4487, 7
      %v5886 = vrot.slane %v5885, 2
      %v5887 = vrot.slane %v4488, 7
      %v5888 = vrot.slane %v5887, 2
      %v5889 = vrot.slane %v4496, 7
      %v5890 = vrot.slane %v5889, 2
      %v5891 = vrot.slane %v4504, 7
      %v5892 = vrot.slane %v5891, 2
      %v5893 = vrot.slane %v4503, 7
      %v5894 = vrot.slane %v5893, 2
      %v5895 = vrot.slane %v4505, 7
      %v5896 = vrot.slane %v5895, 2
      %v5897 = vrot.slane %v4513, 7
      %v5898 = vrot.slane %v5897, 2
      %v5899 = vrot.slane %v4521, 7
      %v5900 = vrot.slane %v5899, 2
      %v5901 = vrot.slane %v4520, 7
      %v5902 = vrot.slane %v5901, 2
      %v5903 = vrot.slane %v4529, 7
      %v5904 = vrot.slane %v5903, 2
      %v5905 = vrot.slane %v4537, 7
      %v5906 = vrot.slane %v5905, 2
      %v5907 = vrot.slane %v4536, 7
      %v5908 = vrot.slane %v5907, 2
      %v5909 = vrot.slane %v4538, 7
      %v5910 = vrot.slane %v5909, 2
      %v5911 = vrot.slane %v4546, 7
      %v5912 = vrot.slane %v5911, 2
      %v5913 = vrot.slane %v4554, 7
      %v5914 = vrot.slane %v5913, 2
      %v5915 = vrot.slane %v4553, 7
      %v5916 = vrot.slane %v5915, 2
      %v5917 = vrot.slane %v4555, 7
      %v5918 = vrot.slane %v5917, 2
      %v5919 = vrot.slane %v4571, 7
      %v5920 = vrot.slane %v5919, 2
      %v5921 = vrot.slane %v4570, 7
      %v5922 = vrot.slane %v5921, 2
      %v5923 = vrot.slane %v4572, 7
      %v5924 = vrot.slane %v5923, 2
      %v5925 = vrot.slane %v4580, 7
      %v5926 = vrot.slane %v5925, 2
      %v5927 = vrot.slane %v4588, 7
      %v5928 = vrot.slane %v5927, 2
      %v5929 = vrot.slane %v4587, 7
      %v5930 = vrot.slane %v5929, 2
      %v5931 = vrot.slane %v4589, 7
      %v5932 = vrot.slane %v5931, 2
      %v5933 = vrot.slane %v4597, 7
      %v5934 = vrot.slane %v5933, 2
      %v5935 = vrot.slane %v4604, 7
      %v5936 = vrot.slane %v5935, 2
      %v5937 = vrot.slane %v4605, 7
      %v5938 = vrot.slane %v5937, 2
      %v5939 = vrot.slane %v4613, 7
      %v5940 = vrot.slane %v5939, 2
      %v5941 = vrot.slane %v4621, 7
      %v5942 = vrot.slane %v5941, 2
      %v5943 = vrot.slane %v4620, 7
      %v5944 = vrot.slane %v5943, 2
      %v5945 = vrot.slane %v4622, 7
      %v5946 = vrot.slane %v5945, 2
      %v5947 = vrot.slane %v4630, 7
      %v5948 = vrot.slane %v5947, 2
      %v5949 = vrot.slane %v4638, 7
      %v5950 = vrot.slane %v5949, 2
      %v5951 = vrot.slane %v4639, 7
      %v5952 = vrot.slane %v5951, 2
      %v5953 = vrot.slane %v4647, 7
      %v5954 = vrot.slane %v5953, 2
      %v5955 = vrot.slane %v4655, 7
      %v5956 = vrot.slane %v5955, 2
      %v5957 = vrot.slane %v4654, 7
      %v5958 = vrot.slane %v5957, 2
      %v5959 = vrot.slane %v4656, 7
      %v5960 = vrot.slane %v5959, 2
      %v5961 = vrot.slane %v4664, 7
      %v5962 = vrot.slane %v5961, 2
      %v5963 = vrot.slane %v4672, 7
      %v5964 = vrot.slane %v5963, 2
      %v5965 = vrot.slane %v4671, 7
      %v5966 = vrot.slane %v5965, 2
      %v5967 = vrot.slane %v4680, 7
      %v5968 = vrot.slane %v5967, 2
      %v5969 = vrot.slane %v4688, 7
      %v5970 = vrot.slane %v5969, 2
      %v5971 = vrot.slane %v4687, 7
      %v5972 = vrot.slane %v5971, 2
      %v5973 = vrot.slane %v4689, 7
      %v5974 = vrot.slane %v5973, 2
      %v5975 = vrot.slane %v4697, 7
      %v5976 = vrot.slane %v5975, 2
      %v5977 = vrot.slane %v4705, 7
      %v5978 = vrot.slane %v5977, 2
      %v5979 = vrot.slane %v4704, 7
      %v5980 = vrot.slane %v5979, 2
      %v5981 = vrot.slane %v4706, 7
      %v5982 = vrot.slane %v5981, 2
      %v5983 = vrot.slane %v4722, 7
      %v5984 = vrot.slane %v5983, 2
      %v5985 = vrot.slane %v4721, 7
      %v5986 = vrot.slane %v5985, 2
      %v5987 = vrot.slane %v4723, 7
      %v5988 = vrot.slane %v5987, 2
      %v5989 = vrot.slane %v4731, 7
      %v5990 = vrot.slane %v5989, 2
      %v5991 = vrot.slane %v4739, 7
      %v5992 = vrot.slane %v5991, 2
      %v5993 = vrot.slane %v4738, 7
      %v5994 = vrot.slane %v5993, 2
      %v5995 = vrot.slane %v4740, 7
      %v5996 = vrot.slane %v5995, 2
      %v5997 = vrot.slane %v4748, 7
      %v5998 = vrot.slane %v5997, 2
      %v5999 = vrot.slane %v4755, 7
      %v6000 = vrot.slane %v5999, 2
      %v6001 = vrot.slane %v4756, 7
      %v6002 = vrot.slane %v6001, 2
      %v6003 = vrot.slane %v4764, 7
      %v6004 = vrot.slane %v6003, 2
      %v6005 = vrot.slane %v4772, 7
      %v6006 = vrot.slane %v6005, 2
      %v6007 = vrot.slane %v4771, 7
      %v6008 = vrot.slane %v6007, 2
      %v6009 = vrot.slane %v4773, 7
      %v6010 = vrot.slane %v6009, 2
      %v6011 = vrot.slane %v4781, 7
      %v6012 = vrot.slane %v6011, 2
      %v6013 = vrot.slane %v4789, 7
      %v6014 = vrot.slane %v6013, 2
      %v6015 = vrot.slane %v4790, 7
      %v6016 = vrot.slane %v6015, 2
      %v6017 = vrot.slane %v4798, 7
      %v6018 = vrot.slane %v6017, 2
      %v6019 = vrot.slane %v4806, 7
      %v6020 = vrot.slane %v6019, 2
      %v6021 = vrot.slane %v4805, 7
      %v6022 = vrot.slane %v6021, 2
      %v6023 = vrot.slane %v4807, 7
      %v6024 = vrot.slane %v6023, 2
      %v6025 = vrot.slane %v4815, 7
      %v6026 = vrot.slane %v6025, 2
      %v6027 = vrot.slane %v4823, 7
      %v6028 = vrot.slane %v6027, 2
      %v6029 = vrot.slane %v4822, 7
      %v6030 = vrot.slane %v6029, 2
      %v6031 = vrot.slane %v4831, 7
      %v6032 = vrot.slane %v6031, 2
      %v6033 = vrot.slane %v4839, 7
      %v6034 = vrot.slane %v6033, 2
      %v6035 = vrot.slane %v4838, 7
      %v6036 = vrot.slane %v6035, 2
      %v6037 = vrot.slane %v4840, 7
      %v6038 = vrot.slane %v6037, 2
      %v6039 = vrot.slane %v4848, 7
      %v6040 = vrot.slane %v6039, 2
      %v6041 = vrot.slane %v4856, 7
      %v6042 = vrot.slane %v6041, 2
      %v6043 = vrot.slane %v4855, 7
      %v6044 = vrot.slane %v6043, 2
      %v6045 = vrot.slane %v4857, 7
      %v6046 = vrot.slane %v6045, 2
      %v6047 = vrot.slane %v4873, 7
      %v6048 = vrot.slane %v6047, 2
      %v6049 = vrot.slane %v4872, 7
      %v6050 = vrot.slane %v6049, 2
      %v6051 = vrot.slane %v4874, 7
      %v6052 = vrot.slane %v6051, 2
      %v6053 = vrot.slane %v4882, 7
      %v6054 = vrot.slane %v6053, 2
      %v6055 = vrot.slane %v4890, 7
      %v6056 = vrot.slane %v6055, 2
      %v6057 = vrot.slane %v4889, 7
      %v6058 = vrot.slane %v6057, 2
      %v6059 = vrot.slane %v4891, 7
      %v6060 = vrot.slane %v6059, 2
      %v6061 = vrot.slane %v4899, 7
      %v6062 = vrot.slane %v6061, 2
      %v6063 = vrot.slane %v4906, 7
      %v6064 = vrot.slane %v6063, 2
      %v6065 = vrot.slane %v4907, 7
      %v6066 = vrot.slane %v6065, 2
      %v6067 = vrot.slane %v4915, 7
      %v6068 = vrot.slane %v6067, 2
      %v6069 = vrot.slane %v4923, 7
      %v6070 = vrot.slane %v6069, 2
      %v6071 = vrot.slane %v4922, 7
      %v6072 = vrot.slane %v6071, 2
      %v6073 = vrot.slane %v4924, 7
      %v6074 = vrot.slane %v6073, 2
      %v6075 = vrot.slane %v4932, 7
      %v6076 = vrot.slane %v6075, 2
      %v6077 = vrot.slane %v4940, 7
      %v6078 = vrot.slane %v6077, 2
      %v6079 = vrot.slane %v4941, 7
      %v6080 = vrot.slane %v6079, 2
      %v6081 = vrot.slane %v4949, 7
      %v6082 = vrot.slane %v6081, 2
      %v6083 = vrot.slane %v4957, 7
      %v6084 = vrot.slane %v6083, 2
      %v6085 = vrot.slane %v4956, 7
      %v6086 = vrot.slane %v6085, 2
      %v6087 = vrot.slane %v4958, 7
      %v6088 = vrot.slane %v6087, 2
      %v6089 = vrot.slane %v4966, 7
      %v6090 = vrot.slane %v6089, 2
      %v6091 = vrot.slane %v4974, 7
      %v6092 = vrot.slane %v6091, 2
      %v6093 = vrot.slane %v4973, 7
      %v6094 = vrot.slane %v6093, 2
      %v6223 = vmax.f32 %v4378, %v5840
      %v6224 = vmax.f32 %v4386, %v5842
      %v6225 = vmax.f32 %v4385, %v5844
      %v6226 = vmax.f32 %v4387, %v5846
      %v6227 = vmax.f32 %v4395, %v5848
      %v6228 = vmax.f32 %v4403, %v5850
      %v6229 = vmax.f32 %v4402, %v5852
      %v6230 = vmax.f32 %v4404, %v5854
      %v6231 = vmax.f32 %v4420, %v5856
      %v6232 = vmax.f32 %v4419, %v5858
      %v6233 = vmax.f32 %v4421, %v5860
      %v6234 = vmax.f32 %v4429, %v5862
      %v6235 = vmax.f32 %v4437, %v5864
      %v6236 = vmax.f32 %v4436, %v5866
      %v6237 = vmax.f32 %v4438, %v5868
      %v6238 = vmax.f32 %v4446, %v5870
      %v6239 = vmax.f32 %v4453, %v5872
      %v6240 = vmax.f32 %v4454, %v5874
      %v6241 = vmax.f32 %v4462, %v5876
      %v6242 = vmax.f32 %v4470, %v5878
      %v6243 = vmax.f32 %v4469, %v5880
      %v6244 = vmax.f32 %v4471, %v5882
      %v6245 = vmax.f32 %v4479, %v5884
      %v6246 = vmax.f32 %v4487, %v5886
      %v6247 = vmax.f32 %v4488, %v5888
      %v6248 = vmax.f32 %v4496, %v5890
      %v6249 = vmax.f32 %v4504, %v5892
      %v6250 = vmax.f32 %v4503, %v5894
      %v6251 = vmax.f32 %v4505, %v5896
      %v6252 = vmax.f32 %v4513, %v5898
      %v6253 = vmax.f32 %v4521, %v5900
      %v6254 = vmax.f32 %v4520, %v5902
      %v6255 = vmax.f32 %v4529, %v5904
      %v6256 = vmax.f32 %v4537, %v5906
      %v6257 = vmax.f32 %v4536, %v5908
      %v6258 = vmax.f32 %v4538, %v5910
      %v6259 = vmax.f32 %v4546, %v5912
      %v6260 = vmax.f32 %v4554, %v5914
      %v6261 = vmax.f32 %v4553, %v5916
      %v6262 = vmax.f32 %v4555, %v5918
      %v6263 = vmax.f32 %v4571, %v5920
      %v6264 = vmax.f32 %v4570, %v5922
      %v6265 = vmax.f32 %v4572, %v5924
      %v6266 = vmax.f32 %v4580, %v5926
      %v6267 = vmax.f32 %v4588, %v5928
      %v6268 = vmax.f32 %v4587, %v5930
      %v6269 = vmax.f32 %v4589, %v5932
      %v6270 = vmax.f32 %v4597, %v5934
      %v6271 = vmax.f32 %v4604, %v5936
      %v6272 = vmax.f32 %v4605, %v5938
      %v6273 = vmax.f32 %v4613, %v5940
      %v6274 = vmax.f32 %v4621, %v5942
      %v6275 = vmax.f32 %v4620, %v5944
      %v6276 = vmax.f32 %v4622, %v5946
      %v6277 = vmax.f32 %v4630, %v5948
      %v6278 = vmax.f32 %v4638, %v5950
      %v6279 = vmax.f32 %v4639, %v5952
      %v6280 = vmax.f32 %v4647, %v5954
      %v6281 = vmax.f32 %v4655, %v5956
      %v6282 = vmax.f32 %v4654, %v5958
      %v6283 = vmax.f32 %v4656, %v5960
      %v6284 = vmax.f32 %v4664, %v5962
      %v6285 = vmax.f32 %v4672, %v5964
      %v6286 = vmax.f32 %v4671, %v5966
      %v6287 = vmax.f32 %v4680, %v5968
      %v6288 = vmax.f32 %v4688, %v5970
      %v6289 = vmax.f32 %v4687, %v5972
      %v6290 = vmax.f32 %v4689, %v5974
      %v6291 = vmax.f32 %v4697, %v5976
      %v6292 = vmax.f32 %v4705, %v5978
      %v6293 = vmax.f32 %v4704, %v5980
      %v6294 = vmax.f32 %v4706, %v5982
      %v6295 = vmax.f32 %v4722, %v5984
      %v6296 = vmax.f32 %v4721, %v5986
      %v6297 = vmax.f32 %v4723, %v5988
      %v6298 = vmax.f32 %v4731, %v5990
      %v6299 = vmax.f32 %v4739, %v5992
      %v6300 = vmax.f32 %v4738, %v5994
      %v6301 = vmax.f32 %v4740, %v5996
      %v6302 = vmax.f32 %v4748, %v5998
      %v6303 = vmax.f32 %v4755, %v6000
      %v6304 = vmax.f32 %v4756, %v6002
      %v6305 = vmax.f32 %v4764, %v6004
      %v6306 = vmax.f32 %v4772, %v6006
      %v6307 = vmax.f32 %v4771, %v6008
      %v6308 = vmax.f32 %v4773, %v6010
      %v6309 = vmax.f32 %v4781, %v6012
      %v6310 = vmax.f32 %v4789, %v6014
      %v6311 = vmax.f32 %v4790, %v6016
      %v6312 = vmax.f32 %v4798, %v6018
      %v6313 = vmax.f32 %v4806, %v6020
      %v6314 = vmax.f32 %v4805, %v6022
      %v6315 = vmax.f32 %v4807, %v6024
      %v6316 = vmax.f32 %v4815, %v6026
      %v6317 = vmax.f32 %v4823, %v6028
      %v6318 = vmax.f32 %v4822, %v6030
      %v6319 = vmax.f32 %v4831, %v6032
      %v6320 = vmax.f32 %v4839, %v6034
      %v6321 = vmax.f32 %v4838, %v6036
      %v6322 = vmax.f32 %v4840, %v6038
      %v6323 = vmax.f32 %v4848, %v6040
      %v6324 = vmax.f32 %v4856, %v6042
      %v6325 = vmax.f32 %v4855, %v6044
      %v6326 = vmax.f32 %v4857, %v6046
      %v6327 = vmax.f32 %v4873, %v6048
      %v6328 = vmax.f32 %v4872, %v6050
      %v6329 = vmax.f32 %v4874, %v6052
      %v6330 = vmax.f32 %v4882, %v6054
      %v6331 = vmax.f32 %v4890, %v6056
      %v6332 = vmax.f32 %v4889, %v6058
      %v6333 = vmax.f32 %v4891, %v6060
      %v6334 = vmax.f32 %v4899, %v6062
      %v6335 = vmax.f32 %v4906, %v6064
      %v6336 = vmax.f32 %v4907, %v6066
      %v6337 = vmax.f32 %v4915, %v6068
      %v6338 = vmax.f32 %v4923, %v6070
      %v6339 = vmax.f32 %v4922, %v6072
      %v6340 = vmax.f32 %v4924, %v6074
      %v6341 = vmax.f32 %v4932, %v6076
      %v6342 = vmax.f32 %v4940, %v6078
      %v6343 = vmax.f32 %v4941, %v6080
      %v6344 = vmax.f32 %v4949, %v6082
      %v6345 = vmax.f32 %v4957, %v6084
      %v6346 = vmax.f32 %v4956, %v6086
      %v6347 = vmax.f32 %v4958, %v6088
      %v6348 = vmax.f32 %v4966, %v6090
      %v6349 = vmax.f32 %v4974, %v6092
      %v6350 = vmax.f32 %v4973, %v6094
      %v6351 = vmax.f32 %v6223, %v6231
      %v6352 = vmax.f32 %v6224, %v6232
      %v6353 = vmax.f32 %v6225, %v6233
      %v6354 = vmax.f32 %v6226, %v6234
      %v6355 = vmax.f32 %v6227, %v6235
      %v6356 = vmax.f32 %v6228, %v6236
      %v6357 = vmax.f32 %v6229, %v6237
      %v6358 = vmax.f32 %v6230, %v6238
      %v6359 = vmax.f32 %v6239, %v6247
      %v6360 = vmax.f32 %v6240, %v6248
      %v6361 = vmax.f32 %v6241, %v6249
      %v6362 = vmax.f32 %v6242, %v6250
      %v6363 = vmax.f32 %v6243, %v6251
      %v6364 = vmax.f32 %v6244, %v6252
      %v6365 = vmax.f32 %v6245, %v6253
      %v6366 = vmax.f32 %v6246, %v6254
      %v6367 = vmax.f32 %v6255, %v6263
      %v6368 = vmax.f32 %v6256, %v6264
      %v6369 = vmax.f32 %v6257, %v6265
      %v6370 = vmax.f32 %v6258, %v6266
      %v6371 = vmax.f32 %v6259, %v6267
      %v6372 = vmax.f32 %v6260, %v6268
      %v6373 = vmax.f32 %v6261, %v6269
      %v6374 = vmax.f32 %v6262, %v6270
      %v6375 = vmax.f32 %v6271, %v6279
      %v6376 = vmax.f32 %v6272, %v6280
      %v6377 = vmax.f32 %v6273, %v6281
      %v6378 = vmax.f32 %v6274, %v6282
      %v6379 = vmax.f32 %v6275, %v6283
      %v6380 = vmax.f32 %v6276, %v6284
      %v6381 = vmax.f32 %v6277, %v6285
      %v6382 = vmax.f32 %v6278, %v6286
      %v6383 = vmax.f32 %v6287, %v6295
      %v6384 = vmax.f32 %v6288, %v6296
      %v6385 = vmax.f32 %v6289, %v6297
      %v6386 = vmax.f32 %v6290, %v6298
      %v6387 = vmax.f32 %v6291, %v6299
      %v6388 = vmax.f32 %v6292, %v6300
      %v6389 = vmax.f32 %v6293, %v6301
      %v6390 = vmax.f32 %v6294, %v6302
      %v6391 = vmax.f32 %v6303, %v6311
      %v6392 = vmax.f32 %v6304, %v6312
      %v6393 = vmax.f32 %v6305, %v6313
      %v6394 = vmax.f32 %v6306, %v6314
      %v6395 = vmax.f32 %v6307, %v6315
      %v6396 = vmax.f32 %v6308, %v6316
      %v6397 = vmax.f32 %v6309, %v6317
      %v6398 = vmax.f32 %v6310, %v6318
      %v6399 = vmax.f32 %v6319, %v6327
      %v6400 = vmax.f32 %v6320, %v6328
      %v6401 = vmax.f32 %v6321, %v6329
      %v6402 = vmax.f32 %v6322, %v6330
      %v6403 = vmax.f32 %v6323, %v6331
      %v6404 = vmax.f32 %v6324, %v6332
      %v6405 = vmax.f32 %v6325, %v6333
      %v6406 = vmax.f32 %v6326, %v6334
      %v6407 = vmax.f32 %v6335, %v6343
      %v6408 = vmax.f32 %v6336, %v6344
      %v6409 = vmax.f32 %v6337, %v6345
      %v6410 = vmax.f32 %v6338, %v6346
      %v6411 = vmax.f32 %v6339, %v6347
      %v6412 = vmax.f32 %v6340, %v6348
      %v6413 = vmax.f32 %v6341, %v6349
      %v6414 = vmax.f32 %v6342, %v6350
      %v6415 = vpack.c.bf16 %v6351, %v6351
      %v6416 = vpack.c.bf16 %v6352, %v6352
      %v6417 = vpack.c.bf16 %v6353, %v6353
      %v6418 = vpack.c.bf16 %v6354, %v6354
      %v6419 = vpack.c.bf16 %v6355, %v6355
      %v6420 = vpack.c.bf16 %v6356, %v6356
      %v6421 = vpack.c.bf16 %v6357, %v6357
      %v6422 = vpack.c.bf16 %v6358, %v6358
      %v6423 = vpack.c.bf16 %v6359, %v6359
      %v6424 = vpack.c.bf16 %v6360, %v6360
      %v6425 = vpack.c.bf16 %v6361, %v6361
      %v6426 = vpack.c.bf16 %v6362, %v6362
      %v6427 = vpack.c.bf16 %v6363, %v6363
      %v6428 = vpack.c.bf16 %v6364, %v6364
      %v6429 = vpack.c.bf16 %v6365, %v6365
      %v6430 = vpack.c.bf16 %v6366, %v6366
      %v6431 = vpack.c.bf16 %v6367, %v6367
      %v6432 = vpack.c.bf16 %v6368, %v6368
      %v6433 = vpack.c.bf16 %v6369, %v6369
      %v6434 = vpack.c.bf16 %v6370, %v6370
      %v6435 = vpack.c.bf16 %v6371, %v6371
      %v6436 = vpack.c.bf16 %v6372, %v6372
      %v6437 = vpack.c.bf16 %v6373, %v6373
      %v6438 = vpack.c.bf16 %v6374, %v6374
      %v6439 = vpack.c.bf16 %v6375, %v6375
      %v6440 = vpack.c.bf16 %v6376, %v6376
      %v6441 = vpack.c.bf16 %v6377, %v6377
      %v6442 = vpack.c.bf16 %v6378, %v6378
      %v6443 = vpack.c.bf16 %v6379, %v6379
      %v6444 = vpack.c.bf16 %v6380, %v6380
      %v6445 = vpack.c.bf16 %v6381, %v6381
      %v6446 = vpack.c.bf16 %v6382, %v6382
      %v6447 = vpack.c.bf16 %v6383, %v6383
      %v6448 = vpack.c.bf16 %v6384, %v6384
      %v6449 = vpack.c.bf16 %v6385, %v6385
      %v6450 = vpack.c.bf16 %v6386, %v6386
      %v6451 = vpack.c.bf16 %v6387, %v6387
      %v6452 = vpack.c.bf16 %v6388, %v6388
      %v6453 = vpack.c.bf16 %v6389, %v6389
      %v6454 = vpack.c.bf16 %v6390, %v6390
      %v6455 = vpack.c.bf16 %v6391, %v6391
      %v6456 = vpack.c.bf16 %v6392, %v6392
      %v6457 = vpack.c.bf16 %v6393, %v6393
      %v6458 = vpack.c.bf16 %v6394, %v6394
      %v6459 = vpack.c.bf16 %v6395, %v6395
      %v6460 = vpack.c.bf16 %v6396, %v6396
      %v6461 = vpack.c.bf16 %v6397, %v6397
      %v6462 = vpack.c.bf16 %v6398, %v6398
      %v6463 = vpack.c.bf16 %v6399, %v6399
      %v6464 = vpack.c.bf16 %v6400, %v6400
      %v6465 = vpack.c.bf16 %v6401, %v6401
      %v6466 = vpack.c.bf16 %v6402, %v6402
      %v6467 = vpack.c.bf16 %v6403, %v6403
      %v6468 = vpack.c.bf16 %v6404, %v6404
      %v6469 = vpack.c.bf16 %v6405, %v6405
      %v6470 = vpack.c.bf16 %v6406, %v6406
      %v6471 = vpack.c.bf16 %v6407, %v6407
      %v6472 = vpack.c.bf16 %v6408, %v6408
      %v6473 = vpack.c.bf16 %v6409, %v6409
      %v6474 = vpack.c.bf16 %v6410, %v6410
      %v6475 = vpack.c.bf16 %v6411, %v6411
      %v6476 = vpack.c.bf16 %v6412, %v6412
      %v6477 = vpack.c.bf16 %v6413, %v6413
      %v6478 = vpack.c.bf16 %v6414, %v6414
      %v6543 = vunpack.c.l.b16 %v6415
      %v6544 = vunpack.c.l.b16 %v6416
      %v6545 = vunpack.c.l.b16 %v6417
      %v6546 = vunpack.c.l.b16 %v6418
      %v6547 = vunpack.c.l.b16 %v6419
      %v6548 = vunpack.c.l.b16 %v6420
      %v6549 = vunpack.c.l.b16 %v6421
      %v6550 = vunpack.c.l.b16 %v6422
      %v6551 = vunpack.c.l.b16 %v6423
      %v6552 = vunpack.c.l.b16 %v6424
      %v6553 = vunpack.c.l.b16 %v6425
      %v6554 = vunpack.c.l.b16 %v6426
      %v6555 = vunpack.c.l.b16 %v6427
      %v6556 = vunpack.c.l.b16 %v6428
      %v6557 = vunpack.c.l.b16 %v6429
      %v6558 = vunpack.c.l.b16 %v6430
      %v6559 = vunpack.c.l.b16 %v6431
      %v6560 = vunpack.c.l.b16 %v6432
      %v6561 = vunpack.c.l.b16 %v6433
      %v6562 = vunpack.c.l.b16 %v6434
      %v6563 = vunpack.c.l.b16 %v6435
      %v6564 = vunpack.c.l.b16 %v6436
      %v6565 = vunpack.c.l.b16 %v6437
      %v6566 = vunpack.c.l.b16 %v6438
      %v6567 = vunpack.c.l.b16 %v6439
      %v6568 = vunpack.c.l.b16 %v6440
      %v6569 = vunpack.c.l.b16 %v6441
      %v6570 = vunpack.c.l.b16 %v6442
      %v6571 = vunpack.c.l.b16 %v6443
      %v6572 = vunpack.c.l.b16 %v6444
      %v6573 = vunpack.c.l.b16 %v6445
      %v6574 = vunpack.c.l.b16 %v6446
      %v6575 = vunpack.c.l.b16 %v6447
      %v6576 = vunpack.c.l.b16 %v6448
      %v6577 = vunpack.c.l.b16 %v6449
      %v6578 = vunpack.c.l.b16 %v6450
      %v6579 = vunpack.c.l.b16 %v6451
      %v6580 = vunpack.c.l.b16 %v6452
      %v6581 = vunpack.c.l.b16 %v6453
      %v6582 = vunpack.c.l.b16 %v6454
      %v6583 = vunpack.c.l.b16 %v6455
      %v6584 = vunpack.c.l.b16 %v6456
      %v6585 = vunpack.c.l.b16 %v6457
      %v6586 = vunpack.c.l.b16 %v6458
      %v6587 = vunpack.c.l.b16 %v6459
      %v6588 = vunpack.c.l.b16 %v6460
      %v6589 = vunpack.c.l.b16 %v6461
      %v6590 = vunpack.c.l.b16 %v6462
      %v6591 = vunpack.c.l.b16 %v6463
      %v6592 = vunpack.c.l.b16 %v6464
      %v6593 = vunpack.c.l.b16 %v6465
      %v6594 = vunpack.c.l.b16 %v6466
      %v6595 = vunpack.c.l.b16 %v6467
      %v6596 = vunpack.c.l.b16 %v6468
      %v6597 = vunpack.c.l.b16 %v6469
      %v6598 = vunpack.c.l.b16 %v6470
      %v6599 = vunpack.c.l.b16 %v6471
      %v6600 = vunpack.c.l.b16 %v6472
      %v6601 = vunpack.c.l.b16 %v6473
      %v6602 = vunpack.c.l.b16 %v6474
      %v6603 = vunpack.c.l.b16 %v6475
      %v6604 = vunpack.c.l.b16 %v6476
      %v6605 = vunpack.c.l.b16 %v6477
      %v6606 = vunpack.c.l.b16 %v6478
      %v6607 = vpack.c.b16 %v6543, %v6543
      %v6608 = vpack.c.b16 %v6544, %v6544
      %v6609 = vpack.c.b16 %v6545, %v6545
      %v6610 = vpack.c.b16 %v6546, %v6546
      %v6611 = vpack.c.b16 %v6547, %v6547
      %v6612 = vpack.c.b16 %v6548, %v6548
      %v6613 = vpack.c.b16 %v6549, %v6549
      %v6614 = vpack.c.b16 %v6550, %v6550
      %v6615 = vpack.c.b16 %v6551, %v6551
      %v6616 = vpack.c.b16 %v6552, %v6552
      %v6617 = vpack.c.b16 %v6553, %v6553
      %v6618 = vpack.c.b16 %v6554, %v6554
      %v6619 = vpack.c.b16 %v6555, %v6555
      %v6620 = vpack.c.b16 %v6556, %v6556
      %v6621 = vpack.c.b16 %v6557, %v6557
      %v6622 = vpack.c.b16 %v6558, %v6558
      %v6623 = vpack.c.b16 %v6559, %v6559
      %v6624 = vpack.c.b16 %v6560, %v6560
      %v6625 = vpack.c.b16 %v6561, %v6561
      %v6626 = vpack.c.b16 %v6562, %v6562
      %v6627 = vpack.c.b16 %v6563, %v6563
      %v6628 = vpack.c.b16 %v6564, %v6564
      %v6629 = vpack.c.b16 %v6565, %v6565
      %v6630 = vpack.c.b16 %v6566, %v6566
      %v6631 = vpack.c.b16 %v6567, %v6567
      %v6632 = vpack.c.b16 %v6568, %v6568
      %v6633 = vpack.c.b16 %v6569, %v6569
      %v6634 = vpack.c.b16 %v6570, %v6570
      %v6635 = vpack.c.b16 %v6571, %v6571
      %v6636 = vpack.c.b16 %v6572, %v6572
      %v6637 = vpack.c.b16 %v6573, %v6573
      %v6638 = vpack.c.b16 %v6574, %v6574
      %v6639 = vpack.c.b16 %v6575, %v6575
      %v6640 = vpack.c.b16 %v6576, %v6576
      %v6641 = vpack.c.b16 %v6577, %v6577
      %v6642 = vpack.c.b16 %v6578, %v6578
      %v6643 = vpack.c.b16 %v6579, %v6579
      %v6644 = vpack.c.b16 %v6580, %v6580
      %v6645 = vpack.c.b16 %v6581, %v6581
      %v6646 = vpack.c.b16 %v6582, %v6582
      %v6647 = vpack.c.b16 %v6583, %v6583
      %v6648 = vpack.c.b16 %v6584, %v6584
      %v6649 = vpack.c.b16 %v6585, %v6585
      %v6650 = vpack.c.b16 %v6586, %v6586
      %v6651 = vpack.c.b16 %v6587, %v6587
      %v6652 = vpack.c.b16 %v6588, %v6588
      %v6653 = vpack.c.b16 %v6589, %v6589
      %v6654 = vpack.c.b16 %v6590, %v6590
      %v6655 = vpack.c.b16 %v6591, %v6591
      %v6656 = vpack.c.b16 %v6592, %v6592
      %v6657 = vpack.c.b16 %v6593, %v6593
      %v6658 = vpack.c.b16 %v6594, %v6594
      %v6659 = vpack.c.b16 %v6595, %v6595
      %v6660 = vpack.c.b16 %v6596, %v6596
      %v6661 = vpack.c.b16 %v6597, %v6597
      %v6662 = vpack.c.b16 %v6598, %v6598
      %v6663 = vpack.c.b16 %v6599, %v6599
      %v6664 = vpack.c.b16 %v6600, %v6600
      %v6665 = vpack.c.b16 %v6601, %v6601
      %v6666 = vpack.c.b16 %v6602, %v6602
      %v6667 = vpack.c.b16 %v6603, %v6603
      %v6668 = vpack.c.b16 %v6604, %v6604
      %v6669 = vpack.c.b16 %v6605, %v6605
      %v6670 = vpack.c.b16 %v6606, %v6606
      %v6671 = vunpack.c.l.b16 %v6607
      %v6672 = vunpack.c.l.b16 %v6608
      %v6673 = vunpack.c.l.b16 %v6609
      %v6674 = vunpack.c.l.b16 %v6610
      %v6675 = vunpack.c.l.b16 %v6611
      %v6676 = vunpack.c.l.b16 %v6612
      %v6677 = vunpack.c.l.b16 %v6613
      %v6678 = vunpack.c.l.b16 %v6614
      %v6679 = vunpack.c.l.b16 %v6615
      %v6680 = vunpack.c.l.b16 %v6616
      %v6681 = vunpack.c.l.b16 %v6617
      %v6682 = vunpack.c.l.b16 %v6618
      %v6683 = vunpack.c.l.b16 %v6619
      %v6684 = vunpack.c.l.b16 %v6620
      %v6685 = vunpack.c.l.b16 %v6621
      %v6686 = vunpack.c.l.b16 %v6622
      %v6687 = vunpack.c.l.b16 %v6623
      %v6688 = vunpack.c.l.b16 %v6624
      %v6689 = vunpack.c.l.b16 %v6625
      %v6690 = vunpack.c.l.b16 %v6626
      %v6691 = vunpack.c.l.b16 %v6627
      %v6692 = vunpack.c.l.b16 %v6628
      %v6693 = vunpack.c.l.b16 %v6629
      %v6694 = vunpack.c.l.b16 %v6630
      %v6695 = vunpack.c.l.b16 %v6631
      %v6696 = vunpack.c.l.b16 %v6632
      %v6697 = vunpack.c.l.b16 %v6633
      %v6698 = vunpack.c.l.b16 %v6634
      %v6699 = vunpack.c.l.b16 %v6635
      %v6700 = vunpack.c.l.b16 %v6636
      %v6701 = vunpack.c.l.b16 %v6637
      %v6702 = vunpack.c.l.b16 %v6638
      %v6703 = vunpack.c.l.b16 %v6639
      %v6704 = vunpack.c.l.b16 %v6640
      %v6705 = vunpack.c.l.b16 %v6641
      %v6706 = vunpack.c.l.b16 %v6642
      %v6707 = vunpack.c.l.b16 %v6643
      %v6708 = vunpack.c.l.b16 %v6644
      %v6709 = vunpack.c.l.b16 %v6645
      %v6710 = vunpack.c.l.b16 %v6646
      %v6711 = vunpack.c.l.b16 %v6647
      %v6712 = vunpack.c.l.b16 %v6648
      %v6713 = vunpack.c.l.b16 %v6649
      %v6714 = vunpack.c.l.b16 %v6650
      %v6715 = vunpack.c.l.b16 %v6651
      %v6716 = vunpack.c.l.b16 %v6652
      %v6717 = vunpack.c.l.b16 %v6653
      %v6718 = vunpack.c.l.b16 %v6654
      %v6719 = vunpack.c.l.b16 %v6655
      %v6720 = vunpack.c.l.b16 %v6656
      %v6721 = vunpack.c.l.b16 %v6657
      %v6722 = vunpack.c.l.b16 %v6658
      %v6723 = vunpack.c.l.b16 %v6659
      %v6724 = vunpack.c.l.b16 %v6660
      %v6725 = vunpack.c.l.b16 %v6661
      %v6726 = vunpack.c.l.b16 %v6662
      %v6727 = vunpack.c.l.b16 %v6663
      %v6728 = vunpack.c.l.b16 %v6664
      %v6729 = vunpack.c.l.b16 %v6665
      %v6730 = vunpack.c.l.b16 %v6666
      %v6731 = vunpack.c.l.b16 %v6667
      %v6732 = vunpack.c.l.b16 %v6668
      %v6733 = vunpack.c.l.b16 %v6669
      %v6734 = vunpack.c.l.b16 %v6670
      %v6735 = vrot.slane %v6672, 7
      %vm6736 = vcmask 1041409
      %v6737 = vsel %vm6736, %v6735, %v6671
      %v6738 = vrot.slane %v6673, 6
      %vm6739 = vcmask 1042434
      %v6740 = vsel %vm6739, %v6738, %v6737
      %v6741 = vrot.slane %v6674, 5
      %vm6742 = vcmask 1043459
      %v6743 = vsel %vm6742, %v6741, %v6740
      %v6744 = vrot.slane %v6675, 4
      %vm6745 = vcmask 1044484
      %v6746 = vsel %vm6745, %v6744, %v6743
      %v6747 = vrot.slane %v6676, 3
      %vm6748 = vcmask 1045509
      %v6749 = vsel %vm6748, %v6747, %v6746
      %v6750 = vrot.slane %v6677, 2
      %vm6751 = vcmask 1046534
      %v6752 = vsel %vm6751, %v6750, %v6749
      %v6753 = vrot.slane %v6678, 1
      %vm6754 = vcmask 1047559
      %v6755 = vsel %vm6754, %v6753, %v6752
      %v6756 = vrot.slane %v6680, 7
      %v6757 = vsel %vm6736, %v6756, %v6679
      %v6758 = vrot.slane %v6681, 6
      %v6759 = vsel %vm6739, %v6758, %v6757
      %v6760 = vrot.slane %v6682, 5
      %v6761 = vsel %vm6742, %v6760, %v6759
      %v6762 = vrot.slane %v6683, 4
      %v6763 = vsel %vm6745, %v6762, %v6761
      %v6764 = vrot.slane %v6684, 3
      %v6765 = vsel %vm6748, %v6764, %v6763
      %v6766 = vrot.slane %v6685, 2
      %v6767 = vsel %vm6751, %v6766, %v6765
      %v6768 = vrot.slane %v6686, 1
      %v6769 = vsel %vm6754, %v6768, %v6767
      %v6770 = vrot.slane %v6688, 7
      %v6771 = vsel %vm6736, %v6770, %v6687
      %v6772 = vrot.slane %v6689, 6
      %v6773 = vsel %vm6739, %v6772, %v6771
      %v6774 = vrot.slane %v6690, 5
      %v6775 = vsel %vm6742, %v6774, %v6773
      %v6776 = vrot.slane %v6691, 4
      %v6777 = vsel %vm6745, %v6776, %v6775
      %v6778 = vrot.slane %v6692, 3
      %v6779 = vsel %vm6748, %v6778, %v6777
      %v6780 = vrot.slane %v6693, 2
      %v6781 = vsel %vm6751, %v6780, %v6779
      %v6782 = vrot.slane %v6694, 1
      %v6783 = vsel %vm6754, %v6782, %v6781
      %v6784 = vrot.slane %v6696, 7
      %v6785 = vsel %vm6736, %v6784, %v6695
      %v6786 = vrot.slane %v6697, 6
      %v6787 = vsel %vm6739, %v6786, %v6785
      %v6788 = vrot.slane %v6698, 5
      %v6789 = vsel %vm6742, %v6788, %v6787
      %v6790 = vrot.slane %v6699, 4
      %v6791 = vsel %vm6745, %v6790, %v6789
      %v6792 = vrot.slane %v6700, 3
      %v6793 = vsel %vm6748, %v6792, %v6791
      %v6794 = vrot.slane %v6701, 2
      %v6795 = vsel %vm6751, %v6794, %v6793
      %v6796 = vrot.slane %v6702, 1
      %v6797 = vsel %vm6754, %v6796, %v6795
      %v6798 = vrot.slane %v6704, 7
      %v6799 = vsel %vm6736, %v6798, %v6703
      %v6800 = vrot.slane %v6705, 6
      %v6801 = vsel %vm6739, %v6800, %v6799
      %v6802 = vrot.slane %v6706, 5
      %v6803 = vsel %vm6742, %v6802, %v6801
      %v6804 = vrot.slane %v6707, 4
      %v6805 = vsel %vm6745, %v6804, %v6803
      %v6806 = vrot.slane %v6708, 3
      %v6807 = vsel %vm6748, %v6806, %v6805
      %v6808 = vrot.slane %v6709, 2
      %v6809 = vsel %vm6751, %v6808, %v6807
      %v6810 = vrot.slane %v6710, 1
      %v6811 = vsel %vm6754, %v6810, %v6809
      %v6812 = vrot.slane %v6712, 7
      %v6813 = vsel %vm6736, %v6812, %v6711
      %v6814 = vrot.slane %v6713, 6
      %v6815 = vsel %vm6739, %v6814, %v6813
      %v6816 = vrot.slane %v6714, 5
      %v6817 = vsel %vm6742, %v6816, %v6815
      %v6818 = vrot.slane %v6715, 4
      %v6819 = vsel %vm6745, %v6818, %v6817
      %v6820 = vrot.slane %v6716, 3
      %v6821 = vsel %vm6748, %v6820, %v6819
      %v6822 = vrot.slane %v6717, 2
      %v6823 = vsel %vm6751, %v6822, %v6821
      %v6824 = vrot.slane %v6718, 1
      %v6825 = vsel %vm6754, %v6824, %v6823
      %v6826 = vrot.slane %v6720, 7
      %v6827 = vsel %vm6736, %v6826, %v6719
      %v6828 = vrot.slane %v6721, 6
      %v6829 = vsel %vm6739, %v6828, %v6827
      %v6830 = vrot.slane %v6722, 5
      %v6831 = vsel %vm6742, %v6830, %v6829
      %v6832 = vrot.slane %v6723, 4
      %v6833 = vsel %vm6745, %v6832, %v6831
      %v6834 = vrot.slane %v6724, 3
      %v6835 = vsel %vm6748, %v6834, %v6833
      %v6836 = vrot.slane %v6725, 2
      %v6837 = vsel %vm6751, %v6836, %v6835
      %v6838 = vrot.slane %v6726, 1
      %v6839 = vsel %vm6754, %v6838, %v6837
      %v6840 = vrot.slane %v6728, 7
      %v6841 = vsel %vm6736, %v6840, %v6727
      %v6842 = vrot.slane %v6729, 6
      %v6843 = vsel %vm6739, %v6842, %v6841
      %v6844 = vrot.slane %v6730, 5
      %v6845 = vsel %vm6742, %v6844, %v6843
      %v6846 = vrot.slane %v6731, 4
      %v6847 = vsel %vm6745, %v6846, %v6845
      %v6848 = vrot.slane %v6732, 3
      %v6849 = vsel %vm6748, %v6848, %v6847
      %v6850 = vrot.slane %v6733, 2
      %v6851 = vsel %vm6751, %v6850, %v6849
      %v6852 = vrot.slane %v6734, 1
      %v6853 = vsel %vm6754, %v6852, %v6851
      %v6854 = vpack.c.b16 %v6755, %v6755
      %v6855 = vpack.c.b16 %v6769, %v6769
      %v6856 = vpack.c.b16 %v6783, %v6783
      %v6857 = vpack.c.b16 %v6797, %v6797
      %v6858 = vpack.c.b16 %v6811, %v6811
      %v6859 = vpack.c.b16 %v6825, %v6825
      %v6860 = vpack.c.b16 %v6839, %v6839
      %v6861 = vpack.c.b16 %v6853, %v6853
      %6870 = vst [vmem:[%s305] sm:$0xf] %v6854
      %6871 = vst [vmem:[%s305 + $0x4] sm:$0xf] %v6855
      %6872 = vst [vmem:[%s305 + $0x8] sm:$0xf] %v6856
      %6873 = vst [vmem:[%s305 + $0xc] sm:$0xf] %v6857
      %6874 = vst [vmem:[%s305 + $0x10] sm:$0xf] %v6858
      %6875 = vst [vmem:[%s305 + $0x14] sm:$0xf] %v6859
      %6876 = vst [vmem:[%s305 + $0x18] sm:$0xf] %v6860
      %6877 = vst [vmem:[%s305 + $0x1c] sm:$0xf] %v6861
      %p6878 = scmp.lt.s32.totalorder %s19, 1
      %s6879 = scalar_select %p6878, %s19, 1
      %s6880 = smul.addr %s6879, 32
      %s6881 = smul.addr %s6880, 4
      %s6882 = scalar_lea.vmem %s6, %s6881
      %p6883 = scmp.lt.s32.totalorder %s19, 1
      %s6884 = scalar_select %p6883, %s19, 1
      %s6885 = smul.addr %s6884, 8
      %s6886 = smul.addr %s6885, 4
      %s6887 = scalar_lea.vmem %s7, %s6886
      // Predicated region
      $region49: #{downsample.1} parent=43 // pred_check
        %p6888 = pneg %p173
      $region50: #{downsample.1} parent=43 // pred_check_branch
        %6890 = sbr.rel (%p6888) target = $region52
      $region51: #{downsample.1} parent=43 // pred_region
        _
      $region52: #{downsample.1} parent=43 // pred_fallthru
        _
      // Predicated region
      $region53: #{downsample.1} parent=43 // pred_check
        %p6891 = pneg %p199
      $region54: #{downsample.1} parent=43 // pred_check_branch
        %6893 = sbr.rel (%p6891) target = $region56
      $region55: #{downsample.1} parent=43 // pred_region
        _
      $region56: #{downsample.1} parent=43 // pred_fallthru
        _
    $region44: #{downsample.1} parent=5 // pred_fallthru
      _
    %p6894 = scmp.le.s32.totalorder 2, %s14
    // Predicated region
    $region57: #{downsample.1} parent=5 // pred_check
      %p6895 = pneg %p6894
    $region58: #{downsample.1} parent=5 // pred_check_branch
      %6897 = sbr.rel (%p6895) target = $region60
    $region59: #{downsample.1} parent=5 // pred_region
      %s6898 = ssub.s32 %s14, 2
      // Predicated region
      $region61: #{downsample.1} parent=59 // pred_check
        %p6899 = pneg %p179
      $region62: #{downsample.1} parent=59 // pred_check_branch
        %6901 = sbr.rel (%p6899) target = $region64
      $region63: #{downsample.1} parent=59 // pred_region
        %p6902 = scmp.lt.s32.totalorder %s20, 1
        %s6903 = scalar_select %p6902, %s20, 1
        %s6904 = smul.addr %s6903, 32
        %s6905 = smul.addr %s6904, 4
        %s6906 = scalar_lea.vmem %s6, %s6905
      $region64: #{downsample.1} parent=59 // pred_fallthru
        _
      // Predicated region
      $region65: #{downsample.1} parent=59 // pred_check
        %p6907 = pneg %p205
      $region66: #{downsample.1} parent=59 // pred_check_branch
        %6909 = sbr.rel (%p6907) target = $region68
      $region67: #{downsample.1} parent=59 // pred_region
        %p6910 = scmp.lt.s32.totalorder %s20, 1
        %s6911 = scalar_select %p6910, %s20, 1
        %s6912 = smul.addr %s6911, 8
        %s6913 = smul.addr %s6912, 4
        %s6914 = scalar_lea.vmem %s7, %s6913
      $region68: #{downsample.1} parent=59 // pred_fallthru
        _
    $region60: #{downsample.1} parent=5 // pred_fallthru
      _
  $region6: #{downsample.1} parent=0 // loop_footer
    %s18 = sadd.s32 1, %s14
  $region7: #{downsample.1} parent=0 // loop_footer_branch
    %13 = sbr.rel target = $region3
  $region8: #{downsample.1} parent=0 // loop_exit
    _

</llo_original>
